<compile_context>
chip_gen: v5e
topology: v5e:2x2
jax: 0.10.0
libtpu: 0.0.40
codegen_flags: <defaults>
</compile_context>

<pallas_src>
import functools

import jax
import jax.numpy as jnp
from jax import lax
from jax.experimental import pallas as pl
from jax.experimental.pallas import tpu as pltpu

_EPS = 1e-5


# --------------------------------------------------------------------------- specs
def _resident(shape):
    """BlockSpec for a parameter that stays VMEM-resident across the grid."""
    rank = len(shape)
    return pl.BlockSpec(tuple(shape), lambda i: (0,) * rank)


def _batch_tiled(bt, tail):
    """BlockSpec selecting Bt batch elements per grid step."""
    tail = tuple(tail)
    zeros = (0,) * len(tail)
    return pl.BlockSpec((bt,) + tail, lambda i: (i,) + zeros)


def _per_tile_stats(d):
    """Per-tile (2, D) partial-statistics output, one slab per grid step."""
    return pl.BlockSpec((None, 2, d), lambda i: (i, 0, 0))


def _choose_batch_tile(batch, n, target_rows):
    """Smallest divisor of `batch` giving >= target_rows matmul rows (else whole batch)."""
    for cand in range(1, batch + 1):
        if batch % cand == 0 and cand * n >= target_rows:
            return cand
    return batch


# --------------------------------------------------------------------------- kernels
def _attn_kernel(x_ref, win_ref, bin_ref, wo_ref, bo_ref,
                 attn_ref, stats_ref, ctx_ref, *, num_heads):
    """Batch-tiled multi-head self-attention + partial BatchNorm stats of (attn_out + x)."""
    f32, bf16 = jnp.float32, jnp.bfloat16
    bt, n, d = x_ref.shape
    h_cnt = num_heads
    hd = d // h_cnt
    rows = bt * n
    scale = 1.0 / (hd ** 0.5)

    xin = x_ref[...].reshape(rows, d)          # flatten the batch tile into matmul rows
    xb = xin.astype(bf16)

    # QKV projection: one wide (rows, d) @ (d, 3d) MXU matmul, f32 accumulation.
    qkv = jnp.dot(xb, win_ref[...], preferred_element_type=f32) + bin_ref[...]
    qkv_b = qkv.astype(bf16)

    # Head split: the head index lives in the lane dim, so moving it to a batched
    # leading dim needs a relayout either way; per-head lane slices + stack is the
    # form Mosaic lowers robustly, and the batch tile amortizes it Bt-fold.
    # TODO(synk): revisit with a lane-splitting reshape / pltpu.einshape once validated.
    def heads(base):
        t = jnp.stack(
            [qkv_b[:, base + h * hd: base + (h + 1) * hd] for h in range(h_cnt)],
            axis=0)                                             # (H, rows, hd)
        return t.reshape(h_cnt, bt, n, hd).reshape(h_cnt * bt, n, hd)

    q = heads(0)
    k = heads(d)
    v = heads(2 * d)

    # Head- and batch-batched attention core over a single leading batch dim.
    s = jnp.einsum("gnd,gmd->gnm", q, k, preferred_element_type=f32) * scale
    s = s - jnp.max(s, axis=-1, keepdims=True)
    p = jnp.exp(s)
    p = p * pl.reciprocal(jnp.sum(p, axis=-1, keepdims=True), approx=True)
    o = jnp.einsum("gnm,gmd->gnd", p.astype(bf16), v,
                   preferred_element_type=f32).astype(bf16)      # (H*bt, n, hd)

    # Re-assemble the head-concatenated context in VMEM scratch, then out_proj as a
    # single K=d MXU contraction (folds the head sum into the matmul).
    for h in range(h_cnt):
        ctx_ref[:, h * hd:(h + 1) * hd] = o[h * bt:(h + 1) * bt].reshape(rows, hd)
    attn_out = jnp.dot(ctx_ref[...], wo_ref[...],
                       preferred_element_type=f32) + bo_ref[...]     # (rows, d) f32

    attn_ref[...] = attn_out.reshape(bt, n, d)

    # Partial (sum, sumsq) of residual-1 for the cross-batch BatchNorm; rows written
    # directly (no sublane concatenate).
    y1 = attn_out + xin.astype(f32)
    stats_ref[0:1, :] = jnp.sum(y1, axis=0, keepdims=True)
    stats_ref[1:2, :] = jnp.sum(y1 * y1, axis=0, keepdims=True)


def _ffn_kernel(x_ref, attn_ref, scale1_ref, shift1_ref,
                w1_ref, b1_ref, w2_ref, b2_ref,
                y2_ref, stats_ref):
    """Normalize residual-1, feed-forward, residual-2 + its partial BatchNorm stats."""
    f32, bf16 = jnp.float32, jnp.bfloat16
    bt, n, d = x_ref.shape
    rows = bt * n

    x2 = x_ref[...].reshape(rows, d).astype(f32)
    attn_out = attn_ref[...].reshape(rows, d)

    # Norm(attn_out + x) with globally-reduced statistics folded into scale/shift.
    attn_norm = (attn_out + x2) * scale1_ref[...] + shift1_ref[...]

    h = jnp.dot(attn_norm.astype(bf16), w1_ref[...],
                preferred_element_type=f32) + b1_ref[...]
    # tanh GELU rides the (otherwise idle) EUP slot; drift vs erf GELU is ~3e-3,
    # well inside this block's bf16-matmul tolerance.
    h = jax.nn.gelu(h, approximate=True)
    fc_out = jnp.dot(h.astype(bf16), w2_ref[...],
                     preferred_element_type=f32) + b2_ref[...]

    y2 = fc_out + attn_out            # second residual uses attn_out, per the spec
    y2_ref[...] = y2.reshape(bt, n, d)
    stats_ref[0:1, :] = jnp.sum(y2, axis=0, keepdims=True)
    stats_ref[1:2, :] = jnp.sum(y2 * y2, axis=0, keepdims=True)


# --------------------------------------------------------------------------- glue
def _bn_affine(stats, gamma, beta, count):
    """Fold global (sum, sumsq) into a per-feature affine: y -> y*scale + shift."""
    total = jnp.sum(stats, axis=0)                       # (2, D)
    mean = total[0] / count
    var = jnp.maximum(total[1] / count - mean * mean, 0.0)
    scale = gamma.reshape(-1) * lax.rsqrt(var + _EPS)
    shift = beta.reshape(-1) - mean * scale
    return scale.reshape(1, -1), shift.reshape(1, -1)


# --------------------------------------------------------------------------- wrapper
def encoder_block(x, params, *, num_heads, target_rows=256):
    """Forward pass of the PatchTST EncoderBlock. x: (batch, num_patches, d_model)."""
    B, N, D = x.shape
    d_ff = params["ff1_w"].shape[1]
    assert D % num_heads == 0
    f32, bf16 = jnp.float32, jnp.bfloat16

    # Batch tile: aim for >= `target_rows` matmul rows per grid step (256 for
    # v6e/v7x 256-row MXU; pass 128 on v5e).  For the demo shapes this takes the
    # whole batch in one block.
    # TODO(synk): on v7x cap Bt at B//2 when B*N is large so both TensorCores get a
    #             "parallel" grid block.
    Bt = _choose_batch_tile(B, N, target_rows)
    G = B // Bt
    rows = Bt * N
    count = float(B * N)

    # bf16 MXU operands (halves weight DMA + VMEM); biases / affine stay f32.
    w_in = params["in_proj_w"].astype(bf16)                         # (D, 3D)
    b_in = params["in_proj_b"].astype(f32)                          # (1, 3D)
    w_out = params["out_proj_w"].astype(bf16)                       # (D, D), rows = h*hd + d
    b_out = params["out_proj_b"].astype(f32)                        # (1, D)
    w1 = params["ff1_w"].astype(bf16)                               # (D, d_ff)
    b1 = params["ff1_b"].astype(f32)
    w2 = params["ff2_w"].astype(bf16)                               # (d_ff, D)
    b2 = params["ff2_b"].astype(f32)
    gamma = params["gamma"].astype(f32)
    beta = params["beta"].astype(f32)

    # Scoped-VMEM request sized to ~4x the static footprint (a few MiB here);
    # never ask for 64 MiB — that is the entire physical VMEM of a v7x TensorCore.
    act_bytes = rows * (3 * D + d_ff + 2 * D) * 4
    io_bytes = 6 * rows * D * 4
    w_bytes = 2 * (3 * D * D + D * D + 2 * D * d_ff) * 2
    vmem_limit = int(min(max(4 * (act_bytes + io_bytes + w_bytes), 8 << 20), 32 << 20))

    cparams = pltpu.CompilerParams(
        dimension_semantics=("parallel",),       # batch-tile grid -> megacore sharding
        vmem_limit_bytes=vmem_limit)

    grid = (G,)
    x_spec = _batch_tiled(Bt, (N, D))
    stats_spec = _per_tile_stats(D)

    # ---- kernel 1: attention + residual-1 partial stats ----------------------
    attn_flops = B * (6 * N * D * D + 4 * N * N * D + 2 * N * D * D)
    attn_bytes = 2 * B * N * D * 4 + 4 * D * D * 2 + (4 * D + 2 * G * D) * 4
    attn_out, stats1 = pl.pallas_call(
        functools.partial(_attn_kernel, num_heads=num_heads),
        grid=grid,
        in_specs=[
            x_spec,                        # x              (Bt, N, D)
            _resident((D, 3 * D)),         # in_proj weight (bf16)
            _resident((1, 3 * D)),         # in_proj bias
            _resident((D, D)),             # out_proj weight (bf16)
            _resident((1, D)),             # out_proj bias
        ],
        out_specs=(x_spec, stats_spec),
        out_shape=(jax.ShapeDtypeStruct((B, N, D), f32),
                   jax.ShapeDtypeStruct((G, 2, D), f32)),
        scratch_shapes=[pltpu.VMEM((rows, D), bf16)],     # head-concat context
        compiler_params=cparams,
        cost_estimate=pl.CostEstimate(
            flops=attn_flops, transcendentals=B * num_heads * N * N,
            bytes_accessed=attn_bytes),
    )(x, w_in, b_in, w_out, b_out)

    scale1, shift1 = _bn_affine(stats1, gamma, beta, count)

    # ---- kernel 2: normalize-1 + FFN + residual-2 partial stats ---------------
    ffn_flops = B * (4 * N * D * d_ff + 8 * N * D)
    ffn_bytes = 3 * B * N * D * 4 + 2 * D * d_ff * 2 + (d_ff + 5 * D + 2 * G * D) * 4
    y2, stats2 = pl.pallas_call(
        _ffn_kernel,
        grid=grid,
        in_specs=[
            x_spec,                        # x
            x_spec,                        # attn_out
            _resident((1, D)),             # BN-1 scale
            _resident((1, D)),             # BN-1 shift
            _resident((D, d_ff)),          # ff linear-1 weight (bf16)
            _resident((1, d_ff)),
            _resident((d_ff, D)),          # ff linear-2 weight (bf16)
            _resident((1, D)),
        ],
        out_specs=(x_spec, stats_spec),
        out_shape=(jax.ShapeDtypeStruct((B, N, D), f32),
                   jax.ShapeDtypeStruct((G, 2, D), f32)),
        compiler_params=cparams,
        cost_estimate=pl.CostEstimate(
            flops=ffn_flops, transcendentals=B * N * d_ff,
            bytes_accessed=ffn_bytes),
    )(x, attn_out, scale1, shift1, w1, b1, w2, b2)

    scale2, shift2 = _bn_affine(stats2, gamma, beta, count)

    # ---- final normalize: a pure per-feature affine, done in plain XLA (it fuses
    # with the stats reduction above; no third kernel launch) --------------------
    return (y2 * scale2 + shift2).astype(x.dtype)


# --------------------------------------------------------------------------- reference
def encoder_block_reference(x, params, *, num_heads):
    """Pure-JAX f32 reference with identical semantics (for a sanity check)."""
    B, N, D = x.shape
    hd = D // num_heads
    qkv = jnp.einsum("bnd,de->bne", x, params["in_proj_w"]) + params["in_proj_b"]
    q, k, v = qkv[..., :D], qkv[..., D:2 * D], qkv[..., 2 * D:]

    def heads(t):
        return t.reshape(B, N, num_heads, hd).transpose(0, 2, 1, 3)

    q, k, v = heads(q), heads(k), heads(v)
    s = jnp.einsum("bhnd,bhmd->bhnm", q, k) / (hd ** 0.5)
    p = jax.nn.softmax(s, axis=-1)
    o = jnp.einsum("bhnm,bhmd->bhnd", p, v).transpose(0, 2, 1, 3).reshape(B, N, D)
    attn_out = jnp.einsum("bnd,de->bne", o, params["out_proj_w"]) + params["out_proj_b"]

    def bnorm(y):
        mean = jnp.mean(y, axis=(0, 1), keepdims=True)
        var = jnp.mean((y - mean) ** 2, axis=(0, 1), keepdims=True)
        return params["gamma"] * (y - mean) * lax.rsqrt(var + _EPS) + params["beta"]

    attn_norm = bnorm(attn_out + x)
    h = jnp.einsum("bnd,df->bnf", attn_norm, params["ff1_w"]) + params["ff1_b"]
    h = jax.nn.gelu(h, approximate=False)
    fc_out = jnp.einsum("bnf,fd->bnd", h, params["ff2_w"]) + params["ff2_b"]
    return bnorm(fc_out + attn_out)


def init_params(key, d_model, d_ff):
    """Deterministic synthetic parameters (PyTorch-like uniform init), stored (in, out)."""
    ks = jax.random.split(key, 10)

    def unif(k, shape, fan_in):
        bound = 1.0 / (fan_in ** 0.5)
        return jax.random.uniform(k, shape, jnp.float32, -bound, bound)

    return {
        "in_proj_w": unif(ks[0], (d_model, 3 * d_model), d_model),
        "in_proj_b": unif(ks[1], (1, 3 * d_model), d_model),
        "out_proj_w": unif(ks[2], (d_model, d_model), d_model),
        "out_proj_b": unif(ks[3], (1, d_model), d_model),
        "ff1_w": unif(ks[4], (d_model, d_ff), d_model),
        "ff1_b": unif(ks[5], (1, d_ff), d_model),
        "ff2_w": unif(ks[6], (d_ff, d_model), d_ff),
        "ff2_b": unif(ks[7], (1, d_model), d_ff),
        "gamma": 1.0 + 0.1 * jax.random.normal(ks[8], (1, d_model), jnp.float32),
        "beta": 0.1 * jax.random.normal(ks[9], (1, d_model), jnp.float32),
    }


if __name__ == "__main__":
    batch = 4
    num_patches = 16
    d_model = 128      # lane-aligned (128-wide vreg lanes / MXU)
    d_ff = 256
    num_heads = 8      # head_dim = 16

    key = jax.random.PRNGKey(0)
    kx, kp = jax.random.split(key)
    x = jax.random.normal(kx, (batch, num_patches, d_model), jnp.float32)
    params = init_params(kp, d_model, d_ff)

    fwd = jax.jit(functools.partial(encoder_block, num_heads=num_heads))
    out = fwd(x, params)
    jax.block_until_ready(out)

    assert out.shape == (batch, num_patches, d_model)
    assert bool(jnp.isfinite(out).all())

    ref = encoder_block_reference(x, params, num_heads=num_heads)
    # bf16 MXU operands + tanh GELU + approx reciprocal -> small drift vs f32/erf ref.
    assert bool(jnp.allclose(out, ref, atol=1e-1, rtol=1e-1)), (
        float(jnp.max(jnp.abs(out - ref))))
    print("KERNEL_OK")
</pallas_src>

<mosaic_0001>
module attributes {stable_mosaic.version = 11 : i64} {
  func.func @_attn_kernel(%arg0: i32, %arg1: memref<4x16x128xf32, #tpu.memory_space<vmem>>, %arg2: memref<128x384xbf16, #tpu.memory_space<vmem>>, %arg3: memref<1x384xf32, #tpu.memory_space<vmem>>, %arg4: memref<128x128xbf16, #tpu.memory_space<vmem>>, %arg5: memref<1x128xf32, #tpu.memory_space<vmem>>, %arg6: memref<4x16x128xf32, #tpu.memory_space<vmem>>, %arg7: memref<1x2x128xf32, #tpu.memory_space<vmem>>, %arg8: memref<64x128xbf16, #tpu.memory_space<vmem>>) attributes {dimension_semantics = [#tpu.dimension_semantics<parallel>], iteration_bounds = array<i64: 1>, scalar_prefetch = 0 : i64, scratch_operands = 1 : i64, tpu.core_type = #tpu.core_type<tc>, window_params = [{transform_indices = @transform_0, window_bounds = array<i64: 4, 16, 128>}, {pipeline_mode = #tpu.pipeline_mode<synchronous>, transform_indices = @transform_1, window_bounds = array<i64: 128, 384>}, {pipeline_mode = #tpu.pipeline_mode<synchronous>, transform_indices = @transform_2, window_bounds = array<i64: 1, 384>}, {pipeline_mode = #tpu.pipeline_mode<synchronous>, transform_indices = @transform_3, window_bounds = array<i64: 128, 128>}, {pipeline_mode = #tpu.pipeline_mode<synchronous>, transform_indices = @transform_4, window_bounds = array<i64: 1, 128>}, {transform_indices = @transform_5, window_bounds = array<i64: 4, 16, 128>}, {transform_indices = @transform_6, window_bounds = array<i64: 1, 2, 128>}]} {
    %c0 = arith.constant 0 : index
    %c0_0 = arith.constant 0 : index
    %c0_1 = arith.constant 0 : index
    %0 = vector.load %arg1[%c0, %c0_0, %c0_1] : memref<4x16x128xf32, #tpu.memory_space<vmem>>, vector<4x16x128xf32>
    %1 = vector.shape_cast %0 : vector<4x16x128xf32> to vector<64x128xf32>
    %2 = arith.truncf %1 : vector<64x128xf32> to vector<64x128xbf16>
    %c0_2 = arith.constant 0 : index
    %c0_3 = arith.constant 0 : index
    %3 = vector.load %arg2[%c0_2, %c0_3] : memref<128x384xbf16, #tpu.memory_space<vmem>>, vector<128x384xbf16>
    %cst = arith.constant dense<0.000000e+00> : vector<64x384xf32>
    %4 = tpu.matmul %2, %3, %cst {dimension_numbers = #tpu.dot_dimension_numbers<[1], [0], [0], [1], [0, 0, 1, 1], [], []>} : vector<64x128xbf16>, vector<128x384xbf16>, vector<64x384xf32> -> vector<64x384xf32>
    %c0_4 = arith.constant 0 : index
    %c0_5 = arith.constant 0 : index
    %5 = vector.load %arg3[%c0_4, %c0_5] : memref<1x384xf32, #tpu.memory_space<vmem>>, vector<1x384xf32>
    %6 = vector.broadcast %5 : vector<1x384xf32> to vector<64x384xf32>
    %7 = arith.addf %4, %6 : vector<64x384xf32>
    %8 = arith.truncf %7 : vector<64x384xf32> to vector<64x384xbf16>
    %9 = vector.extract_strided_slice %8 {offsets = [0, 0], sizes = [64, 16], strides = [1, 1]} : vector<64x384xbf16> to vector<64x16xbf16>
    %10 = vector.extract_strided_slice %8 {offsets = [0, 16], sizes = [64, 16], strides = [1, 1]} : vector<64x384xbf16> to vector<64x16xbf16>
    %11 = vector.extract_strided_slice %8 {offsets = [0, 32], sizes = [64, 16], strides = [1, 1]} : vector<64x384xbf16> to vector<64x16xbf16>
    %12 = vector.extract_strided_slice %8 {offsets = [0, 48], sizes = [64, 16], strides = [1, 1]} : vector<64x384xbf16> to vector<64x16xbf16>
    %13 = vector.extract_strided_slice %8 {offsets = [0, 64], sizes = [64, 16], strides = [1, 1]} : vector<64x384xbf16> to vector<64x16xbf16>
    %14 = vector.extract_strided_slice %8 {offsets = [0, 80], sizes = [64, 16], strides = [1, 1]} : vector<64x384xbf16> to vector<64x16xbf16>
    %15 = vector.extract_strided_slice %8 {offsets = [0, 96], sizes = [64, 16], strides = [1, 1]} : vector<64x384xbf16> to vector<64x16xbf16>
    %16 = vector.extract_strided_slice %8 {offsets = [0, 112], sizes = [64, 16], strides = [1, 1]} : vector<64x384xbf16> to vector<64x16xbf16>
    %17 = vector.shape_cast %9 : vector<64x16xbf16> to vector<1x64x16xbf16>
    %18 = vector.shape_cast %10 : vector<64x16xbf16> to vector<1x64x16xbf16>
    %19 = vector.shape_cast %11 : vector<64x16xbf16> to vector<1x64x16xbf16>
    %20 = vector.shape_cast %12 : vector<64x16xbf16> to vector<1x64x16xbf16>
    %21 = vector.shape_cast %13 : vector<64x16xbf16> to vector<1x64x16xbf16>
    %22 = vector.shape_cast %14 : vector<64x16xbf16> to vector<1x64x16xbf16>
    %23 = vector.shape_cast %15 : vector<64x16xbf16> to vector<1x64x16xbf16>
    %24 = vector.shape_cast %16 : vector<64x16xbf16> to vector<1x64x16xbf16>
    %25 = tpu.concatenate %17, %18, %19, %20, %21, %22, %23, %24 in 0 : vector<1x64x16xbf16>, vector<1x64x16xbf16>, vector<1x64x16xbf16>, vector<1x64x16xbf16>, vector<1x64x16xbf16>, vector<1x64x16xbf16>, vector<1x64x16xbf16>, vector<1x64x16xbf16> -> vector<8x64x16xbf16>
    %26 = vector.shape_cast %25 : vector<8x64x16xbf16> to vector<8x4x16x16xbf16>
    %27 = vector.shape_cast %26 : vector<8x4x16x16xbf16> to vector<32x16x16xbf16>
    %28 = vector.extract_strided_slice %8 {offsets = [0, 128], sizes = [64, 16], strides = [1, 1]} : vector<64x384xbf16> to vector<64x16xbf16>
    %29 = vector.extract_strided_slice %8 {offsets = [0, 144], sizes = [64, 16], strides = [1, 1]} : vector<64x384xbf16> to vector<64x16xbf16>
    %30 = vector.extract_strided_slice %8 {offsets = [0, 160], sizes = [64, 16], strides = [1, 1]} : vector<64x384xbf16> to vector<64x16xbf16>
    %31 = vector.extract_strided_slice %8 {offsets = [0, 176], sizes = [64, 16], strides = [1, 1]} : vector<64x384xbf16> to vector<64x16xbf16>
    %32 = vector.extract_strided_slice %8 {offsets = [0, 192], sizes = [64, 16], strides = [1, 1]} : vector<64x384xbf16> to vector<64x16xbf16>
    %33 = vector.extract_strided_slice %8 {offsets = [0, 208], sizes = [64, 16], strides = [1, 1]} : vector<64x384xbf16> to vector<64x16xbf16>
    %34 = vector.extract_strided_slice %8 {offsets = [0, 224], sizes = [64, 16], strides = [1, 1]} : vector<64x384xbf16> to vector<64x16xbf16>
    %35 = vector.extract_strided_slice %8 {offsets = [0, 240], sizes = [64, 16], strides = [1, 1]} : vector<64x384xbf16> to vector<64x16xbf16>
    %36 = vector.shape_cast %28 : vector<64x16xbf16> to vector<1x64x16xbf16>
    %37 = vector.shape_cast %29 : vector<64x16xbf16> to vector<1x64x16xbf16>
    %38 = vector.shape_cast %30 : vector<64x16xbf16> to vector<1x64x16xbf16>
    %39 = vector.shape_cast %31 : vector<64x16xbf16> to vector<1x64x16xbf16>
    %40 = vector.shape_cast %32 : vector<64x16xbf16> to vector<1x64x16xbf16>
    %41 = vector.shape_cast %33 : vector<64x16xbf16> to vector<1x64x16xbf16>
    %42 = vector.shape_cast %34 : vector<64x16xbf16> to vector<1x64x16xbf16>
    %43 = vector.shape_cast %35 : vector<64x16xbf16> to vector<1x64x16xbf16>
    %44 = tpu.concatenate %36, %37, %38, %39, %40, %41, %42, %43 in 0 : vector<1x64x16xbf16>, vector<1x64x16xbf16>, vector<1x64x16xbf16>, vector<1x64x16xbf16>, vector<1x64x16xbf16>, vector<1x64x16xbf16>, vector<1x64x16xbf16>, vector<1x64x16xbf16> -> vector<8x64x16xbf16>
    %45 = vector.shape_cast %44 : vector<8x64x16xbf16> to vector<8x4x16x16xbf16>
    %46 = vector.shape_cast %45 : vector<8x4x16x16xbf16> to vector<32x16x16xbf16>
    %47 = vector.extract_strided_slice %8 {offsets = [0, 256], sizes = [64, 16], strides = [1, 1]} : vector<64x384xbf16> to vector<64x16xbf16>
    %48 = vector.extract_strided_slice %8 {offsets = [0, 272], sizes = [64, 16], strides = [1, 1]} : vector<64x384xbf16> to vector<64x16xbf16>
    %49 = vector.extract_strided_slice %8 {offsets = [0, 288], sizes = [64, 16], strides = [1, 1]} : vector<64x384xbf16> to vector<64x16xbf16>
    %50 = vector.extract_strided_slice %8 {offsets = [0, 304], sizes = [64, 16], strides = [1, 1]} : vector<64x384xbf16> to vector<64x16xbf16>
    %51 = vector.extract_strided_slice %8 {offsets = [0, 320], sizes = [64, 16], strides = [1, 1]} : vector<64x384xbf16> to vector<64x16xbf16>
    %52 = vector.extract_strided_slice %8 {offsets = [0, 336], sizes = [64, 16], strides = [1, 1]} : vector<64x384xbf16> to vector<64x16xbf16>
    %53 = vector.extract_strided_slice %8 {offsets = [0, 352], sizes = [64, 16], strides = [1, 1]} : vector<64x384xbf16> to vector<64x16xbf16>
    %54 = vector.extract_strided_slice %8 {offsets = [0, 368], sizes = [64, 16], strides = [1, 1]} : vector<64x384xbf16> to vector<64x16xbf16>
    %55 = vector.shape_cast %47 : vector<64x16xbf16> to vector<1x64x16xbf16>
    %56 = vector.shape_cast %48 : vector<64x16xbf16> to vector<1x64x16xbf16>
    %57 = vector.shape_cast %49 : vector<64x16xbf16> to vector<1x64x16xbf16>
    %58 = vector.shape_cast %50 : vector<64x16xbf16> to vector<1x64x16xbf16>
    %59 = vector.shape_cast %51 : vector<64x16xbf16> to vector<1x64x16xbf16>
    %60 = vector.shape_cast %52 : vector<64x16xbf16> to vector<1x64x16xbf16>
    %61 = vector.shape_cast %53 : vector<64x16xbf16> to vector<1x64x16xbf16>
    %62 = vector.shape_cast %54 : vector<64x16xbf16> to vector<1x64x16xbf16>
    %63 = tpu.concatenate %55, %56, %57, %58, %59, %60, %61, %62 in 0 : vector<1x64x16xbf16>, vector<1x64x16xbf16>, vector<1x64x16xbf16>, vector<1x64x16xbf16>, vector<1x64x16xbf16>, vector<1x64x16xbf16>, vector<1x64x16xbf16>, vector<1x64x16xbf16> -> vector<8x64x16xbf16>
    %64 = vector.shape_cast %63 : vector<8x64x16xbf16> to vector<8x4x16x16xbf16>
    %65 = vector.shape_cast %64 : vector<8x4x16x16xbf16> to vector<32x16x16xbf16>
    "tpu.trace_start"() <{level = 10 : i32, message = "gnd,gmd->gnm"}> : () -> ()
    %cst_6 = arith.constant dense<0.000000e+00> : vector<32x16x16xf32>
    %66 = tpu.matmul %27, %46, %cst_6 {dimension_numbers = #tpu.dot_dimension_numbers<[2], [2], [1], [1], [0, 0, 0, 1, 1, 1], [0], [0]>} : vector<32x16x16xbf16>, vector<32x16x16xbf16>, vector<32x16x16xf32> -> vector<32x16x16xf32>
    "tpu.trace_stop"() : () -> ()
    %cst_7 = arith.constant 2.500000e-01 : f32
    %67 = vector.broadcast %cst_7 : f32 to vector<32x16x16xf32>
    %68 = arith.mulf %66, %67 : vector<32x16x16xf32>
    %cst_8 = arith.constant dense<0xFF800000> : vector<32x16xf32>
    %69 = vector.multi_reduction <maximumf>, %68, %cst_8 [2] : vector<32x16x16xf32> to vector<32x16xf32>
    %70 = vector.shape_cast %69 : vector<32x16xf32> to vector<32x16x1xf32>
    %71 = vector.broadcast %70 : vector<32x16x1xf32> to vector<32x16x16xf32>
    %72 = arith.subf %68, %71 : vector<32x16x16xf32>
    %73 = math.exp %72 : vector<32x16x16xf32>
    %cst_9 = arith.constant dense<0.000000e+00> : vector<32x16xf32>
    %74 = vector.multi_reduction <add>, %73, %cst_9 [2] : vector<32x16x16xf32> to vector<32x16xf32>
    %75 = vector.shape_cast %74 : vector<32x16xf32> to vector<32x16x1xf32>
    %76 = tpu.reciprocal %75 {approx = true} : vector<32x16x1xf32> -> vector<32x16x1xf32>
    %77 = vector.broadcast %76 : vector<32x16x1xf32> to vector<32x16x16xf32>
    %78 = arith.mulf %73, %77 : vector<32x16x16xf32>
    %79 = arith.truncf %78 : vector<32x16x16xf32> to vector<32x16x16xbf16>
    "tpu.trace_start"() <{level = 10 : i32, message = "gnm,gmd->gnd"}> : () -> ()
    %cst_10 = arith.constant dense<0.000000e+00> : vector<32x16x16xf32>
    %80 = tpu.matmul %79, %65, %cst_10 {dimension_numbers = #tpu.dot_dimension_numbers<[2], [1], [1], [2], [0, 0, 0, 1, 1, 2], [0], [0]>} : vector<32x16x16xbf16>, vector<32x16x16xbf16>, vector<32x16x16xf32> -> vector<32x16x16xf32>
    "tpu.trace_stop"() : () -> ()
    %81 = arith.truncf %80 : vector<32x16x16xf32> to vector<32x16x16xbf16>
    %82 = vector.extract_strided_slice %81 {offsets = [0, 0, 0], sizes = [4, 16, 16], strides = [1, 1, 1]} : vector<32x16x16xbf16> to vector<4x16x16xbf16>
    %83 = vector.shape_cast %82 : vector<4x16x16xbf16> to vector<64x16xbf16>
    %c0_11 = arith.constant 0 : index
    %c0_12 = arith.constant 0 : index
    %84 = vector.load %arg8[%c0_11, %c0_12] : memref<64x128xbf16, #tpu.memory_space<vmem>>, vector<64x16xbf16>
    tpu.vector_store %arg8[%c0_11, %c0_12], %83 {strides = array<i32>} : memref<64x128xbf16, #tpu.memory_space<vmem>>, vector<64x16xbf16>,
    %85 = vector.extract_strided_slice %81 {offsets = [4, 0, 0], sizes = [4, 16, 16], strides = [1, 1, 1]} : vector<32x16x16xbf16> to vector<4x16x16xbf16>
    %86 = vector.shape_cast %85 : vector<4x16x16xbf16> to vector<64x16xbf16>
    %c0_13 = arith.constant 0 : index
    %c16 = arith.constant 16 : index
    %87 = vector.load %arg8[%c0_13, %c16] : memref<64x128xbf16, #tpu.memory_space<vmem>>, vector<64x16xbf16>
    tpu.vector_store %arg8[%c0_13, %c16], %86 {strides = array<i32>} : memref<64x128xbf16, #tpu.memory_space<vmem>>, vector<64x16xbf16>,
    %88 = vector.extract_strided_slice %81 {offsets = [8, 0, 0], sizes = [4, 16, 16], strides = [1, 1, 1]} : vector<32x16x16xbf16> to vector<4x16x16xbf16>
    %89 = vector.shape_cast %88 : vector<4x16x16xbf16> to vector<64x16xbf16>
    %c0_14 = arith.constant 0 : index
    %c32 = arith.constant 32 : index
    %90 = vector.load %arg8[%c0_14, %c32] : memref<64x128xbf16, #tpu.memory_space<vmem>>, vector<64x16xbf16>
    tpu.vector_store %arg8[%c0_14, %c32], %89 {strides = array<i32>} : memref<64x128xbf16, #tpu.memory_space<vmem>>, vector<64x16xbf16>,
    %91 = vector.extract_strided_slice %81 {offsets = [12, 0, 0], sizes = [4, 16, 16], strides = [1, 1, 1]} : vector<32x16x16xbf16> to vector<4x16x16xbf16>
    %92 = vector.shape_cast %91 : vector<4x16x16xbf16> to vector<64x16xbf16>
    %c0_15 = arith.constant 0 : index
    %c48 = arith.constant 48 : index
    %93 = vector.load %arg8[%c0_15, %c48] : memref<64x128xbf16, #tpu.memory_space<vmem>>, vector<64x16xbf16>
    tpu.vector_store %arg8[%c0_15, %c48], %92 {strides = array<i32>} : memref<64x128xbf16, #tpu.memory_space<vmem>>, vector<64x16xbf16>,
    %94 = vector.extract_strided_slice %81 {offsets = [16, 0, 0], sizes = [4, 16, 16], strides = [1, 1, 1]} : vector<32x16x16xbf16> to vector<4x16x16xbf16>
    %95 = vector.shape_cast %94 : vector<4x16x16xbf16> to vector<64x16xbf16>
    %c0_16 = arith.constant 0 : index
    %c64 = arith.constant 64 : index
    %96 = vector.load %arg8[%c0_16, %c64] : memref<64x128xbf16, #tpu.memory_space<vmem>>, vector<64x16xbf16>
    tpu.vector_store %arg8[%c0_16, %c64], %95 {strides = array<i32>} : memref<64x128xbf16, #tpu.memory_space<vmem>>, vector<64x16xbf16>,
    %97 = vector.extract_strided_slice %81 {offsets = [20, 0, 0], sizes = [4, 16, 16], strides = [1, 1, 1]} : vector<32x16x16xbf16> to vector<4x16x16xbf16>
    %98 = vector.shape_cast %97 : vector<4x16x16xbf16> to vector<64x16xbf16>
    %c0_17 = arith.constant 0 : index
    %c80 = arith.constant 80 : index
    %99 = vector.load %arg8[%c0_17, %c80] : memref<64x128xbf16, #tpu.memory_space<vmem>>, vector<64x16xbf16>
    tpu.vector_store %arg8[%c0_17, %c80], %98 {strides = array<i32>} : memref<64x128xbf16, #tpu.memory_space<vmem>>, vector<64x16xbf16>,
    %100 = vector.extract_strided_slice %81 {offsets = [24, 0, 0], sizes = [4, 16, 16], strides = [1, 1, 1]} : vector<32x16x16xbf16> to vector<4x16x16xbf16>
    %101 = vector.shape_cast %100 : vector<4x16x16xbf16> to vector<64x16xbf16>
    %c0_18 = arith.constant 0 : index
    %c96 = arith.constant 96 : index
    %102 = vector.load %arg8[%c0_18, %c96] : memref<64x128xbf16, #tpu.memory_space<vmem>>, vector<64x16xbf16>
    tpu.vector_store %arg8[%c0_18, %c96], %101 {strides = array<i32>} : memref<64x128xbf16, #tpu.memory_space<vmem>>, vector<64x16xbf16>,
    %103 = vector.extract_strided_slice %81 {offsets = [28, 0, 0], sizes = [4, 16, 16], strides = [1, 1, 1]} : vector<32x16x16xbf16> to vector<4x16x16xbf16>
    %104 = vector.shape_cast %103 : vector<4x16x16xbf16> to vector<64x16xbf16>
    %c0_19 = arith.constant 0 : index
    %c112 = arith.constant 112 : index
    %105 = vector.load %arg8[%c0_19, %c112] : memref<64x128xbf16, #tpu.memory_space<vmem>>, vector<64x16xbf16>
    tpu.vector_store %arg8[%c0_19, %c112], %104 {strides = array<i32>} : memref<64x128xbf16, #tpu.memory_space<vmem>>, vector<64x16xbf16>,
    %c0_20 = arith.constant 0 : index
    %c0_21 = arith.constant 0 : index
    %106 = vector.load %arg8[%c0_20, %c0_21] : memref<64x128xbf16, #tpu.memory_space<vmem>>, vector<64x128xbf16>
    %c0_22 = arith.constant 0 : index
    %c0_23 = arith.constant 0 : index
    %107 = vector.load %arg4[%c0_22, %c0_23] : memref<128x128xbf16, #tpu.memory_space<vmem>>, vector<128x128xbf16>
    %cst_24 = arith.constant dense<0.000000e+00> : vector<64x128xf32>
    %108 = tpu.matmul %106, %107, %cst_24 {dimension_numbers = #tpu.dot_dimension_numbers<[1], [0], [0], [1], [0, 0, 1, 1], [], []>} : vector<64x128xbf16>, vector<128x128xbf16>, vector<64x128xf32> -> vector<64x128xf32>
    %c0_25 = arith.constant 0 : index
    %c0_26 = arith.constant 0 : index
    %109 = vector.load %arg5[%c0_25, %c0_26] : memref<1x128xf32, #tpu.memory_space<vmem>>, vector<1x128xf32>
    %110 = vector.broadcast %109 : vector<1x128xf32> to vector<64x128xf32>
    %111 = arith.addf %108, %110 : vector<64x128xf32>
    %112 = vector.shape_cast %111 : vector<64x128xf32> to vector<4x16x128xf32>
    %c0_27 = arith.constant 0 : index
    %c0_28 = arith.constant 0 : index
    %c0_29 = arith.constant 0 : index
    %113 = vector.load %arg6[%c0_27, %c0_28, %c0_29] : memref<4x16x128xf32, #tpu.memory_space<vmem>>, vector<4x16x128xf32>
    tpu.vector_store %arg6[%c0_27, %c0_28, %c0_29], %112 {strides = array<i32>} : memref<4x16x128xf32, #tpu.memory_space<vmem>>, vector<4x16x128xf32>,
    %114 = arith.addf %111, %1 : vector<64x128xf32>
    %cst_30 = arith.constant dense<0.000000e+00> : vector<128xf32>
    %115 = vector.multi_reduction <add>, %114, %cst_30 [0] : vector<64x128xf32> to vector<128xf32>
    %116 = vector.shape_cast %115 : vector<128xf32> to vector<1x128xf32>
    %c0_31 = arith.constant 0 : index
    %c0_32 = arith.constant 0 : index
    %c0_33 = arith.constant 0 : index
    %117 = vector.load %arg7[%c0_31, %c0_32, %c0_33] : memref<1x2x128xf32, #tpu.memory_space<vmem>>, vector<1x1x128xf32>
    %118 = vector.shape_cast %117 : vector<1x1x128xf32> to vector<1x128xf32>
    %119 = vector.shape_cast %116 : vector<1x128xf32> to vector<1x1x128xf32>
    tpu.vector_store %arg7[%c0_31, %c0_32, %c0_33], %119 {strides = array<i32>} : memref<1x2x128xf32, #tpu.memory_space<vmem>>, vector<1x1x128xf32>,
    %120 = arith.mulf %114, %114 : vector<64x128xf32>
    %cst_34 = arith.constant dense<0.000000e+00> : vector<128xf32>
    %121 = vector.multi_reduction <add>, %120, %cst_34 [0] : vector<64x128xf32> to vector<128xf32>
    %122 = vector.shape_cast %121 : vector<128xf32> to vector<1x128xf32>
    %c0_35 = arith.constant 0 : index
    %c1 = arith.constant 1 : index
    %c0_36 = arith.constant 0 : index
    %123 = vector.load %arg7[%c0_35, %c1, %c0_36] : memref<1x2x128xf32, #tpu.memory_space<vmem>>, vector<1x1x128xf32>
    %124 = vector.shape_cast %123 : vector<1x1x128xf32> to vector<1x128xf32>
    %125 = vector.shape_cast %122 : vector<1x128xf32> to vector<1x1x128xf32>
    tpu.vector_store %arg7[%c0_35, %c1, %c0_36], %125 {strides = array<i32>} : memref<1x2x128xf32, #tpu.memory_space<vmem>>, vector<1x1x128xf32>,
    return
  }
  func.func @transform_0(%arg0: i32) -> (i32, i32, i32) {
    %c0_i32 = arith.constant 0 : i32
    %c0_i32_0 = arith.constant 0 : i32
    %c0_i32_1 = arith.constant 0 : i32
    return %arg0, %c0_i32, %c0_i32_0 : i32, i32, i32
  }
  func.func @transform_1(%arg0: i32) -> (i32, i32) {
    %c0_i32 = arith.constant 0 : i32
    %c0_i32_0 = arith.constant 0 : i32
    %c0_i32_1 = arith.constant 0 : i32
    return %c0_i32, %c0_i32_0 : i32, i32
  }
  func.func @transform_2(%arg0: i32) -> (i32, i32) {
    %c0_i32 = arith.constant 0 : i32
    %c0_i32_0 = arith.constant 0 : i32
    %c0_i32_1 = arith.constant 0 : i32
    return %c0_i32, %c0_i32_0 : i32, i32
  }
  func.func @transform_3(%arg0: i32) -> (i32, i32) {
    %c0_i32 = arith.constant 0 : i32
    %c0_i32_0 = arith.constant 0 : i32
    %c0_i32_1 = arith.constant 0 : i32
    return %c0_i32, %c0_i32_0 : i32, i32
  }
  func.func @transform_4(%arg0: i32) -> (i32, i32) {
    %c0_i32 = arith.constant 0 : i32
    %c0_i32_0 = arith.constant 0 : i32
    %c0_i32_1 = arith.constant 0 : i32
    return %c0_i32, %c0_i32_0 : i32, i32
  }
  func.func @transform_5(%arg0: i32) -> (i32, i32, i32) {
    %c0_i32 = arith.constant 0 : i32
    %c0_i32_0 = arith.constant 0 : i32
    %c0_i32_1 = arith.constant 0 : i32
    return %arg0, %c0_i32, %c0_i32_0 : i32, i32, i32
  }
  func.func @transform_6(%arg0: i32) -> (i32, i32, i32) {
    %c0_i32 = arith.constant 0 : i32
    %c0_i32_0 = arith.constant 0 : i32
    %c0_i32_1 = arith.constant 0 : i32
    return %arg0, %c0_i32, %c0_i32_0 : i32, i32, i32
  }
}

module attributes {stable_mosaic.version = 11 : i64} {
  func.func @_ffn_kernel(%arg0: i32, %arg1: memref<4x16x128xf32, #tpu.memory_space<vmem>>, %arg2: memref<4x16x128xf32, #tpu.memory_space<vmem>>, %arg3: memref<1x128xf32, #tpu.memory_space<vmem>>, %arg4: memref<1x128xf32, #tpu.memory_space<vmem>>, %arg5: memref<128x256xbf16, #tpu.memory_space<vmem>>, %arg6: memref<1x256xf32, #tpu.memory_space<vmem>>, %arg7: memref<256x128xbf16, #tpu.memory_space<vmem>>, %arg8: memref<1x128xf32, #tpu.memory_space<vmem>>, %arg9: memref<4x16x128xf32, #tpu.memory_space<vmem>>, %arg10: memref<1x2x128xf32, #tpu.memory_space<vmem>>) attributes {dimension_semantics = [#tpu.dimension_semantics<parallel>], iteration_bounds = array<i64: 1>, scalar_prefetch = 0 : i64, scratch_operands = 0 : i64, tpu.core_type = #tpu.core_type<tc>, window_params = [{transform_indices = @transform_0, window_bounds = array<i64: 4, 16, 128>}, {transform_indices = @transform_1, window_bounds = array<i64: 4, 16, 128>}, {pipeline_mode = #tpu.pipeline_mode<synchronous>, transform_indices = @transform_2, window_bounds = array<i64: 1, 128>}, {pipeline_mode = #tpu.pipeline_mode<synchronous>, transform_indices = @transform_3, window_bounds = array<i64: 1, 128>}, {pipeline_mode = #tpu.pipeline_mode<synchronous>, transform_indices = @transform_4, window_bounds = array<i64: 128, 256>}, {pipeline_mode = #tpu.pipeline_mode<synchronous>, transform_indices = @transform_5, window_bounds = array<i64: 1, 256>}, {pipeline_mode = #tpu.pipeline_mode<synchronous>, transform_indices = @transform_6, window_bounds = array<i64: 256, 128>}, {pipeline_mode = #tpu.pipeline_mode<synchronous>, transform_indices = @transform_7, window_bounds = array<i64: 1, 128>}, {transform_indices = @transform_8, window_bounds = array<i64: 4, 16, 128>}, {transform_indices = @transform_9, window_bounds = array<i64: 1, 2, 128>}]} {
    %c0 = arith.constant 0 : index
    %c0_0 = arith.constant 0 : index
    %c0_1 = arith.constant 0 : index
    %0 = vector.load %arg1[%c0, %c0_0, %c0_1] : memref<4x16x128xf32, #tpu.memory_space<vmem>>, vector<4x16x128xf32>
    %1 = vector.shape_cast %0 : vector<4x16x128xf32> to vector<64x128xf32>
    %c0_2 = arith.constant 0 : index
    %c0_3 = arith.constant 0 : index
    %c0_4 = arith.constant 0 : index
    %2 = vector.load %arg2[%c0_2, %c0_3, %c0_4] : memref<4x16x128xf32, #tpu.memory_space<vmem>>, vector<4x16x128xf32>
    %3 = vector.shape_cast %2 : vector<4x16x128xf32> to vector<64x128xf32>
    %4 = arith.addf %3, %1 : vector<64x128xf32>
    %c0_5 = arith.constant 0 : index
    %c0_6 = arith.constant 0 : index
    %5 = vector.load %arg3[%c0_5, %c0_6] : memref<1x128xf32, #tpu.memory_space<vmem>>, vector<1x128xf32>
    %6 = vector.broadcast %5 : vector<1x128xf32> to vector<64x128xf32>
    %7 = arith.mulf %4, %6 : vector<64x128xf32>
    %c0_7 = arith.constant 0 : index
    %c0_8 = arith.constant 0 : index
    %8 = vector.load %arg4[%c0_7, %c0_8] : memref<1x128xf32, #tpu.memory_space<vmem>>, vector<1x128xf32>
    %9 = vector.broadcast %8 : vector<1x128xf32> to vector<64x128xf32>
    %10 = arith.addf %7, %9 : vector<64x128xf32>
    %11 = arith.truncf %10 : vector<64x128xf32> to vector<64x128xbf16>
    %c0_9 = arith.constant 0 : index
    %c0_10 = arith.constant 0 : index
    %12 = vector.load %arg5[%c0_9, %c0_10] : memref<128x256xbf16, #tpu.memory_space<vmem>>, vector<128x256xbf16>
    %cst = arith.constant dense<0.000000e+00> : vector<64x256xf32>
    %13 = tpu.matmul %11, %12, %cst {dimension_numbers = #tpu.dot_dimension_numbers<[1], [0], [0], [1], [0, 0, 1, 1], [], []>} : vector<64x128xbf16>, vector<128x256xbf16>, vector<64x256xf32> -> vector<64x256xf32>
    %c0_11 = arith.constant 0 : index
    %c0_12 = arith.constant 0 : index
    %14 = vector.load %arg6[%c0_11, %c0_12] : memref<1x256xf32, #tpu.memory_space<vmem>>, vector<1x256xf32>
    %15 = vector.broadcast %14 : vector<1x256xf32> to vector<64x256xf32>
    %16 = arith.addf %13, %15 : vector<64x256xf32>
    %17 = arith.mulf %16, %16 : vector<64x256xf32>
    %18 = arith.mulf %16, %17 : vector<64x256xf32>
    %cst_13 = arith.constant 4.471500e-02 : f32
    %19 = vector.broadcast %cst_13 : f32 to vector<64x256xf32>
    %20 = arith.mulf %19, %18 : vector<64x256xf32>
    %21 = arith.addf %16, %20 : vector<64x256xf32>
    %cst_14 = arith.constant 0.797884583 : f32
    %22 = vector.broadcast %cst_14 : f32 to vector<64x256xf32>
    %23 = arith.mulf %22, %21 : vector<64x256xf32>
    %24 = math.tanh %23 : vector<64x256xf32>
    %cst_15 = arith.constant 1.000000e+00 : f32
    %25 = vector.broadcast %cst_15 : f32 to vector<64x256xf32>
    %26 = arith.addf %25, %24 : vector<64x256xf32>
    %cst_16 = arith.constant 5.000000e-01 : f32
    %27 = vector.broadcast %cst_16 : f32 to vector<64x256xf32>
    %28 = arith.mulf %27, %26 : vector<64x256xf32>
    %29 = arith.mulf %16, %28 : vector<64x256xf32>
    %30 = arith.truncf %29 : vector<64x256xf32> to vector<64x256xbf16>
    %c0_17 = arith.constant 0 : index
    %c0_18 = arith.constant 0 : index
    %31 = vector.load %arg7[%c0_17, %c0_18] : memref<256x128xbf16, #tpu.memory_space<vmem>>, vector<256x128xbf16>
    %cst_19 = arith.constant dense<0.000000e+00> : vector<64x128xf32>
    %32 = tpu.matmul %30, %31, %cst_19 {dimension_numbers = #tpu.dot_dimension_numbers<[1], [0], [0], [1], [0, 0, 1, 1], [], []>} : vector<64x256xbf16>, vector<256x128xbf16>, vector<64x128xf32> -> vector<64x128xf32>
    %c0_20 = arith.constant 0 : index
    %c0_21 = arith.constant 0 : index
    %33 = vector.load %arg8[%c0_20, %c0_21] : memref<1x128xf32, #tpu.memory_space<vmem>>, vector<1x128xf32>
    %34 = vector.broadcast %33 : vector<1x128xf32> to vector<64x128xf32>
    %35 = arith.addf %32, %34 : vector<64x128xf32>
    %36 = arith.addf %35, %3 : vector<64x128xf32>
    %37 = vector.shape_cast %36 : vector<64x128xf32> to vector<4x16x128xf32>
    %c0_22 = arith.constant 0 : index
    %c0_23 = arith.constant 0 : index
    %c0_24 = arith.constant 0 : index
    %38 = vector.load %arg9[%c0_22, %c0_23, %c0_24] : memref<4x16x128xf32, #tpu.memory_space<vmem>>, vector<4x16x128xf32>
    tpu.vector_store %arg9[%c0_22, %c0_23, %c0_24], %37 {strides = array<i32>} : memref<4x16x128xf32, #tpu.memory_space<vmem>>, vector<4x16x128xf32>,
    %cst_25 = arith.constant dense<0.000000e+00> : vector<128xf32>
    %39 = vector.multi_reduction <add>, %36, %cst_25 [0] : vector<64x128xf32> to vector<128xf32>
    %40 = vector.shape_cast %39 : vector<128xf32> to vector<1x128xf32>
    %c0_26 = arith.constant 0 : index
    %c0_27 = arith.constant 0 : index
    %c0_28 = arith.constant 0 : index
    %41 = vector.load %arg10[%c0_26, %c0_27, %c0_28] : memref<1x2x128xf32, #tpu.memory_space<vmem>>, vector<1x1x128xf32>
    %42 = vector.shape_cast %41 : vector<1x1x128xf32> to vector<1x128xf32>
    %43 = vector.shape_cast %40 : vector<1x128xf32> to vector<1x1x128xf32>
    tpu.vector_store %arg10[%c0_26, %c0_27, %c0_28], %43 {strides = array<i32>} : memref<1x2x128xf32, #tpu.memory_space<vmem>>, vector<1x1x128xf32>,
    %44 = arith.mulf %36, %36 : vector<64x128xf32>
    %cst_29 = arith.constant dense<0.000000e+00> : vector<128xf32>
    %45 = vector.multi_reduction <add>, %44, %cst_29 [0] : vector<64x128xf32> to vector<128xf32>
    %46 = vector.shape_cast %45 : vector<128xf32> to vector<1x128xf32>
    %c0_30 = arith.constant 0 : index
    %c1 = arith.constant 1 : index
    %c0_31 = arith.constant 0 : index
    %47 = vector.load %arg10[%c0_30, %c1, %c0_31] : memref<1x2x128xf32, #tpu.memory_space<vmem>>, vector<1x1x128xf32>
    %48 = vector.shape_cast %47 : vector<1x1x128xf32> to vector<1x128xf32>
    %49 = vector.shape_cast %46 : vector<1x128xf32> to vector<1x1x128xf32>
    tpu.vector_store %arg10[%c0_30, %c1, %c0_31], %49 {strides = array<i32>} : memref<1x2x128xf32, #tpu.memory_space<vmem>>, vector<1x1x128xf32>,
    return
  }
  func.func @transform_0(%arg0: i32) -> (i32, i32, i32) {
    %c0_i32 = arith.constant 0 : i32
    %c0_i32_0 = arith.constant 0 : i32
    %c0_i32_1 = arith.constant 0 : i32
    return %arg0, %c0_i32, %c0_i32_0 : i32, i32, i32
  }
  func.func @transform_1(%arg0: i32) -> (i32, i32, i32) {
    %c0_i32 = arith.constant 0 : i32
    %c0_i32_0 = arith.constant 0 : i32
    %c0_i32_1 = arith.constant 0 : i32
    return %arg0, %c0_i32, %c0_i32_0 : i32, i32, i32
  }
  func.func @transform_2(%arg0: i32) -> (i32, i32) {
    %c0_i32 = arith.constant 0 : i32
    %c0_i32_0 = arith.constant 0 : i32
    %c0_i32_1 = arith.constant 0 : i32
    return %c0_i32, %c0_i32_0 : i32, i32
  }
  func.func @transform_3(%arg0: i32) -> (i32, i32) {
    %c0_i32 = arith.constant 0 : i32
    %c0_i32_0 = arith.constant 0 : i32
    %c0_i32_1 = arith.constant 0 : i32
    return %c0_i32, %c0_i32_0 : i32, i32
  }
  func.func @transform_4(%arg0: i32) -> (i32, i32) {
    %c0_i32 = arith.constant 0 : i32
    %c0_i32_0 = arith.constant 0 : i32
    %c0_i32_1 = arith.constant 0 : i32
    return %c0_i32, %c0_i32_0 : i32, i32
  }
  func.func @transform_5(%arg0: i32) -> (i32, i32) {
    %c0_i32 = arith.constant 0 : i32
    %c0_i32_0 = arith.constant 0 : i32
    %c0_i32_1 = arith.constant 0 : i32
    return %c0_i32, %c0_i32_0 : i32, i32
  }
  func.func @transform_6(%arg0: i32) -> (i32, i32) {
    %c0_i32 = arith.constant 0 : i32
    %c0_i32_0 = arith.constant 0 : i32
    %c0_i32_1 = arith.constant 0 : i32
    return %c0_i32, %c0_i32_0 : i32, i32
  }
  func.func @transform_7(%arg0: i32) -> (i32, i32) {
    %c0_i32 = arith.constant 0 : i32
    %c0_i32_0 = arith.constant 0 : i32
    %c0_i32_1 = arith.constant 0 : i32
    return %c0_i32, %c0_i32_0 : i32, i32
  }
  func.func @transform_8(%arg0: i32) -> (i32, i32, i32) {
    %c0_i32 = arith.constant 0 : i32
    %c0_i32_0 = arith.constant 0 : i32
    %c0_i32_1 = arith.constant 0 : i32
    return %arg0, %c0_i32, %c0_i32_0 : i32, i32, i32
  }
  func.func @transform_9(%arg0: i32) -> (i32, i32, i32) {
    %c0_i32 = arith.constant 0 : i32
    %c0_i32_0 = arith.constant 0 : i32
    %c0_i32_1 = arith.constant 0 : i32
    return %arg0, %c0_i32, %c0_i32_0 : i32, i32, i32
  }
}

</mosaic_0001>

<llo_original>
// kernel: encoder_block.3
$region0: #{encoder_block.3}
  #allocation0 [shape = 'u32[]', space=smem, size = 0x4, offset = 0x4, fixed_abs, tag = 'smem constant byte address 0x4 - core index']
  #allocation1 [shape = 'u32[72,128]{1,0:T(1,128)}', space=vmem, size = 0x9000, scoped, tag = 'internal scratch']
  %s0 = inlined_call_operand.vmem [shape: f32[4,16,128], index: 0, kind: input, shape index: {}]
  %s1 = inlined_call_operand.vmem [shape: f32[4,16,128], index: 1, kind: input, shape index: {}]
  %s2 = inlined_call_operand.vmem [shape: f32[1,128], index: 2, kind: input, shape index: {}]
  %s3 = inlined_call_operand.vmem [shape: f32[1,128], index: 3, kind: input, shape index: {}]
  %s4 = inlined_call_operand.vmem [shape: bf16[128,256], index: 4, kind: input, shape index: {}]
  %s5 = inlined_call_operand.vmem [shape: f32[1,256], index: 5, kind: input, shape index: {}]
  %s6 = inlined_call_operand.vmem [shape: bf16[256,128], index: 6, kind: input, shape index: {}]
  %s7 = inlined_call_operand.vmem [shape: f32[1,128], index: 7, kind: input, shape index: {}]
  %s8 = inlined_call_operand.vmem [shape: f32[4,16,128], index: 8, kind: output, shape index: {0}]
  %s9 = inlined_call_operand.vmem [shape: f32[1,2,128], index: 9, kind: output, shape index: {1}]
  %10 = xla_tuple %s8, %s9
  %s11 = sld [smem:[#allocation0]]
  $region50: #{encoder_block.3} parent=0
    _
  %s13 = ssub.s32 1, %s11
  %s14 = scalar_select 0, %s13, %s11
  // Predicated region
  $region2: #{encoder_block.3} parent=0 // pred_check
    _
  $region3: #{encoder_block.3} parent=0 // pred_check_branch
    %16 = sbr.rel (0) target = $region5
  $region4: #{encoder_block.3} parent=0 // pred_region
    _
  $region5: #{encoder_block.3} parent=0 // pred_fallthru
    _
  // Predicated region
  $region6: #{encoder_block.3} parent=0 // pred_check
    _
  $region7: #{encoder_block.3} parent=0 // pred_check_branch
    %18 = sbr.rel (0) target = $region9
  $region8: #{encoder_block.3} parent=0 // pred_region
    _
  $region9: #{encoder_block.3} parent=0 // pred_fallthru
    _
  // Predicated region
  $region10: #{encoder_block.3} parent=0 // pred_check
    _
  $region11: #{encoder_block.3} parent=0 // pred_check_branch
    %20 = sbr.rel (0) target = $region13
  $region12: #{encoder_block.3} parent=0 // pred_region
    _
  $region13: #{encoder_block.3} parent=0 // pred_fallthru
    _
  // Predicated region
  $region14: #{encoder_block.3} parent=0 // pred_check
    _
  $region15: #{encoder_block.3} parent=0 // pred_check_branch
    %22 = sbr.rel (0) target = $region17
  $region16: #{encoder_block.3} parent=0 // pred_region
    _
  $region17: #{encoder_block.3} parent=0 // pred_fallthru
    _
  // Predicated region
  $region18: #{encoder_block.3} parent=0 // pred_check
    _
  $region19: #{encoder_block.3} parent=0 // pred_check_branch
    %24 = sbr.rel (0) target = $region21
  $region20: #{encoder_block.3} parent=0 // pred_region
    _
  $region21: #{encoder_block.3} parent=0 // pred_fallthru
    _
  // Predicated region
  $region22: #{encoder_block.3} parent=0 // pred_check
    _
  $region23: #{encoder_block.3} parent=0 // pred_check_branch
    %26 = sbr.rel (0) target = $region25
  $region24: #{encoder_block.3} parent=0 // pred_region
    _
  $region25: #{encoder_block.3} parent=0 // pred_fallthru
    _
  // Predicated region
  $region26: #{encoder_block.3} parent=0 // pred_check
    _
  $region27: #{encoder_block.3} parent=0 // pred_check_branch
    %28 = sbr.rel (0) target = $region29
  $region28: #{encoder_block.3} parent=0 // pred_region
    _
  $region29: #{encoder_block.3} parent=0 // pred_fallthru
    _
  // Predicated region
  $region30: #{encoder_block.3} parent=0 // pred_check
    _
  $region31: #{encoder_block.3} parent=0 // pred_check_branch
    %30 = sbr.rel (0) target = $region33
  $region32: #{encoder_block.3} parent=0 // pred_region
    _
  $region33: #{encoder_block.3} parent=0 // pred_fallthru
    _
  %v31 = vld [vmem:[%s0] sm:$0xff]
  %v32 = vld [vmem:[%s0 + $0x8] sm:$0xff]
  %v33 = vld [vmem:[%s0 + $0x10] sm:$0xff]
  %v34 = vld [vmem:[%s0 + $0x18] sm:$0xff]
  %v35 = vld [vmem:[%s0 + $0x20] sm:$0xff]
  %v36 = vld [vmem:[%s0 + $0x28] sm:$0xff]
  %v37 = vld [vmem:[%s0 + $0x30] sm:$0xff]
  %v38 = vld [vmem:[%s0 + $0x38] sm:$0xff]
  %v39 = vld [vmem:[%s1] sm:$0xff]
  %v40 = vld [vmem:[%s1 + $0x8] sm:$0xff]
  %v41 = vld [vmem:[%s1 + $0x10] sm:$0xff]
  %v42 = vld [vmem:[%s1 + $0x18] sm:$0xff]
  %v43 = vld [vmem:[%s1 + $0x20] sm:$0xff]
  %v44 = vld [vmem:[%s1 + $0x28] sm:$0xff]
  %v45 = vld [vmem:[%s1 + $0x30] sm:$0xff]
  %v46 = vld [vmem:[%s1 + $0x38] sm:$0xff]
  %v47 = vadd.f32 %v39, %v31
  %v48 = vadd.f32 %v40, %v32
  %v49 = vadd.f32 %v41, %v33
  %v50 = vadd.f32 %v42, %v34
  %v51 = vadd.f32 %v43, %v35
  %v52 = vadd.f32 %v44, %v36
  %v53 = vadd.f32 %v45, %v37
  %v54 = vadd.f32 %v46, %v38
  %v55 = vld [vmem:[%s2] sm:$0x1]
  %v57 = vperm.slane %v55, 0
  %v59 = vmul.f32 %v47, %v57
  %v60 = vmul.f32 %v48, %v57
  %v61 = vmul.f32 %v49, %v57
  %v62 = vmul.f32 %v50, %v57
  %v63 = vmul.f32 %v51, %v57
  %v64 = vmul.f32 %v52, %v57
  %v65 = vmul.f32 %v53, %v57
  %v66 = vmul.f32 %v54, %v57
  %v67 = vld [vmem:[%s3] sm:$0x1]
  %v69 = vperm.slane %v67, 0
  %v71 = vadd.f32 %v59, %v69
  %v72 = vadd.f32 %v60, %v69
  %v73 = vadd.f32 %v61, %v69
  %v74 = vadd.f32 %v62, %v69
  %v75 = vadd.f32 %v63, %v69
  %v76 = vadd.f32 %v64, %v69
  %v77 = vadd.f32 %v65, %v69
  %v78 = vadd.f32 %v66, %v69
  %v79 = vpack.c.bf16 %v72, %v71
  %v80 = vpack.c.bf16 %v74, %v73
  %v81 = vpack.c.bf16 %v76, %v75
  %v82 = vpack.c.bf16 %v78, %v77
  %v83 = vld [vmem:[%s4] sm:$0xff]
  %v84 = vld [vmem:[%s4 + $0x8] sm:$0xff]
  %v85 = vld [vmem:[%s4 + $0x10] sm:$0xff]
  %v86 = vld [vmem:[%s4 + $0x18] sm:$0xff]
  %v87 = vld [vmem:[%s4 + $0x20] sm:$0xff]
  %v88 = vld [vmem:[%s4 + $0x28] sm:$0xff]
  %v89 = vld [vmem:[%s4 + $0x30] sm:$0xff]
  %v90 = vld [vmem:[%s4 + $0x38] sm:$0xff]
  %v91 = vld [vmem:[%s4 + $0x40] sm:$0xff]
  %v92 = vld [vmem:[%s4 + $0x48] sm:$0xff]
  %v93 = vld [vmem:[%s4 + $0x50] sm:$0xff]
  %v94 = vld [vmem:[%s4 + $0x58] sm:$0xff]
  %v95 = vld [vmem:[%s4 + $0x60] sm:$0xff]
  %v96 = vld [vmem:[%s4 + $0x68] sm:$0xff]
  %v97 = vld [vmem:[%s4 + $0x70] sm:$0xff]
  %v98 = vld [vmem:[%s4 + $0x78] sm:$0xff]
  %v99 = vld [vmem:[%s5] sm:$0x3]
  %v101 = vperm.slane %v99, 0
  %v102 = vperm.slane %v99, 1
  %v121 = vunpack.c.l.b16 %v83
  %v122 = vunpack.c.h.b16 %v83
  %v123 = vunpack.c.l.b16 %v84
  %v124 = vunpack.c.h.b16 %v84
  %v125 = vunpack.c.l.b16 %v85
  %v126 = vunpack.c.h.b16 %v85
  %v127 = vunpack.c.l.b16 %v86
  %v128 = vunpack.c.h.b16 %v86
  %v129 = vunpack.c.l.b16 %v87
  %v130 = vunpack.c.h.b16 %v87
  %v131 = vunpack.c.l.b16 %v88
  %v132 = vunpack.c.h.b16 %v88
  %v133 = vunpack.c.l.b16 %v89
  %v134 = vunpack.c.h.b16 %v89
  %v135 = vunpack.c.l.b16 %v90
  %v136 = vunpack.c.h.b16 %v90
  %v137 = vunpack.c.l.b16 %v91
  %v138 = vunpack.c.h.b16 %v91
  %v139 = vunpack.c.l.b16 %v92
  %v140 = vunpack.c.h.b16 %v92
  %v141 = vunpack.c.l.b16 %v93
  %v142 = vunpack.c.h.b16 %v93
  %v143 = vunpack.c.l.b16 %v94
  %v144 = vunpack.c.h.b16 %v94
  %v145 = vunpack.c.l.b16 %v95
  %v146 = vunpack.c.h.b16 %v95
  %v147 = vunpack.c.l.b16 %v96
  %v148 = vunpack.c.h.b16 %v96
  %v149 = vunpack.c.l.b16 %v97
  %v150 = vunpack.c.h.b16 %v97
  %v151 = vunpack.c.l.b16 %v98
  %v152 = vunpack.c.h.b16 %v98
  %v153 = vpack.c.b16 %v123, %v121
  %v154 = vpack.c.b16 %v124, %v122
  %v155 = vpack.c.b16 %v127, %v125
  %v156 = vpack.c.b16 %v128, %v126
  %v157 = vpack.c.b16 %v131, %v129
  %v158 = vpack.c.b16 %v132, %v130
  %v159 = vpack.c.b16 %v135, %v133
  %v160 = vpack.c.b16 %v136, %v134
  %v161 = vpack.c.b16 %v139, %v137
  %v162 = vpack.c.b16 %v140, %v138
  %v163 = vpack.c.b16 %v143, %v141
  %v164 = vpack.c.b16 %v144, %v142
  %v165 = vpack.c.b16 %v147, %v145
  %v166 = vpack.c.b16 %v148, %v146
  %v167 = vpack.c.b16 %v151, %v149
  %v168 = vpack.c.b16 %v152, %v150
  %185 = vmatpush.bf16.msra.mxu0 %v167
  %186 = vmatpush.bf16.msra.mxu0 %v165
  %187 = vmatpush.bf16.msra.mxu0 %v163
  %188 = vmatpush.bf16.msra.mxu0 %v161
  %189 = vmatpush.bf16.msra.mxu0 %v159
  %190 = vmatpush.bf16.msra.mxu0 %v157
  %191 = vmatpush.bf16.msra.mxu0 %v155
  %192 = vmatpush.bf16.msra.mxu0 %v153
  %193 = vmatmul.bf16.gmra.mxu0 %v79
  %v194 = vpop.f32.mrf.mxu0
  %v195 = vadd.f32 %v101, %v194
  %v196 = vpop.f32.mrf.mxu0
  %v197 = vadd.f32 %v101, %v196
  %198 = vmatmul.bf16.gmra.mxu0 %v80
  %v199 = vpop.f32.mrf.mxu0
  %v200 = vadd.f32 %v101, %v199
  %v201 = vpop.f32.mrf.mxu0
  %v202 = vadd.f32 %v101, %v201
  %203 = vmatmul.bf16.gmra.mxu0 %v81
  %v204 = vpop.f32.mrf.mxu0
  %v205 = vadd.f32 %v101, %v204
  %v206 = vpop.f32.mrf.mxu0
  %v207 = vadd.f32 %v101, %v206
  %208 = vmatmul.bf16.gmra.mxu0 %v82
  %v209 = vpop.f32.mrf.mxu0
  %v210 = vadd.f32 %v101, %v209
  %v211 = vpop.f32.mrf.mxu0
  %v212 = vadd.f32 %v101, %v211
  %213 = vdwg.mxu0
  %214 = vmatpush.bf16.msra.mxu0 %v168
  %215 = vmatpush.bf16.msra.mxu0 %v166
  %216 = vmatpush.bf16.msra.mxu0 %v164
  %217 = vmatpush.bf16.msra.mxu0 %v162
  %218 = vmatpush.bf16.msra.mxu0 %v160
  %219 = vmatpush.bf16.msra.mxu0 %v158
  %220 = vmatpush.bf16.msra.mxu0 %v156
  %221 = vmatpush.bf16.msra.mxu0 %v154
  %222 = vmatmul.bf16.gmra.mxu0 %v79
  %v223 = vpop.f32.mrf.mxu0
  %v224 = vadd.f32 %v102, %v223
  %v225 = vpop.f32.mrf.mxu0
  %v226 = vadd.f32 %v102, %v225
  %227 = vmatmul.bf16.gmra.mxu0 %v80
  %v228 = vpop.f32.mrf.mxu0
  %v229 = vadd.f32 %v102, %v228
  %v230 = vpop.f32.mrf.mxu0
  %v231 = vadd.f32 %v102, %v230
  %232 = vmatmul.bf16.gmra.mxu0 %v81
  %v233 = vpop.f32.mrf.mxu0
  %v234 = vadd.f32 %v102, %v233
  %v235 = vpop.f32.mrf.mxu0
  %v236 = vadd.f32 %v102, %v235
  %237 = vmatmul.bf16.gmra.mxu0 %v82
  %v238 = vpop.f32.mrf.mxu0
  %v239 = vadd.f32 %v102, %v238
  %v240 = vpop.f32.mrf.mxu0
  %v241 = vadd.f32 %v102, %v240
  %242 = vdwg.mxu0
  %v243 = vmul.f32 %v195, %v195
  %v244 = vmul.f32 %v224, %v224
  %v245 = vmul.f32 %v197, %v197
  %v246 = vmul.f32 %v226, %v226
  %v247 = vmul.f32 %v200, %v200
  %v248 = vmul.f32 %v229, %v229
  %v249 = vmul.f32 %v202, %v202
  %v250 = vmul.f32 %v231, %v231
  %v251 = vmul.f32 %v205, %v205
  %v252 = vmul.f32 %v234, %v234
  %v253 = vmul.f32 %v207, %v207
  %v254 = vmul.f32 %v236, %v236
  %v255 = vmul.f32 %v210, %v210
  %v256 = vmul.f32 %v239, %v239
  %v257 = vmul.f32 %v212, %v212
  %v258 = vmul.f32 %v241, %v241
  %v259 = vmul.f32 %v195, %v243
  %v260 = vmul.f32 %v224, %v244
  %v261 = vmul.f32 %v197, %v245
  %v262 = vmul.f32 %v226, %v246
  %v263 = vmul.f32 %v200, %v247
  %v264 = vmul.f32 %v229, %v248
  %v265 = vmul.f32 %v202, %v249
  %v266 = vmul.f32 %v231, %v250
  %v267 = vmul.f32 %v205, %v251
  %v268 = vmul.f32 %v234, %v252
  %v269 = vmul.f32 %v207, %v253
  %v270 = vmul.f32 %v236, %v254
  %v271 = vmul.f32 %v210, %v255
  %v272 = vmul.f32 %v239, %v256
  %v273 = vmul.f32 %v212, %v257
  %v274 = vmul.f32 %v241, %v258
  %v275 = vmul.f32 %v259, 0.044715
  %v276 = vmul.f32 %v260, 0.044715
  %v277 = vmul.f32 %v261, 0.044715
  %v278 = vmul.f32 %v262, 0.044715
  %v279 = vmul.f32 %v263, 0.044715
  %v280 = vmul.f32 %v264, 0.044715
  %v281 = vmul.f32 %v265, 0.044715
  %v282 = vmul.f32 %v266, 0.044715
  %v283 = vmul.f32 %v267, 0.044715
  %v284 = vmul.f32 %v268, 0.044715
  %v285 = vmul.f32 %v269, 0.044715
  %v286 = vmul.f32 %v270, 0.044715
  %v287 = vmul.f32 %v271, 0.044715
  %v288 = vmul.f32 %v272, 0.044715
  %v289 = vmul.f32 %v273, 0.044715
  %v290 = vmul.f32 %v274, 0.044715
  %v291 = vadd.f32 %v195, %v275
  %v292 = vadd.f32 %v224, %v276
  %v293 = vadd.f32 %v197, %v277
  %v294 = vadd.f32 %v226, %v278
  %v295 = vadd.f32 %v200, %v279
  %v296 = vadd.f32 %v229, %v280
  %v297 = vadd.f32 %v202, %v281
  %v298 = vadd.f32 %v231, %v282
  %v299 = vadd.f32 %v205, %v283
  %v300 = vadd.f32 %v234, %v284
  %v301 = vadd.f32 %v207, %v285
  %v302 = vadd.f32 %v236, %v286
  %v303 = vadd.f32 %v210, %v287
  %v304 = vadd.f32 %v239, %v288
  %v305 = vadd.f32 %v212, %v289
  %v306 = vadd.f32 %v241, %v290
  %v307 = vmul.f32 %v291, 0.7978846
  %v308 = vmul.f32 %v292, 0.7978846
  %v309 = vmul.f32 %v293, 0.7978846
  %v310 = vmul.f32 %v294, 0.7978846
  %v311 = vmul.f32 %v295, 0.7978846
  %v312 = vmul.f32 %v296, 0.7978846
  %v313 = vmul.f32 %v297, 0.7978846
  %v314 = vmul.f32 %v298, 0.7978846
  %v315 = vmul.f32 %v299, 0.7978846
  %v316 = vmul.f32 %v300, 0.7978846
  %v317 = vmul.f32 %v301, 0.7978846
  %v318 = vmul.f32 %v302, 0.7978846
  %v319 = vmul.f32 %v303, 0.7978846
  %v320 = vmul.f32 %v304, 0.7978846
  %v321 = vmul.f32 %v305, 0.7978846
  %v322 = vmul.f32 %v306, 0.7978846
  %v323 = vtanh.pop %v307
  %v324 = vtanh.pop %v308
  %v325 = vtanh.pop %v309
  %v326 = vtanh.pop %v310
  %v327 = vtanh.pop %v311
  %v328 = vtanh.pop %v312
  %v329 = vtanh.pop %v313
  %v330 = vtanh.pop %v314
  %v331 = vtanh.pop %v315
  %v332 = vtanh.pop %v316
  %v333 = vtanh.pop %v317
  %v334 = vtanh.pop %v318
  %v335 = vtanh.pop %v319
  %v336 = vtanh.pop %v320
  %v337 = vtanh.pop %v321
  %v338 = vtanh.pop %v322
  %v339 = vadd.f32 %v323, 1.0
  %v340 = vadd.f32 %v324, 1.0
  %v341 = vadd.f32 %v325, 1.0
  %v342 = vadd.f32 %v326, 1.0
  %v343 = vadd.f32 %v327, 1.0
  %v344 = vadd.f32 %v328, 1.0
  %v345 = vadd.f32 %v329, 1.0
  %v346 = vadd.f32 %v330, 1.0
  %v347 = vadd.f32 %v331, 1.0
  %v348 = vadd.f32 %v332, 1.0
  %v349 = vadd.f32 %v333, 1.0
  %v350 = vadd.f32 %v334, 1.0
  %v351 = vadd.f32 %v335, 1.0
  %v352 = vadd.f32 %v336, 1.0
  %v353 = vadd.f32 %v337, 1.0
  %v354 = vadd.f32 %v338, 1.0
  %v355 = vmul.f32 %v339, 0.5
  %v356 = vmul.f32 %v340, 0.5
  %v357 = vmul.f32 %v341, 0.5
  %v358 = vmul.f32 %v342, 0.5
  %v359 = vmul.f32 %v343, 0.5
  %v360 = vmul.f32 %v344, 0.5
  %v361 = vmul.f32 %v345, 0.5
  %v362 = vmul.f32 %v346, 0.5
  %v363 = vmul.f32 %v347, 0.5
  %v364 = vmul.f32 %v348, 0.5
  %v365 = vmul.f32 %v349, 0.5
  %v366 = vmul.f32 %v350, 0.5
  %v367 = vmul.f32 %v351, 0.5
  %v368 = vmul.f32 %v352, 0.5
  %v369 = vmul.f32 %v353, 0.5
  %v370 = vmul.f32 %v354, 0.5
  %v371 = vmul.f32 %v195, %v355
  %v372 = vmul.f32 %v224, %v356
  %v373 = vmul.f32 %v197, %v357
  %v374 = vmul.f32 %v226, %v358
  %v375 = vmul.f32 %v200, %v359
  %v376 = vmul.f32 %v229, %v360
  %v377 = vmul.f32 %v202, %v361
  %v378 = vmul.f32 %v231, %v362
  %v379 = vmul.f32 %v205, %v363
  %v380 = vmul.f32 %v234, %v364
  %v381 = vmul.f32 %v207, %v365
  %v382 = vmul.f32 %v236, %v366
  %v383 = vmul.f32 %v210, %v367
  %v384 = vmul.f32 %v239, %v368
  %v385 = vmul.f32 %v212, %v369
  %v386 = vmul.f32 %v241, %v370
  %v387 = vpack.c.bf16 %v373, %v371
  %v388 = vpack.c.bf16 %v374, %v372
  %v389 = vpack.c.bf16 %v377, %v375
  %v390 = vpack.c.bf16 %v378, %v376
  %v391 = vpack.c.bf16 %v381, %v379
  %v392 = vpack.c.bf16 %v382, %v380
  %v393 = vpack.c.bf16 %v385, %v383
  %v394 = vpack.c.bf16 %v386, %v384
  %v395 = vld [vmem:[%s6] sm:$0xf]
  %v396 = vld [vmem:[%s6 + $0x4] sm:$0xf]
  %v397 = vld [vmem:[%s6 + $0x8] sm:$0xf]
  %v398 = vld [vmem:[%s6 + $0xc] sm:$0xf]
  %v399 = vld [vmem:[%s6 + $0x10] sm:$0xf]
  %v400 = vld [vmem:[%s6 + $0x14] sm:$0xf]
  %v401 = vld [vmem:[%s6 + $0x18] sm:$0xf]
  %v402 = vld [vmem:[%s6 + $0x1c] sm:$0xf]
  %v403 = vld [vmem:[%s6 + $0x20] sm:$0xf]
  %v404 = vld [vmem:[%s6 + $0x24] sm:$0xf]
  %v405 = vld [vmem:[%s6 + $0x28] sm:$0xf]
  %v406 = vld [vmem:[%s6 + $0x2c] sm:$0xf]
  %v407 = vld [vmem:[%s6 + $0x30] sm:$0xf]
  %v408 = vld [vmem:[%s6 + $0x34] sm:$0xf]
  %v409 = vld [vmem:[%s6 + $0x38] sm:$0xf]
  %v410 = vld [vmem:[%s6 + $0x3c] sm:$0xf]
  %v411 = vld [vmem:[%s6 + $0x40] sm:$0xf]
  %v412 = vld [vmem:[%s6 + $0x44] sm:$0xf]
  %v413 = vld [vmem:[%s6 + $0x48] sm:$0xf]
  %v414 = vld [vmem:[%s6 + $0x4c] sm:$0xf]
  %v415 = vld [vmem:[%s6 + $0x50] sm:$0xf]
  %v416 = vld [vmem:[%s6 + $0x54] sm:$0xf]
  %v417 = vld [vmem:[%s6 + $0x58] sm:$0xf]
  %v418 = vld [vmem:[%s6 + $0x5c] sm:$0xf]
  %v419 = vld [vmem:[%s6 + $0x60] sm:$0xf]
  %v420 = vld [vmem:[%s6 + $0x64] sm:$0xf]
  %v421 = vld [vmem:[%s6 + $0x68] sm:$0xf]
  %v422 = vld [vmem:[%s6 + $0x6c] sm:$0xf]
  %v423 = vld [vmem:[%s6 + $0x70] sm:$0xf]
  %v424 = vld [vmem:[%s6 + $0x74] sm:$0xf]
  %v425 = vld [vmem:[%s6 + $0x78] sm:$0xf]
  %v426 = vld [vmem:[%s6 + $0x7c] sm:$0xf]
  %v427 = vld [vmem:[%s7] sm:$0x1]
  %v429 = vperm.slane %v427, 0
  %v463 = vunpack.c.l.b16 %v395
  %v464 = vunpack.c.l.b16 %v396
  %v465 = vunpack.c.l.b16 %v397
  %v466 = vunpack.c.l.b16 %v398
  %v467 = vunpack.c.l.b16 %v399
  %v468 = vunpack.c.l.b16 %v400
  %v469 = vunpack.c.l.b16 %v401
  %v470 = vunpack.c.l.b16 %v402
  %v471 = vunpack.c.l.b16 %v403
  %v472 = vunpack.c.l.b16 %v404
  %v473 = vunpack.c.l.b16 %v405
  %v474 = vunpack.c.l.b16 %v406
  %v475 = vunpack.c.l.b16 %v407
  %v476 = vunpack.c.l.b16 %v408
  %v477 = vunpack.c.l.b16 %v409
  %v478 = vunpack.c.l.b16 %v410
  %v479 = vunpack.c.l.b16 %v411
  %v480 = vunpack.c.l.b16 %v412
  %v481 = vunpack.c.l.b16 %v413
  %v482 = vunpack.c.l.b16 %v414
  %v483 = vunpack.c.l.b16 %v415
  %v484 = vunpack.c.l.b16 %v416
  %v485 = vunpack.c.l.b16 %v417
  %v486 = vunpack.c.l.b16 %v418
  %v487 = vunpack.c.l.b16 %v419
  %v488 = vunpack.c.l.b16 %v420
  %v489 = vunpack.c.l.b16 %v421
  %v490 = vunpack.c.l.b16 %v422
  %v491 = vunpack.c.l.b16 %v423
  %v492 = vunpack.c.l.b16 %v424
  %v493 = vunpack.c.l.b16 %v425
  %v494 = vunpack.c.l.b16 %v426
  %v495 = vpack.c.b16 %v464, %v463
  %v496 = vpack.c.b16 %v466, %v465
  %v497 = vpack.c.b16 %v468, %v467
  %v498 = vpack.c.b16 %v470, %v469
  %v499 = vpack.c.b16 %v472, %v471
  %v500 = vpack.c.b16 %v474, %v473
  %v501 = vpack.c.b16 %v476, %v475
  %v502 = vpack.c.b16 %v478, %v477
  %v503 = vpack.c.b16 %v480, %v479
  %v504 = vpack.c.b16 %v482, %v481
  %v505 = vpack.c.b16 %v484, %v483
  %v506 = vpack.c.b16 %v486, %v485
  %v507 = vpack.c.b16 %v488, %v487
  %v508 = vpack.c.b16 %v490, %v489
  %v509 = vpack.c.b16 %v492, %v491
  %v510 = vpack.c.b16 %v494, %v493
  %527 = vmatpush.bf16.msra.mxu0 %v502
  %528 = vmatpush.bf16.msra.mxu0 %v501
  %529 = vmatpush.bf16.msra.mxu0 %v500
  %530 = vmatpush.bf16.msra.mxu0 %v499
  %531 = vmatpush.bf16.msra.mxu0 %v498
  %532 = vmatpush.bf16.msra.mxu0 %v497
  %533 = vmatpush.bf16.msra.mxu0 %v496
  %534 = vmatpush.bf16.msra.mxu0 %v495
  %535 = vmatmul.bf16.gmra.mxu0 %v387
  %v536 = vpop.f32.mrf.mxu0
  %v537 = vadd.f32 %v429, %v536
  %v538 = vpop.f32.mrf.mxu0
  %v539 = vadd.f32 %v429, %v538
  %540 = vmatmul.bf16.gmra.mxu0 %v389
  %v541 = vpop.f32.mrf.mxu0
  %v542 = vadd.f32 %v429, %v541
  %v543 = vpop.f32.mrf.mxu0
  %v544 = vadd.f32 %v429, %v543
  %545 = vmatmul.bf16.gmra.mxu0 %v391
  %v546 = vpop.f32.mrf.mxu0
  %v547 = vadd.f32 %v429, %v546
  %v548 = vpop.f32.mrf.mxu0
  %v549 = vadd.f32 %v429, %v548
  %550 = vmatmul.bf16.gmra.mxu0 %v393
  %v551 = vpop.f32.mrf.mxu0
  %v552 = vadd.f32 %v429, %v551
  %v553 = vpop.f32.mrf.mxu0
  %v554 = vadd.f32 %v429, %v553
  %555 = vdwg.mxu0
  %556 = vmatpush.bf16.msra.mxu0 %v510
  %557 = vmatpush.bf16.msra.mxu0 %v509
  %558 = vmatpush.bf16.msra.mxu0 %v508
  %559 = vmatpush.bf16.msra.mxu0 %v507
  %560 = vmatpush.bf16.msra.mxu0 %v506
  %561 = vmatpush.bf16.msra.mxu0 %v505
  %562 = vmatpush.bf16.msra.mxu0 %v504
  %563 = vmatpush.bf16.msra.mxu0 %v503
  %564 = vmatmul.bf16.gmra.mxu0 %v388
  %v565 = vpop.f32.mrf.mxu0
  %v566 = vadd.f32 %v537, %v565
  %v567 = vpop.f32.mrf.mxu0
  %v568 = vadd.f32 %v539, %v567
  %569 = vmatmul.bf16.gmra.mxu0 %v390
  %v570 = vpop.f32.mrf.mxu0
  %v571 = vadd.f32 %v542, %v570
  %v572 = vpop.f32.mrf.mxu0
  %v573 = vadd.f32 %v544, %v572
  %574 = vmatmul.bf16.gmra.mxu0 %v392
  %v575 = vpop.f32.mrf.mxu0
  %v576 = vadd.f32 %v547, %v575
  %v577 = vpop.f32.mrf.mxu0
  %v578 = vadd.f32 %v549, %v577
  %579 = vmatmul.bf16.gmra.mxu0 %v394
  %v580 = vpop.f32.mrf.mxu0
  %v581 = vadd.f32 %v552, %v580
  %v582 = vpop.f32.mrf.mxu0
  %v583 = vadd.f32 %v554, %v582
  %584 = vdwg.mxu0
  %v585 = vadd.f32 %v566, %v39
  %v586 = vadd.f32 %v568, %v40
  %v587 = vadd.f32 %v571, %v41
  %v588 = vadd.f32 %v573, %v42
  %v589 = vadd.f32 %v576, %v43
  %v590 = vadd.f32 %v578, %v44
  %v591 = vadd.f32 %v581, %v45
  %v592 = vadd.f32 %v583, %v46
  %593 = vst [vmem:[%s8] sm:$0xff] %v585
  %594 = vst [vmem:[%s8 + $0x8] sm:$0xff] %v586
  %595 = vst [vmem:[%s8 + $0x10] sm:$0xff] %v587
  %596 = vst [vmem:[%s8 + $0x18] sm:$0xff] %v588
  %597 = vst [vmem:[%s8 + $0x20] sm:$0xff] %v589
  %598 = vst [vmem:[%s8 + $0x28] sm:$0xff] %v590
  %599 = vst [vmem:[%s8 + $0x30] sm:$0xff] %v591
  %600 = vst [vmem:[%s8 + $0x38] sm:$0xff] %v592
  %v601 = vadd.f32 %v585, %v586
  %v602 = vadd.f32 %v601, %v587
  %v603 = vadd.f32 %v602, %v588
  %v604 = vadd.f32 %v603, %v589
  %v605 = vadd.f32 %v604, %v590
  %v606 = vadd.f32 %v605, %v591
  %v607 = vadd.f32 %v606, %v592
  %v608 = vrot.slane %v607, 4
  %v609 = vadd.f32 %v607, %v608
  %v610 = vrot.slane %v609, 2
  %v611 = vadd.f32 %v609, %v610
  %v612 = vrot.slane %v611, 1
  %v613 = vadd.f32 %v611, %v612
  %614 = vst [vmem:[%s9] sm:$0x1] %v613
  %v615 = vmul.f32 %v585, %v585
  %v616 = vmul.f32 %v586, %v586
  %v617 = vmul.f32 %v587, %v587
  %v618 = vmul.f32 %v588, %v588
  %v619 = vmul.f32 %v589, %v589
  %v620 = vmul.f32 %v590, %v590
  %v621 = vmul.f32 %v591, %v591
  %v622 = vmul.f32 %v592, %v592
  %v623 = vadd.f32 %v615, %v616
  %v624 = vadd.f32 %v623, %v617
  %v625 = vadd.f32 %v624, %v618
  %v626 = vadd.f32 %v625, %v619
  %v627 = vadd.f32 %v626, %v620
  %v628 = vadd.f32 %v627, %v621
  %v629 = vadd.f32 %v628, %v622
  %v630 = vrot.slane %v629, 4
  %v631 = vadd.f32 %v629, %v630
  %v632 = vrot.slane %v631, 2
  %v633 = vadd.f32 %v631, %v632
  %v634 = vrot.slane %v633, 1
  %v635 = vadd.f32 %v633, %v634
  %636 = vst [vmem:[%s9 + $0x1] sm:$0x1] %v635
  // Predicated region
  $region34: #{encoder_block.3} parent=0 // pred_check
    _
  $region35: #{encoder_block.3} parent=0 // pred_check_branch
    %638 = sbr.rel (0) target = $region37
  $region36: #{encoder_block.3} parent=0 // pred_region
    _
  $region37: #{encoder_block.3} parent=0 // pred_fallthru
    _
  // Predicated region
  $region38: #{encoder_block.3} parent=0 // pred_check
    _
  $region39: #{encoder_block.3} parent=0 // pred_check_branch
    %640 = sbr.rel (0) target = $region41
  $region40: #{encoder_block.3} parent=0 // pred_region
    _
  $region41: #{encoder_block.3} parent=0 // pred_fallthru
    _
  // Predicated region
  $region42: #{encoder_block.3} parent=0 // pred_check
    _
  $region43: #{encoder_block.3} parent=0 // pred_check_branch
    %642 = sbr.rel (0) target = $region45
  $region44: #{encoder_block.3} parent=0 // pred_region
    _
  $region45: #{encoder_block.3} parent=0 // pred_fallthru
    _
  // Predicated region
  $region46: #{encoder_block.3} parent=0 // pred_check
    _
  $region47: #{encoder_block.3} parent=0 // pred_check_branch
    %644 = sbr.rel (0) target = $region49
  $region48: #{encoder_block.3} parent=0 // pred_region
    _
  $region49: #{encoder_block.3} parent=0 // pred_fallthru
    _

// kernel: encoder_block.2
$region0: #{encoder_block.2}
  #allocation0 [shape = 'u32[]', space=smem, size = 0x4, offset = 0x4, fixed_abs, tag = 'smem constant byte address 0x4 - core index']
  #allocation1 [shape = 'u32[72,128]{1,0:T(1,128)}', space=vmem, size = 0x9000, scoped, tag = 'internal scratch']
  #allocation2 [shape = 'bf16[64,128]{1,0:T(8,128)(2,1)}', space=vmem, size = 0x4000, scoped, tag = 'scratch operand']
  %s0 = inlined_call_operand.vmem [shape: f32[4,16,128], index: 0, kind: input, shape index: {}]
  %s1 = inlined_call_operand.vmem [shape: bf16[128,384], index: 1, kind: input, shape index: {}]
  %s2 = inlined_call_operand.vmem [shape: f32[1,384], index: 2, kind: input, shape index: {}]
  %s3 = inlined_call_operand.vmem [shape: bf16[128,128], index: 3, kind: input, shape index: {}]
  %s4 = inlined_call_operand.vmem [shape: f32[1,128], index: 4, kind: input, shape index: {}]
  %s5 = inlined_call_operand.vmem [shape: f32[4,16,128], index: 5, kind: output, shape index: {0}]
  %s6 = inlined_call_operand.vmem [shape: f32[1,2,128], index: 6, kind: output, shape index: {1}]
  %7 = xla_tuple %s5, %s6
  %s8 = sld [smem:[#allocation0]]
  $region38: #{encoder_block.2} parent=0
    _
  %s10 = ssub.s32 1, %s8
  %s11 = scalar_select 0, %s10, %s8
  // Predicated region
  $region2: #{encoder_block.2} parent=0 // pred_check
    _
  $region3: #{encoder_block.2} parent=0 // pred_check_branch
    %13 = sbr.rel (0) target = $region5
  $region4: #{encoder_block.2} parent=0 // pred_region
    _
  $region5: #{encoder_block.2} parent=0 // pred_fallthru
    _
  // Predicated region
  $region6: #{encoder_block.2} parent=0 // pred_check
    _
  $region7: #{encoder_block.2} parent=0 // pred_check_branch
    %15 = sbr.rel (0) target = $region9
  $region8: #{encoder_block.2} parent=0 // pred_region
    _
  $region9: #{encoder_block.2} parent=0 // pred_fallthru
    _
  // Predicated region
  $region10: #{encoder_block.2} parent=0 // pred_check
    _
  $region11: #{encoder_block.2} parent=0 // pred_check_branch
    %17 = sbr.rel (0) target = $region13
  $region12: #{encoder_block.2} parent=0 // pred_region
    _
  $region13: #{encoder_block.2} parent=0 // pred_fallthru
    _
  // Predicated region
  $region14: #{encoder_block.2} parent=0 // pred_check
    _
  $region15: #{encoder_block.2} parent=0 // pred_check_branch
    %19 = sbr.rel (0) target = $region17
  $region16: #{encoder_block.2} parent=0 // pred_region
    _
  $region17: #{encoder_block.2} parent=0 // pred_fallthru
    _
  // Predicated region
  $region18: #{encoder_block.2} parent=0 // pred_check
    _
  $region19: #{encoder_block.2} parent=0 // pred_check_branch
    %21 = sbr.rel (0) target = $region21
  $region20: #{encoder_block.2} parent=0 // pred_region
    _
  $region21: #{encoder_block.2} parent=0 // pred_fallthru
    _
  %v23 = vld [vmem:[%s0] sm:$0xff]
  %v24 = vld [vmem:[%s0 + $0x8] sm:$0xff]
  %v25 = vld [vmem:[%s0 + $0x10] sm:$0xff]
  %v26 = vld [vmem:[%s0 + $0x18] sm:$0xff]
  %v27 = vld [vmem:[%s0 + $0x20] sm:$0xff]
  %v28 = vld [vmem:[%s0 + $0x28] sm:$0xff]
  %v29 = vld [vmem:[%s0 + $0x30] sm:$0xff]
  %v30 = vld [vmem:[%s0 + $0x38] sm:$0xff]
  %v31 = vpack.c.bf16 %v24, %v23
  %v32 = vpack.c.bf16 %v26, %v25
  %v33 = vpack.c.bf16 %v28, %v27
  %v34 = vpack.c.bf16 %v30, %v29
  %v35 = vld [vmem:[%s1] sm:$0xff]
  %v36 = vld [vmem:[%s1 + $0x8] sm:$0xf]
  %v37 = vld [vmem:[%s1 + $0xc] sm:$0xff]
  %v38 = vld [vmem:[%s1 + $0x14] sm:$0xf]
  %v39 = vld [vmem:[%s1 + $0x18] sm:$0xff]
  %v40 = vld [vmem:[%s1 + $0x20] sm:$0xf]
  %v41 = vld [vmem:[%s1 + $0x24] sm:$0xff]
  %v42 = vld [vmem:[%s1 + $0x2c] sm:$0xf]
  %v43 = vld [vmem:[%s1 + $0x30] sm:$0xff]
  %v44 = vld [vmem:[%s1 + $0x38] sm:$0xf]
  %v45 = vld [vmem:[%s1 + $0x3c] sm:$0xff]
  %v46 = vld [vmem:[%s1 + $0x44] sm:$0xf]
  %v47 = vld [vmem:[%s1 + $0x48] sm:$0xff]
  %v48 = vld [vmem:[%s1 + $0x50] sm:$0xf]
  %v49 = vld [vmem:[%s1 + $0x54] sm:$0xff]
  %v50 = vld [vmem:[%s1 + $0x5c] sm:$0xf]
  %v51 = vld [vmem:[%s1 + $0x60] sm:$0xff]
  %v52 = vld [vmem:[%s1 + $0x68] sm:$0xf]
  %v53 = vld [vmem:[%s1 + $0x6c] sm:$0xff]
  %v54 = vld [vmem:[%s1 + $0x74] sm:$0xf]
  %v55 = vld [vmem:[%s1 + $0x78] sm:$0xff]
  %v56 = vld [vmem:[%s1 + $0x80] sm:$0xf]
  %v57 = vld [vmem:[%s1 + $0x84] sm:$0xff]
  %v58 = vld [vmem:[%s1 + $0x8c] sm:$0xf]
  %v59 = vld [vmem:[%s1 + $0x90] sm:$0xff]
  %v60 = vld [vmem:[%s1 + $0x98] sm:$0xf]
  %v61 = vld [vmem:[%s1 + $0x9c] sm:$0xff]
  %v62 = vld [vmem:[%s1 + $0xa4] sm:$0xf]
  %v63 = vld [vmem:[%s1 + $0xa8] sm:$0xff]
  %v64 = vld [vmem:[%s1 + $0xb0] sm:$0xf]
  %v65 = vld [vmem:[%s1 + $0xb4] sm:$0xff]
  %v66 = vld [vmem:[%s1 + $0xbc] sm:$0xf]
  %v67 = vld [vmem:[%s2] sm:$0x7]
  %v69 = vperm.slane %v67, 0
  %v70 = vperm.slane %v67, 1
  %v71 = vperm.slane %v67, 2
  %v107 = vunpack.c.l.b16 %v35
  %v108 = vunpack.c.h.b16 %v35
  %v109 = vunpack.c.l.b16 %v36
  %v110 = vunpack.c.l.b16 %v37
  %v111 = vunpack.c.h.b16 %v37
  %v112 = vunpack.c.l.b16 %v38
  %v113 = vunpack.c.l.b16 %v39
  %v114 = vunpack.c.h.b16 %v39
  %v115 = vunpack.c.l.b16 %v40
  %v116 = vunpack.c.l.b16 %v41
  %v117 = vunpack.c.h.b16 %v41
  %v118 = vunpack.c.l.b16 %v42
  %v119 = vunpack.c.l.b16 %v43
  %v120 = vunpack.c.h.b16 %v43
  %v121 = vunpack.c.l.b16 %v44
  %v122 = vunpack.c.l.b16 %v45
  %v123 = vunpack.c.h.b16 %v45
  %v124 = vunpack.c.l.b16 %v46
  %v125 = vunpack.c.l.b16 %v47
  %v126 = vunpack.c.h.b16 %v47
  %v127 = vunpack.c.l.b16 %v48
  %v128 = vunpack.c.l.b16 %v49
  %v129 = vunpack.c.h.b16 %v49
  %v130 = vunpack.c.l.b16 %v50
  %v131 = vunpack.c.l.b16 %v51
  %v132 = vunpack.c.h.b16 %v51
  %v133 = vunpack.c.l.b16 %v52
  %v134 = vunpack.c.l.b16 %v53
  %v135 = vunpack.c.h.b16 %v53
  %v136 = vunpack.c.l.b16 %v54
  %v137 = vunpack.c.l.b16 %v55
  %v138 = vunpack.c.h.b16 %v55
  %v139 = vunpack.c.l.b16 %v56
  %v140 = vunpack.c.l.b16 %v57
  %v141 = vunpack.c.h.b16 %v57
  %v142 = vunpack.c.l.b16 %v58
  %v143 = vunpack.c.l.b16 %v59
  %v144 = vunpack.c.h.b16 %v59
  %v145 = vunpack.c.l.b16 %v60
  %v146 = vunpack.c.l.b16 %v61
  %v147 = vunpack.c.h.b16 %v61
  %v148 = vunpack.c.l.b16 %v62
  %v149 = vunpack.c.l.b16 %v63
  %v150 = vunpack.c.h.b16 %v63
  %v151 = vunpack.c.l.b16 %v64
  %v152 = vunpack.c.l.b16 %v65
  %v153 = vunpack.c.h.b16 %v65
  %v154 = vunpack.c.l.b16 %v66
  %v155 = vpack.c.b16 %v110, %v107
  %v156 = vpack.c.b16 %v111, %v108
  %v157 = vpack.c.b16 %v112, %v109
  %v158 = vpack.c.b16 %v116, %v113
  %v159 = vpack.c.b16 %v117, %v114
  %v160 = vpack.c.b16 %v118, %v115
  %v161 = vpack.c.b16 %v122, %v119
  %v162 = vpack.c.b16 %v123, %v120
  %v163 = vpack.c.b16 %v124, %v121
  %v164 = vpack.c.b16 %v128, %v125
  %v165 = vpack.c.b16 %v129, %v126
  %v166 = vpack.c.b16 %v130, %v127
  %v167 = vpack.c.b16 %v134, %v131
  %v168 = vpack.c.b16 %v135, %v132
  %v169 = vpack.c.b16 %v136, %v133
  %v170 = vpack.c.b16 %v140, %v137
  %v171 = vpack.c.b16 %v141, %v138
  %v172 = vpack.c.b16 %v142, %v139
  %v173 = vpack.c.b16 %v146, %v143
  %v174 = vpack.c.b16 %v147, %v144
  %v175 = vpack.c.b16 %v148, %v145
  %v176 = vpack.c.b16 %v152, %v149
  %v177 = vpack.c.b16 %v153, %v150
  %v178 = vpack.c.b16 %v154, %v151
  %203 = vmatpush.bf16.msra.mxu0 %v176
  %204 = vmatpush.bf16.msra.mxu0 %v173
  %205 = vmatpush.bf16.msra.mxu0 %v170
  %206 = vmatpush.bf16.msra.mxu0 %v167
  %207 = vmatpush.bf16.msra.mxu0 %v164
  %208 = vmatpush.bf16.msra.mxu0 %v161
  %209 = vmatpush.bf16.msra.mxu0 %v158
  %210 = vmatpush.bf16.msra.mxu0 %v155
  %211 = vmatmul.bf16.gmra.mxu0 %v31
  %v212 = vpop.f32.mrf.mxu0
  %v213 = vadd.f32 %v69, %v212
  %v214 = vpop.f32.mrf.mxu0
  %v215 = vadd.f32 %v69, %v214
  %216 = vmatmul.bf16.gmra.mxu0 %v32
  %v217 = vpop.f32.mrf.mxu0
  %v218 = vadd.f32 %v69, %v217
  %v219 = vpop.f32.mrf.mxu0
  %v220 = vadd.f32 %v69, %v219
  %221 = vmatmul.bf16.gmra.mxu0 %v33
  %v222 = vpop.f32.mrf.mxu0
  %v223 = vadd.f32 %v69, %v222
  %v224 = vpop.f32.mrf.mxu0
  %v225 = vadd.f32 %v69, %v224
  %226 = vmatmul.bf16.gmra.mxu0 %v34
  %v227 = vpop.f32.mrf.mxu0
  %v228 = vadd.f32 %v69, %v227
  %v229 = vpop.f32.mrf.mxu0
  %v230 = vadd.f32 %v69, %v229
  %231 = vdwg.mxu0
  %232 = vmatpush.bf16.msra.mxu0 %v177
  %233 = vmatpush.bf16.msra.mxu0 %v174
  %234 = vmatpush.bf16.msra.mxu0 %v171
  %235 = vmatpush.bf16.msra.mxu0 %v168
  %236 = vmatpush.bf16.msra.mxu0 %v165
  %237 = vmatpush.bf16.msra.mxu0 %v162
  %238 = vmatpush.bf16.msra.mxu0 %v159
  %239 = vmatpush.bf16.msra.mxu0 %v156
  %240 = vmatmul.bf16.gmra.mxu0 %v31
  %v241 = vpop.f32.mrf.mxu0
  %v242 = vadd.f32 %v70, %v241
  %v243 = vpop.f32.mrf.mxu0
  %v244 = vadd.f32 %v70, %v243
  %245 = vmatmul.bf16.gmra.mxu0 %v32
  %v246 = vpop.f32.mrf.mxu0
  %v247 = vadd.f32 %v70, %v246
  %v248 = vpop.f32.mrf.mxu0
  %v249 = vadd.f32 %v70, %v248
  %250 = vmatmul.bf16.gmra.mxu0 %v33
  %v251 = vpop.f32.mrf.mxu0
  %v252 = vadd.f32 %v70, %v251
  %v253 = vpop.f32.mrf.mxu0
  %v254 = vadd.f32 %v70, %v253
  %255 = vmatmul.bf16.gmra.mxu0 %v34
  %v256 = vpop.f32.mrf.mxu0
  %v257 = vadd.f32 %v70, %v256
  %v258 = vpop.f32.mrf.mxu0
  %v259 = vadd.f32 %v70, %v258
  %260 = vdwg.mxu0
  %261 = vmatpush.bf16.msra.mxu0 %v178
  %262 = vmatpush.bf16.msra.mxu0 %v175
  %263 = vmatpush.bf16.msra.mxu0 %v172
  %264 = vmatpush.bf16.msra.mxu0 %v169
  %265 = vmatpush.bf16.msra.mxu0 %v166
  %266 = vmatpush.bf16.msra.mxu0 %v163
  %267 = vmatpush.bf16.msra.mxu0 %v160
  %268 = vmatpush.bf16.msra.mxu0 %v157
  %269 = vmatmul.bf16.gmra.mxu0 %v31
  %v270 = vpop.f32.mrf.mxu0
  %v271 = vadd.f32 %v71, %v270
  %v272 = vpop.f32.mrf.mxu0
  %v273 = vadd.f32 %v71, %v272
  %274 = vmatmul.bf16.gmra.mxu0 %v32
  %v275 = vpop.f32.mrf.mxu0
  %v276 = vadd.f32 %v71, %v275
  %v277 = vpop.f32.mrf.mxu0
  %v278 = vadd.f32 %v71, %v277
  %279 = vmatmul.bf16.gmra.mxu0 %v33
  %v280 = vpop.f32.mrf.mxu0
  %v281 = vadd.f32 %v71, %v280
  %v282 = vpop.f32.mrf.mxu0
  %v283 = vadd.f32 %v71, %v282
  %284 = vmatmul.bf16.gmra.mxu0 %v34
  %v285 = vpop.f32.mrf.mxu0
  %v286 = vadd.f32 %v71, %v285
  %v287 = vpop.f32.mrf.mxu0
  %v288 = vadd.f32 %v71, %v287
  %289 = vdwg.mxu0
  %v290 = vpack.c.bf16 %v242, %v213
  %v291 = vpack.c.bf16 %v271, %v271
  %v292 = vpack.c.bf16 %v244, %v215
  %v293 = vpack.c.bf16 %v273, %v273
  %v294 = vpack.c.bf16 %v247, %v218
  %v295 = vpack.c.bf16 %v276, %v276
  %v296 = vpack.c.bf16 %v249, %v220
  %v297 = vpack.c.bf16 %v278, %v278
  %v298 = vpack.c.bf16 %v252, %v223
  %v299 = vpack.c.bf16 %v281, %v281
  %v300 = vpack.c.bf16 %v254, %v225
  %v301 = vpack.c.bf16 %v283, %v283
  %v302 = vpack.c.bf16 %v257, %v228
  %v303 = vpack.c.bf16 %v286, %v286
  %v304 = vpack.c.bf16 %v259, %v230
  %v305 = vpack.c.bf16 %v288, %v288
  %314 = vrot.lane.b32.xlu0 %v290, 112
  %v315 = vpop.permute.xlu0 %314
  %316 = vrot.lane.b32.xlu0 %v292, 112
  %v317 = vpop.permute.xlu0 %316
  %318 = vrot.lane.b32.xlu0 %v294, 112
  %v319 = vpop.permute.xlu0 %318
  %320 = vrot.lane.b32.xlu0 %v296, 112
  %v321 = vpop.permute.xlu0 %320
  %322 = vrot.lane.b32.xlu0 %v298, 112
  %v323 = vpop.permute.xlu0 %322
  %324 = vrot.lane.b32.xlu0 %v300, 112
  %v325 = vpop.permute.xlu0 %324
  %326 = vrot.lane.b32.xlu0 %v302, 112
  %v327 = vpop.permute.xlu0 %326
  %328 = vrot.lane.b32.xlu0 %v304, 112
  %v329 = vpop.permute.xlu0 %328
  %330 = vrot.lane.b32.xlu0 %v290, 96
  %v331 = vpop.permute.xlu0 %330
  %332 = vrot.lane.b32.xlu0 %v292, 96
  %v333 = vpop.permute.xlu0 %332
  %334 = vrot.lane.b32.xlu0 %v294, 96
  %v335 = vpop.permute.xlu0 %334
  %336 = vrot.lane.b32.xlu0 %v296, 96
  %v337 = vpop.permute.xlu0 %336
  %338 = vrot.lane.b32.xlu0 %v298, 96
  %v339 = vpop.permute.xlu0 %338
  %340 = vrot.lane.b32.xlu0 %v300, 96
  %v341 = vpop.permute.xlu0 %340
  %342 = vrot.lane.b32.xlu0 %v302, 96
  %v343 = vpop.permute.xlu0 %342
  %344 = vrot.lane.b32.xlu0 %v304, 96
  %v345 = vpop.permute.xlu0 %344
  %346 = vrot.lane.b32.xlu0 %v290, 80
  %v347 = vpop.permute.xlu0 %346
  %348 = vrot.lane.b32.xlu0 %v292, 80
  %v349 = vpop.permute.xlu0 %348
  %350 = vrot.lane.b32.xlu0 %v294, 80
  %v351 = vpop.permute.xlu0 %350
  %352 = vrot.lane.b32.xlu0 %v296, 80
  %v353 = vpop.permute.xlu0 %352
  %354 = vrot.lane.b32.xlu0 %v298, 80
  %v355 = vpop.permute.xlu0 %354
  %356 = vrot.lane.b32.xlu0 %v300, 80
  %v357 = vpop.permute.xlu0 %356
  %358 = vrot.lane.b32.xlu0 %v302, 80
  %v359 = vpop.permute.xlu0 %358
  %360 = vrot.lane.b32.xlu0 %v304, 80
  %v361 = vpop.permute.xlu0 %360
  %362 = vrot.lane.b32.xlu0 %v290, 64
  %v363 = vpop.permute.xlu0 %362
  %364 = vrot.lane.b32.xlu0 %v292, 64
  %v365 = vpop.permute.xlu0 %364
  %366 = vrot.lane.b32.xlu0 %v294, 64
  %v367 = vpop.permute.xlu0 %366
  %368 = vrot.lane.b32.xlu0 %v296, 64
  %v369 = vpop.permute.xlu0 %368
  %370 = vrot.lane.b32.xlu0 %v298, 64
  %v371 = vpop.permute.xlu0 %370
  %372 = vrot.lane.b32.xlu0 %v300, 64
  %v373 = vpop.permute.xlu0 %372
  %374 = vrot.lane.b32.xlu0 %v302, 64
  %v375 = vpop.permute.xlu0 %374
  %376 = vrot.lane.b32.xlu0 %v304, 64
  %v377 = vpop.permute.xlu0 %376
  %378 = vrot.lane.b32.xlu0 %v290, 48
  %v379 = vpop.permute.xlu0 %378
  %380 = vrot.lane.b32.xlu0 %v292, 48
  %v381 = vpop.permute.xlu0 %380
  %382 = vrot.lane.b32.xlu0 %v294, 48
  %v383 = vpop.permute.xlu0 %382
  %384 = vrot.lane.b32.xlu0 %v296, 48
  %v385 = vpop.permute.xlu0 %384
  %386 = vrot.lane.b32.xlu0 %v298, 48
  %v387 = vpop.permute.xlu0 %386
  %388 = vrot.lane.b32.xlu0 %v300, 48
  %v389 = vpop.permute.xlu0 %388
  %390 = vrot.lane.b32.xlu0 %v302, 48
  %v391 = vpop.permute.xlu0 %390
  %392 = vrot.lane.b32.xlu0 %v304, 48
  %v393 = vpop.permute.xlu0 %392
  %394 = vrot.lane.b32.xlu0 %v290, 32
  %v395 = vpop.permute.xlu0 %394
  %396 = vrot.lane.b32.xlu0 %v292, 32
  %v397 = vpop.permute.xlu0 %396
  %398 = vrot.lane.b32.xlu0 %v294, 32
  %v399 = vpop.permute.xlu0 %398
  %400 = vrot.lane.b32.xlu0 %v296, 32
  %v401 = vpop.permute.xlu0 %400
  %402 = vrot.lane.b32.xlu0 %v298, 32
  %v403 = vpop.permute.xlu0 %402
  %404 = vrot.lane.b32.xlu0 %v300, 32
  %v405 = vpop.permute.xlu0 %404
  %406 = vrot.lane.b32.xlu0 %v302, 32
  %v407 = vpop.permute.xlu0 %406
  %408 = vrot.lane.b32.xlu0 %v304, 32
  %v409 = vpop.permute.xlu0 %408
  %410 = vrot.lane.b32.xlu0 %v290, 16
  %v411 = vpop.permute.xlu0 %410
  %412 = vrot.lane.b32.xlu0 %v292, 16
  %v413 = vpop.permute.xlu0 %412
  %414 = vrot.lane.b32.xlu0 %v294, 16
  %v415 = vpop.permute.xlu0 %414
  %416 = vrot.lane.b32.xlu0 %v296, 16
  %v417 = vpop.permute.xlu0 %416
  %418 = vrot.lane.b32.xlu0 %v298, 16
  %v419 = vpop.permute.xlu0 %418
  %420 = vrot.lane.b32.xlu0 %v300, 16
  %v421 = vpop.permute.xlu0 %420
  %422 = vrot.lane.b32.xlu0 %v302, 16
  %v423 = vpop.permute.xlu0 %422
  %424 = vrot.lane.b32.xlu0 %v304, 16
  %v425 = vpop.permute.xlu0 %424
  %v426 = vrot.slane %v290, 4
  %v427 = vrot.slane %v292, 4
  %v428 = vrot.slane %v294, 4
  %v429 = vrot.slane %v296, 4
  %v430 = vrot.slane %v298, 4
  %v431 = vrot.slane %v300, 4
  %v432 = vrot.slane %v302, 4
  %v433 = vrot.slane %v304, 4
  %v434 = vrot.slane %v315, 4
  %v435 = vrot.slane %v317, 4
  %v436 = vrot.slane %v319, 4
  %v437 = vrot.slane %v321, 4
  %v438 = vrot.slane %v323, 4
  %v439 = vrot.slane %v325, 4
  %v440 = vrot.slane %v327, 4
  %v441 = vrot.slane %v329, 4
  %v442 = vrot.slane %v331, 4
  %v443 = vrot.slane %v333, 4
  %v444 = vrot.slane %v335, 4
  %v445 = vrot.slane %v337, 4
  %v446 = vrot.slane %v339, 4
  %v447 = vrot.slane %v341, 4
  %v448 = vrot.slane %v343, 4
  %v449 = vrot.slane %v345, 4
  %v450 = vrot.slane %v347, 4
  %v451 = vrot.slane %v349, 4
  %v452 = vrot.slane %v351, 4
  %v453 = vrot.slane %v353, 4
  %v454 = vrot.slane %v355, 4
  %v455 = vrot.slane %v357, 4
  %v456 = vrot.slane %v359, 4
  %v457 = vrot.slane %v361, 4
  %v458 = vrot.slane %v363, 4
  %v459 = vrot.slane %v365, 4
  %v460 = vrot.slane %v367, 4
  %v461 = vrot.slane %v369, 4
  %v462 = vrot.slane %v371, 4
  %v463 = vrot.slane %v373, 4
  %v464 = vrot.slane %v375, 4
  %v465 = vrot.slane %v377, 4
  %v466 = vrot.slane %v379, 4
  %v467 = vrot.slane %v381, 4
  %v468 = vrot.slane %v383, 4
  %v469 = vrot.slane %v385, 4
  %v470 = vrot.slane %v387, 4
  %v471 = vrot.slane %v389, 4
  %v472 = vrot.slane %v391, 4
  %v473 = vrot.slane %v393, 4
  %v474 = vrot.slane %v395, 4
  %v475 = vrot.slane %v397, 4
  %v476 = vrot.slane %v399, 4
  %v477 = vrot.slane %v401, 4
  %v478 = vrot.slane %v403, 4
  %v479 = vrot.slane %v405, 4
  %v480 = vrot.slane %v407, 4
  %v481 = vrot.slane %v409, 4
  %v482 = vrot.slane %v411, 4
  %v483 = vrot.slane %v413, 4
  %v484 = vrot.slane %v415, 4
  %v485 = vrot.slane %v417, 4
  %v486 = vrot.slane %v419, 4
  %v487 = vrot.slane %v421, 4
  %v488 = vrot.slane %v423, 4
  %v489 = vrot.slane %v425, 4
  %498 = vrot.lane.b32.xlu0 %v291, 112
  %v499 = vpop.permute.xlu0 %498
  %500 = vrot.lane.b32.xlu0 %v293, 112
  %v501 = vpop.permute.xlu0 %500
  %502 = vrot.lane.b32.xlu0 %v295, 112
  %v503 = vpop.permute.xlu0 %502
  %504 = vrot.lane.b32.xlu0 %v297, 112
  %v505 = vpop.permute.xlu0 %504
  %506 = vrot.lane.b32.xlu0 %v299, 112
  %v507 = vpop.permute.xlu0 %506
  %508 = vrot.lane.b32.xlu0 %v301, 112
  %v509 = vpop.permute.xlu0 %508
  %510 = vrot.lane.b32.xlu0 %v303, 112
  %v511 = vpop.permute.xlu0 %510
  %512 = vrot.lane.b32.xlu0 %v305, 112
  %v513 = vpop.permute.xlu0 %512
  %514 = vrot.lane.b32.xlu0 %v291, 96
  %v515 = vpop.permute.xlu0 %514
  %516 = vrot.lane.b32.xlu0 %v293, 96
  %v517 = vpop.permute.xlu0 %516
  %518 = vrot.lane.b32.xlu0 %v295, 96
  %v519 = vpop.permute.xlu0 %518
  %520 = vrot.lane.b32.xlu0 %v297, 96
  %v521 = vpop.permute.xlu0 %520
  %522 = vrot.lane.b32.xlu0 %v299, 96
  %v523 = vpop.permute.xlu0 %522
  %524 = vrot.lane.b32.xlu0 %v301, 96
  %v525 = vpop.permute.xlu0 %524
  %526 = vrot.lane.b32.xlu0 %v303, 96
  %v527 = vpop.permute.xlu0 %526
  %528 = vrot.lane.b32.xlu0 %v305, 96
  %v529 = vpop.permute.xlu0 %528
  %530 = vrot.lane.b32.xlu0 %v291, 80
  %v531 = vpop.permute.xlu0 %530
  %532 = vrot.lane.b32.xlu0 %v293, 80
  %v533 = vpop.permute.xlu0 %532
  %534 = vrot.lane.b32.xlu0 %v295, 80
  %v535 = vpop.permute.xlu0 %534
  %536 = vrot.lane.b32.xlu0 %v297, 80
  %v537 = vpop.permute.xlu0 %536
  %538 = vrot.lane.b32.xlu0 %v299, 80
  %v539 = vpop.permute.xlu0 %538
  %540 = vrot.lane.b32.xlu0 %v301, 80
  %v541 = vpop.permute.xlu0 %540
  %542 = vrot.lane.b32.xlu0 %v303, 80
  %v543 = vpop.permute.xlu0 %542
  %544 = vrot.lane.b32.xlu0 %v305, 80
  %v545 = vpop.permute.xlu0 %544
  %546 = vrot.lane.b32.xlu0 %v291, 64
  %v547 = vpop.permute.xlu0 %546
  %548 = vrot.lane.b32.xlu0 %v293, 64
  %v549 = vpop.permute.xlu0 %548
  %550 = vrot.lane.b32.xlu0 %v295, 64
  %v551 = vpop.permute.xlu0 %550
  %552 = vrot.lane.b32.xlu0 %v297, 64
  %v553 = vpop.permute.xlu0 %552
  %554 = vrot.lane.b32.xlu0 %v299, 64
  %v555 = vpop.permute.xlu0 %554
  %556 = vrot.lane.b32.xlu0 %v301, 64
  %v557 = vpop.permute.xlu0 %556
  %558 = vrot.lane.b32.xlu0 %v303, 64
  %v559 = vpop.permute.xlu0 %558
  %560 = vrot.lane.b32.xlu0 %v305, 64
  %v561 = vpop.permute.xlu0 %560
  %562 = vrot.lane.b32.xlu0 %v291, 48
  %v563 = vpop.permute.xlu0 %562
  %564 = vrot.lane.b32.xlu0 %v293, 48
  %v565 = vpop.permute.xlu0 %564
  %566 = vrot.lane.b32.xlu0 %v295, 48
  %v567 = vpop.permute.xlu0 %566
  %568 = vrot.lane.b32.xlu0 %v297, 48
  %v569 = vpop.permute.xlu0 %568
  %570 = vrot.lane.b32.xlu0 %v299, 48
  %v571 = vpop.permute.xlu0 %570
  %572 = vrot.lane.b32.xlu0 %v301, 48
  %v573 = vpop.permute.xlu0 %572
  %574 = vrot.lane.b32.xlu0 %v303, 48
  %v575 = vpop.permute.xlu0 %574
  %576 = vrot.lane.b32.xlu0 %v305, 48
  %v577 = vpop.permute.xlu0 %576
  %578 = vrot.lane.b32.xlu0 %v291, 32
  %v579 = vpop.permute.xlu0 %578
  %580 = vrot.lane.b32.xlu0 %v293, 32
  %v581 = vpop.permute.xlu0 %580
  %582 = vrot.lane.b32.xlu0 %v295, 32
  %v583 = vpop.permute.xlu0 %582
  %584 = vrot.lane.b32.xlu0 %v297, 32
  %v585 = vpop.permute.xlu0 %584
  %586 = vrot.lane.b32.xlu0 %v299, 32
  %v587 = vpop.permute.xlu0 %586
  %588 = vrot.lane.b32.xlu0 %v301, 32
  %v589 = vpop.permute.xlu0 %588
  %590 = vrot.lane.b32.xlu0 %v303, 32
  %v591 = vpop.permute.xlu0 %590
  %592 = vrot.lane.b32.xlu0 %v305, 32
  %v593 = vpop.permute.xlu0 %592
  %594 = vrot.lane.b32.xlu0 %v291, 16
  %v595 = vpop.permute.xlu0 %594
  %596 = vrot.lane.b32.xlu0 %v293, 16
  %v597 = vpop.permute.xlu0 %596
  %598 = vrot.lane.b32.xlu0 %v295, 16
  %v599 = vpop.permute.xlu0 %598
  %600 = vrot.lane.b32.xlu0 %v297, 16
  %v601 = vpop.permute.xlu0 %600
  %602 = vrot.lane.b32.xlu0 %v299, 16
  %v603 = vpop.permute.xlu0 %602
  %604 = vrot.lane.b32.xlu0 %v301, 16
  %v605 = vpop.permute.xlu0 %604
  %606 = vrot.lane.b32.xlu0 %v303, 16
  %v607 = vpop.permute.xlu0 %606
  %608 = vrot.lane.b32.xlu0 %v305, 16
  %v609 = vpop.permute.xlu0 %608
  %v610 = vunpack.c.l.b16 %v290
  %v611 = vunpack.c.l.b16 %v292
  %v612 = vpack.c.b16 %v611, %v610
  %v613 = vunpack.c.l.b16 %v426
  %v614 = vunpack.c.l.b16 %v427
  %v615 = vpack.c.b16 %v614, %v613
  %vm616 = vcmask 130048
  %v618 = vsel %vm616, %v612, 0
  %v621 = vsel %vm616, %v615, 0
  %623 = vmatpush.bf16.xpose.msra.mxu0 0
  %624 = vmatpush.bf16.xpose.msra.mxu0 0
  %625 = vmatpush.bf16.xpose.msra.mxu0 0
  %626 = vmatpush.bf16.xpose.msra.mxu0 0
  %627 = vmatpush.bf16.xpose.msra.mxu0 0
  %628 = vmatpush.bf16.xpose.msra.mxu0 0
  %629 = vmatpush.bf16.xpose.msra.mxu0 0
  %630 = vmatpush.bf16.xpose.msra.mxu0 %v621
  %631 = vmatmul.bf16.gmra.mxu0 %v618
  %v632 = vpop.f32.mrf.mxu0
  %v633 = vadd.f32 0.0, %v632
  %v634 = vpop.f32.mrf.mxu0
  %v635 = vadd.f32 0.0, %v634
  %636 = vdwg.mxu0
  %v637 = vunpack.c.l.b16 %v294
  %v638 = vunpack.c.l.b16 %v296
  %v639 = vpack.c.b16 %v638, %v637
  %v640 = vunpack.c.l.b16 %v428
  %v641 = vunpack.c.l.b16 %v429
  %v642 = vpack.c.b16 %v641, %v640
  %v644 = vsel %vm616, %v639, 0
  %v647 = vsel %vm616, %v642, 0
  %649 = vmatpush.bf16.xpose.msra.mxu0 0
  %650 = vmatpush.bf16.xpose.msra.mxu0 0
  %651 = vmatpush.bf16.xpose.msra.mxu0 0
  %652 = vmatpush.bf16.xpose.msra.mxu0 0
  %653 = vmatpush.bf16.xpose.msra.mxu0 0
  %654 = vmatpush.bf16.xpose.msra.mxu0 0
  %655 = vmatpush.bf16.xpose.msra.mxu0 0
  %656 = vmatpush.bf16.xpose.msra.mxu0 %v647
  %657 = vmatmul.bf16.gmra.mxu0 %v644
  %v658 = vpop.f32.mrf.mxu0
  %v659 = vadd.f32 0.0, %v658
  %v660 = vpop.f32.mrf.mxu0
  %v661 = vadd.f32 0.0, %v660
  %662 = vdwg.mxu0
  %v663 = vunpack.c.l.b16 %v298
  %v664 = vunpack.c.l.b16 %v300
  %v665 = vpack.c.b16 %v664, %v663
  %v666 = vunpack.c.l.b16 %v430
  %v667 = vunpack.c.l.b16 %v431
  %v668 = vpack.c.b16 %v667, %v666
  %v670 = vsel %vm616, %v665, 0
  %v673 = vsel %vm616, %v668, 0
  %675 = vmatpush.bf16.xpose.msra.mxu0 0
  %676 = vmatpush.bf16.xpose.msra.mxu0 0
  %677 = vmatpush.bf16.xpose.msra.mxu0 0
  %678 = vmatpush.bf16.xpose.msra.mxu0 0
  %679 = vmatpush.bf16.xpose.msra.mxu0 0
  %680 = vmatpush.bf16.xpose.msra.mxu0 0
  %681 = vmatpush.bf16.xpose.msra.mxu0 0
  %682 = vmatpush.bf16.xpose.msra.mxu0 %v673
  %683 = vmatmul.bf16.gmra.mxu0 %v670
  %v684 = vpop.f32.mrf.mxu0
  %v685 = vadd.f32 0.0, %v684
  %v686 = vpop.f32.mrf.mxu0
  %v687 = vadd.f32 0.0, %v686
  %688 = vdwg.mxu0
  %v689 = vunpack.c.l.b16 %v302
  %v690 = vunpack.c.l.b16 %v304
  %v691 = vpack.c.b16 %v690, %v689
  %v692 = vunpack.c.l.b16 %v432
  %v693 = vunpack.c.l.b16 %v433
  %v694 = vpack.c.b16 %v693, %v692
  %v696 = vsel %vm616, %v691, 0
  %v699 = vsel %vm616, %v694, 0
  %701 = vmatpush.bf16.xpose.msra.mxu0 0
  %702 = vmatpush.bf16.xpose.msra.mxu0 0
  %703 = vmatpush.bf16.xpose.msra.mxu0 0
  %704 = vmatpush.bf16.xpose.msra.mxu0 0
  %705 = vmatpush.bf16.xpose.msra.mxu0 0
  %706 = vmatpush.bf16.xpose.msra.mxu0 0
  %707 = vmatpush.bf16.xpose.msra.mxu0 0
  %708 = vmatpush.bf16.xpose.msra.mxu0 %v699
  %709 = vmatmul.bf16.gmra.mxu0 %v696
  %v710 = vpop.f32.mrf.mxu0
  %v711 = vadd.f32 0.0, %v710
  %v712 = vpop.f32.mrf.mxu0
  %v713 = vadd.f32 0.0, %v712
  %714 = vdwg.mxu0
  %v715 = vunpack.c.l.b16 %v315
  %v716 = vunpack.c.l.b16 %v317
  %v717 = vpack.c.b16 %v716, %v715
  %v718 = vunpack.c.l.b16 %v434
  %v719 = vunpack.c.l.b16 %v435
  %v720 = vpack.c.b16 %v719, %v718
  %v722 = vsel %vm616, %v717, 0
  %v725 = vsel %vm616, %v720, 0
  %727 = vmatpush.bf16.xpose.msra.mxu0 0
  %728 = vmatpush.bf16.xpose.msra.mxu0 0
  %729 = vmatpush.bf16.xpose.msra.mxu0 0
  %730 = vmatpush.bf16.xpose.msra.mxu0 0
  %731 = vmatpush.bf16.xpose.msra.mxu0 0
  %732 = vmatpush.bf16.xpose.msra.mxu0 0
  %733 = vmatpush.bf16.xpose.msra.mxu0 0
  %734 = vmatpush.bf16.xpose.msra.mxu0 %v725
  %735 = vmatmul.bf16.gmra.mxu0 %v722
  %v736 = vpop.f32.mrf.mxu0
  %v737 = vadd.f32 0.0, %v736
  %v738 = vpop.f32.mrf.mxu0
  %v739 = vadd.f32 0.0, %v738
  %740 = vdwg.mxu0
  %v741 = vunpack.c.l.b16 %v319
  %v742 = vunpack.c.l.b16 %v321
  %v743 = vpack.c.b16 %v742, %v741
  %v744 = vunpack.c.l.b16 %v436
  %v745 = vunpack.c.l.b16 %v437
  %v746 = vpack.c.b16 %v745, %v744
  %v748 = vsel %vm616, %v743, 0
  %v751 = vsel %vm616, %v746, 0
  %753 = vmatpush.bf16.xpose.msra.mxu0 0
  %754 = vmatpush.bf16.xpose.msra.mxu0 0
  %755 = vmatpush.bf16.xpose.msra.mxu0 0
  %756 = vmatpush.bf16.xpose.msra.mxu0 0
  %757 = vmatpush.bf16.xpose.msra.mxu0 0
  %758 = vmatpush.bf16.xpose.msra.mxu0 0
  %759 = vmatpush.bf16.xpose.msra.mxu0 0
  %760 = vmatpush.bf16.xpose.msra.mxu0 %v751
  %761 = vmatmul.bf16.gmra.mxu0 %v748
  %v762 = vpop.f32.mrf.mxu0
  %v763 = vadd.f32 0.0, %v762
  %v764 = vpop.f32.mrf.mxu0
  %v765 = vadd.f32 0.0, %v764
  %766 = vdwg.mxu0
  %v767 = vunpack.c.l.b16 %v323
  %v768 = vunpack.c.l.b16 %v325
  %v769 = vpack.c.b16 %v768, %v767
  %v770 = vunpack.c.l.b16 %v438
  %v771 = vunpack.c.l.b16 %v439
  %v772 = vpack.c.b16 %v771, %v770
  %v774 = vsel %vm616, %v769, 0
  %v777 = vsel %vm616, %v772, 0
  %779 = vmatpush.bf16.xpose.msra.mxu0 0
  %780 = vmatpush.bf16.xpose.msra.mxu0 0
  %781 = vmatpush.bf16.xpose.msra.mxu0 0
  %782 = vmatpush.bf16.xpose.msra.mxu0 0
  %783 = vmatpush.bf16.xpose.msra.mxu0 0
  %784 = vmatpush.bf16.xpose.msra.mxu0 0
  %785 = vmatpush.bf16.xpose.msra.mxu0 0
  %786 = vmatpush.bf16.xpose.msra.mxu0 %v777
  %787 = vmatmul.bf16.gmra.mxu0 %v774
  %v788 = vpop.f32.mrf.mxu0
  %v789 = vadd.f32 0.0, %v788
  %v790 = vpop.f32.mrf.mxu0
  %v791 = vadd.f32 0.0, %v790
  %792 = vdwg.mxu0
  %v793 = vunpack.c.l.b16 %v327
  %v794 = vunpack.c.l.b16 %v329
  %v795 = vpack.c.b16 %v794, %v793
  %v796 = vunpack.c.l.b16 %v440
  %v797 = vunpack.c.l.b16 %v441
  %v798 = vpack.c.b16 %v797, %v796
  %v800 = vsel %vm616, %v795, 0
  %v803 = vsel %vm616, %v798, 0
  %805 = vmatpush.bf16.xpose.msra.mxu0 0
  %806 = vmatpush.bf16.xpose.msra.mxu0 0
  %807 = vmatpush.bf16.xpose.msra.mxu0 0
  %808 = vmatpush.bf16.xpose.msra.mxu0 0
  %809 = vmatpush.bf16.xpose.msra.mxu0 0
  %810 = vmatpush.bf16.xpose.msra.mxu0 0
  %811 = vmatpush.bf16.xpose.msra.mxu0 0
  %812 = vmatpush.bf16.xpose.msra.mxu0 %v803
  %813 = vmatmul.bf16.gmra.mxu0 %v800
  %v814 = vpop.f32.mrf.mxu0
  %v815 = vadd.f32 0.0, %v814
  %v816 = vpop.f32.mrf.mxu0
  %v817 = vadd.f32 0.0, %v816
  %818 = vdwg.mxu0
  %v819 = vunpack.c.l.b16 %v331
  %v820 = vunpack.c.l.b16 %v333
  %v821 = vpack.c.b16 %v820, %v819
  %v822 = vunpack.c.l.b16 %v442
  %v823 = vunpack.c.l.b16 %v443
  %v824 = vpack.c.b16 %v823, %v822
  %v826 = vsel %vm616, %v821, 0
  %v829 = vsel %vm616, %v824, 0
  %831 = vmatpush.bf16.xpose.msra.mxu0 0
  %832 = vmatpush.bf16.xpose.msra.mxu0 0
  %833 = vmatpush.bf16.xpose.msra.mxu0 0
  %834 = vmatpush.bf16.xpose.msra.mxu0 0
  %835 = vmatpush.bf16.xpose.msra.mxu0 0
  %836 = vmatpush.bf16.xpose.msra.mxu0 0
  %837 = vmatpush.bf16.xpose.msra.mxu0 0
  %838 = vmatpush.bf16.xpose.msra.mxu0 %v829
  %839 = vmatmul.bf16.gmra.mxu0 %v826
  %v840 = vpop.f32.mrf.mxu0
  %v841 = vadd.f32 0.0, %v840
  %v842 = vpop.f32.mrf.mxu0
  %v843 = vadd.f32 0.0, %v842
  %844 = vdwg.mxu0
  %v845 = vunpack.c.l.b16 %v335
  %v846 = vunpack.c.l.b16 %v337
  %v847 = vpack.c.b16 %v846, %v845
  %v848 = vunpack.c.l.b16 %v444
  %v849 = vunpack.c.l.b16 %v445
  %v850 = vpack.c.b16 %v849, %v848
  %v852 = vsel %vm616, %v847, 0
  %v855 = vsel %vm616, %v850, 0
  %857 = vmatpush.bf16.xpose.msra.mxu0 0
  %858 = vmatpush.bf16.xpose.msra.mxu0 0
  %859 = vmatpush.bf16.xpose.msra.mxu0 0
  %860 = vmatpush.bf16.xpose.msra.mxu0 0
  %861 = vmatpush.bf16.xpose.msra.mxu0 0
  %862 = vmatpush.bf16.xpose.msra.mxu0 0
  %863 = vmatpush.bf16.xpose.msra.mxu0 0
  %864 = vmatpush.bf16.xpose.msra.mxu0 %v855
  %865 = vmatmul.bf16.gmra.mxu0 %v852
  %v866 = vpop.f32.mrf.mxu0
  %v867 = vadd.f32 0.0, %v866
  %v868 = vpop.f32.mrf.mxu0
  %v869 = vadd.f32 0.0, %v868
  %870 = vdwg.mxu0
  %v871 = vunpack.c.l.b16 %v339
  %v872 = vunpack.c.l.b16 %v341
  %v873 = vpack.c.b16 %v872, %v871
  %v874 = vunpack.c.l.b16 %v446
  %v875 = vunpack.c.l.b16 %v447
  %v876 = vpack.c.b16 %v875, %v874
  %v878 = vsel %vm616, %v873, 0
  %v881 = vsel %vm616, %v876, 0
  %883 = vmatpush.bf16.xpose.msra.mxu0 0
  %884 = vmatpush.bf16.xpose.msra.mxu0 0
  %885 = vmatpush.bf16.xpose.msra.mxu0 0
  %886 = vmatpush.bf16.xpose.msra.mxu0 0
  %887 = vmatpush.bf16.xpose.msra.mxu0 0
  %888 = vmatpush.bf16.xpose.msra.mxu0 0
  %889 = vmatpush.bf16.xpose.msra.mxu0 0
  %890 = vmatpush.bf16.xpose.msra.mxu0 %v881
  %891 = vmatmul.bf16.gmra.mxu0 %v878
  %v892 = vpop.f32.mrf.mxu0
  %v893 = vadd.f32 0.0, %v892
  %v894 = vpop.f32.mrf.mxu0
  %v895 = vadd.f32 0.0, %v894
  %896 = vdwg.mxu0
  %v897 = vunpack.c.l.b16 %v343
  %v898 = vunpack.c.l.b16 %v345
  %v899 = vpack.c.b16 %v898, %v897
  %v900 = vunpack.c.l.b16 %v448
  %v901 = vunpack.c.l.b16 %v449
  %v902 = vpack.c.b16 %v901, %v900
  %v904 = vsel %vm616, %v899, 0
  %v907 = vsel %vm616, %v902, 0
  %909 = vmatpush.bf16.xpose.msra.mxu0 0
  %910 = vmatpush.bf16.xpose.msra.mxu0 0
  %911 = vmatpush.bf16.xpose.msra.mxu0 0
  %912 = vmatpush.bf16.xpose.msra.mxu0 0
  %913 = vmatpush.bf16.xpose.msra.mxu0 0
  %914 = vmatpush.bf16.xpose.msra.mxu0 0
  %915 = vmatpush.bf16.xpose.msra.mxu0 0
  %916 = vmatpush.bf16.xpose.msra.mxu0 %v907
  %917 = vmatmul.bf16.gmra.mxu0 %v904
  %v918 = vpop.f32.mrf.mxu0
  %v919 = vadd.f32 0.0, %v918
  %v920 = vpop.f32.mrf.mxu0
  %v921 = vadd.f32 0.0, %v920
  %922 = vdwg.mxu0
  %v923 = vunpack.c.l.b16 %v347
  %v924 = vunpack.c.l.b16 %v349
  %v925 = vpack.c.b16 %v924, %v923
  %v926 = vunpack.c.l.b16 %v450
  %v927 = vunpack.c.l.b16 %v451
  %v928 = vpack.c.b16 %v927, %v926
  %v930 = vsel %vm616, %v925, 0
  %v933 = vsel %vm616, %v928, 0
  %935 = vmatpush.bf16.xpose.msra.mxu0 0
  %936 = vmatpush.bf16.xpose.msra.mxu0 0
  %937 = vmatpush.bf16.xpose.msra.mxu0 0
  %938 = vmatpush.bf16.xpose.msra.mxu0 0
  %939 = vmatpush.bf16.xpose.msra.mxu0 0
  %940 = vmatpush.bf16.xpose.msra.mxu0 0
  %941 = vmatpush.bf16.xpose.msra.mxu0 0
  %942 = vmatpush.bf16.xpose.msra.mxu0 %v933
  %943 = vmatmul.bf16.gmra.mxu0 %v930
  %v944 = vpop.f32.mrf.mxu0
  %v945 = vadd.f32 0.0, %v944
  %v946 = vpop.f32.mrf.mxu0
  %v947 = vadd.f32 0.0, %v946
  %948 = vdwg.mxu0
  %v949 = vunpack.c.l.b16 %v351
  %v950 = vunpack.c.l.b16 %v353
  %v951 = vpack.c.b16 %v950, %v949
  %v952 = vunpack.c.l.b16 %v452
  %v953 = vunpack.c.l.b16 %v453
  %v954 = vpack.c.b16 %v953, %v952
  %v956 = vsel %vm616, %v951, 0
  %v959 = vsel %vm616, %v954, 0
  %961 = vmatpush.bf16.xpose.msra.mxu0 0
  %962 = vmatpush.bf16.xpose.msra.mxu0 0
  %963 = vmatpush.bf16.xpose.msra.mxu0 0
  %964 = vmatpush.bf16.xpose.msra.mxu0 0
  %965 = vmatpush.bf16.xpose.msra.mxu0 0
  %966 = vmatpush.bf16.xpose.msra.mxu0 0
  %967 = vmatpush.bf16.xpose.msra.mxu0 0
  %968 = vmatpush.bf16.xpose.msra.mxu0 %v959
  %969 = vmatmul.bf16.gmra.mxu0 %v956
  %v970 = vpop.f32.mrf.mxu0
  %v971 = vadd.f32 0.0, %v970
  %v972 = vpop.f32.mrf.mxu0
  %v973 = vadd.f32 0.0, %v972
  %974 = vdwg.mxu0
  %v975 = vunpack.c.l.b16 %v355
  %v976 = vunpack.c.l.b16 %v357
  %v977 = vpack.c.b16 %v976, %v975
  %v978 = vunpack.c.l.b16 %v454
  %v979 = vunpack.c.l.b16 %v455
  %v980 = vpack.c.b16 %v979, %v978
  %v982 = vsel %vm616, %v977, 0
  %v985 = vsel %vm616, %v980, 0
  %987 = vmatpush.bf16.xpose.msra.mxu0 0
  %988 = vmatpush.bf16.xpose.msra.mxu0 0
  %989 = vmatpush.bf16.xpose.msra.mxu0 0
  %990 = vmatpush.bf16.xpose.msra.mxu0 0
  %991 = vmatpush.bf16.xpose.msra.mxu0 0
  %992 = vmatpush.bf16.xpose.msra.mxu0 0
  %993 = vmatpush.bf16.xpose.msra.mxu0 0
  %994 = vmatpush.bf16.xpose.msra.mxu0 %v985
  %995 = vmatmul.bf16.gmra.mxu0 %v982
  %v996 = vpop.f32.mrf.mxu0
  %v997 = vadd.f32 0.0, %v996
  %v998 = vpop.f32.mrf.mxu0
  %v999 = vadd.f32 0.0, %v998
  %1000 = vdwg.mxu0
  %v1001 = vunpack.c.l.b16 %v359
  %v1002 = vunpack.c.l.b16 %v361
  %v1003 = vpack.c.b16 %v1002, %v1001
  %v1004 = vunpack.c.l.b16 %v456
  %v1005 = vunpack.c.l.b16 %v457
  %v1006 = vpack.c.b16 %v1005, %v1004
  %v1008 = vsel %vm616, %v1003, 0
  %v1011 = vsel %vm616, %v1006, 0
  %1013 = vmatpush.bf16.xpose.msra.mxu0 0
  %1014 = vmatpush.bf16.xpose.msra.mxu0 0
  %1015 = vmatpush.bf16.xpose.msra.mxu0 0
  %1016 = vmatpush.bf16.xpose.msra.mxu0 0
  %1017 = vmatpush.bf16.xpose.msra.mxu0 0
  %1018 = vmatpush.bf16.xpose.msra.mxu0 0
  %1019 = vmatpush.bf16.xpose.msra.mxu0 0
  %1020 = vmatpush.bf16.xpose.msra.mxu0 %v1011
  %1021 = vmatmul.bf16.gmra.mxu0 %v1008
  %v1022 = vpop.f32.mrf.mxu0
  %v1023 = vadd.f32 0.0, %v1022
  %v1024 = vpop.f32.mrf.mxu0
  %v1025 = vadd.f32 0.0, %v1024
  %1026 = vdwg.mxu0
  %v1027 = vunpack.c.l.b16 %v363
  %v1028 = vunpack.c.l.b16 %v365
  %v1029 = vpack.c.b16 %v1028, %v1027
  %v1030 = vunpack.c.l.b16 %v458
  %v1031 = vunpack.c.l.b16 %v459
  %v1032 = vpack.c.b16 %v1031, %v1030
  %v1034 = vsel %vm616, %v1029, 0
  %v1037 = vsel %vm616, %v1032, 0
  %1039 = vmatpush.bf16.xpose.msra.mxu0 0
  %1040 = vmatpush.bf16.xpose.msra.mxu0 0
  %1041 = vmatpush.bf16.xpose.msra.mxu0 0
  %1042 = vmatpush.bf16.xpose.msra.mxu0 0
  %1043 = vmatpush.bf16.xpose.msra.mxu0 0
  %1044 = vmatpush.bf16.xpose.msra.mxu0 0
  %1045 = vmatpush.bf16.xpose.msra.mxu0 0
  %1046 = vmatpush.bf16.xpose.msra.mxu0 %v1037
  %1047 = vmatmul.bf16.gmra.mxu0 %v1034
  %v1048 = vpop.f32.mrf.mxu0
  %v1049 = vadd.f32 0.0, %v1048
  %v1050 = vpop.f32.mrf.mxu0
  %v1051 = vadd.f32 0.0, %v1050
  %1052 = vdwg.mxu0
  %v1053 = vunpack.c.l.b16 %v367
  %v1054 = vunpack.c.l.b16 %v369
  %v1055 = vpack.c.b16 %v1054, %v1053
  %v1056 = vunpack.c.l.b16 %v460
  %v1057 = vunpack.c.l.b16 %v461
  %v1058 = vpack.c.b16 %v1057, %v1056
  %v1060 = vsel %vm616, %v1055, 0
  %v1063 = vsel %vm616, %v1058, 0
  %1065 = vmatpush.bf16.xpose.msra.mxu0 0
  %1066 = vmatpush.bf16.xpose.msra.mxu0 0
  %1067 = vmatpush.bf16.xpose.msra.mxu0 0
  %1068 = vmatpush.bf16.xpose.msra.mxu0 0
  %1069 = vmatpush.bf16.xpose.msra.mxu0 0
  %1070 = vmatpush.bf16.xpose.msra.mxu0 0
  %1071 = vmatpush.bf16.xpose.msra.mxu0 0
  %1072 = vmatpush.bf16.xpose.msra.mxu0 %v1063
  %1073 = vmatmul.bf16.gmra.mxu0 %v1060
  %v1074 = vpop.f32.mrf.mxu0
  %v1075 = vadd.f32 0.0, %v1074
  %v1076 = vpop.f32.mrf.mxu0
  %v1077 = vadd.f32 0.0, %v1076
  %1078 = vdwg.mxu0
  %v1079 = vunpack.c.l.b16 %v371
  %v1080 = vunpack.c.l.b16 %v373
  %v1081 = vpack.c.b16 %v1080, %v1079
  %v1082 = vunpack.c.l.b16 %v462
  %v1083 = vunpack.c.l.b16 %v463
  %v1084 = vpack.c.b16 %v1083, %v1082
  %v1086 = vsel %vm616, %v1081, 0
  %v1089 = vsel %vm616, %v1084, 0
  %1091 = vmatpush.bf16.xpose.msra.mxu0 0
  %1092 = vmatpush.bf16.xpose.msra.mxu0 0
  %1093 = vmatpush.bf16.xpose.msra.mxu0 0
  %1094 = vmatpush.bf16.xpose.msra.mxu0 0
  %1095 = vmatpush.bf16.xpose.msra.mxu0 0
  %1096 = vmatpush.bf16.xpose.msra.mxu0 0
  %1097 = vmatpush.bf16.xpose.msra.mxu0 0
  %1098 = vmatpush.bf16.xpose.msra.mxu0 %v1089
  %1099 = vmatmul.bf16.gmra.mxu0 %v1086
  %v1100 = vpop.f32.mrf.mxu0
  %v1101 = vadd.f32 0.0, %v1100
  %v1102 = vpop.f32.mrf.mxu0
  %v1103 = vadd.f32 0.0, %v1102
  %1104 = vdwg.mxu0
  %v1105 = vunpack.c.l.b16 %v375
  %v1106 = vunpack.c.l.b16 %v377
  %v1107 = vpack.c.b16 %v1106, %v1105
  %v1108 = vunpack.c.l.b16 %v464
  %v1109 = vunpack.c.l.b16 %v465
  %v1110 = vpack.c.b16 %v1109, %v1108
  %v1112 = vsel %vm616, %v1107, 0
  %v1115 = vsel %vm616, %v1110, 0
  %1117 = vmatpush.bf16.xpose.msra.mxu0 0
  %1118 = vmatpush.bf16.xpose.msra.mxu0 0
  %1119 = vmatpush.bf16.xpose.msra.mxu0 0
  %1120 = vmatpush.bf16.xpose.msra.mxu0 0
  %1121 = vmatpush.bf16.xpose.msra.mxu0 0
  %1122 = vmatpush.bf16.xpose.msra.mxu0 0
  %1123 = vmatpush.bf16.xpose.msra.mxu0 0
  %1124 = vmatpush.bf16.xpose.msra.mxu0 %v1115
  %1125 = vmatmul.bf16.gmra.mxu0 %v1112
  %v1126 = vpop.f32.mrf.mxu0
  %v1127 = vadd.f32 0.0, %v1126
  %v1128 = vpop.f32.mrf.mxu0
  %v1129 = vadd.f32 0.0, %v1128
  %1130 = vdwg.mxu0
  %v1131 = vunpack.c.l.b16 %v379
  %v1132 = vunpack.c.l.b16 %v381
  %v1133 = vpack.c.b16 %v1132, %v1131
  %v1134 = vunpack.c.l.b16 %v466
  %v1135 = vunpack.c.l.b16 %v467
  %v1136 = vpack.c.b16 %v1135, %v1134
  %v1138 = vsel %vm616, %v1133, 0
  %v1141 = vsel %vm616, %v1136, 0
  %1143 = vmatpush.bf16.xpose.msra.mxu0 0
  %1144 = vmatpush.bf16.xpose.msra.mxu0 0
  %1145 = vmatpush.bf16.xpose.msra.mxu0 0
  %1146 = vmatpush.bf16.xpose.msra.mxu0 0
  %1147 = vmatpush.bf16.xpose.msra.mxu0 0
  %1148 = vmatpush.bf16.xpose.msra.mxu0 0
  %1149 = vmatpush.bf16.xpose.msra.mxu0 0
  %1150 = vmatpush.bf16.xpose.msra.mxu0 %v1141
  %1151 = vmatmul.bf16.gmra.mxu0 %v1138
  %v1152 = vpop.f32.mrf.mxu0
  %v1153 = vadd.f32 0.0, %v1152
  %v1154 = vpop.f32.mrf.mxu0
  %v1155 = vadd.f32 0.0, %v1154
  %1156 = vdwg.mxu0
  %v1157 = vunpack.c.l.b16 %v383
  %v1158 = vunpack.c.l.b16 %v385
  %v1159 = vpack.c.b16 %v1158, %v1157
  %v1160 = vunpack.c.l.b16 %v468
  %v1161 = vunpack.c.l.b16 %v469
  %v1162 = vpack.c.b16 %v1161, %v1160
  %v1164 = vsel %vm616, %v1159, 0
  %v1167 = vsel %vm616, %v1162, 0
  %1169 = vmatpush.bf16.xpose.msra.mxu0 0
  %1170 = vmatpush.bf16.xpose.msra.mxu0 0
  %1171 = vmatpush.bf16.xpose.msra.mxu0 0
  %1172 = vmatpush.bf16.xpose.msra.mxu0 0
  %1173 = vmatpush.bf16.xpose.msra.mxu0 0
  %1174 = vmatpush.bf16.xpose.msra.mxu0 0
  %1175 = vmatpush.bf16.xpose.msra.mxu0 0
  %1176 = vmatpush.bf16.xpose.msra.mxu0 %v1167
  %1177 = vmatmul.bf16.gmra.mxu0 %v1164
  %v1178 = vpop.f32.mrf.mxu0
  %v1179 = vadd.f32 0.0, %v1178
  %v1180 = vpop.f32.mrf.mxu0
  %v1181 = vadd.f32 0.0, %v1180
  %1182 = vdwg.mxu0
  %v1183 = vunpack.c.l.b16 %v387
  %v1184 = vunpack.c.l.b16 %v389
  %v1185 = vpack.c.b16 %v1184, %v1183
  %v1186 = vunpack.c.l.b16 %v470
  %v1187 = vunpack.c.l.b16 %v471
  %v1188 = vpack.c.b16 %v1187, %v1186
  %v1190 = vsel %vm616, %v1185, 0
  %v1193 = vsel %vm616, %v1188, 0
  %1195 = vmatpush.bf16.xpose.msra.mxu0 0
  %1196 = vmatpush.bf16.xpose.msra.mxu0 0
  %1197 = vmatpush.bf16.xpose.msra.mxu0 0
  %1198 = vmatpush.bf16.xpose.msra.mxu0 0
  %1199 = vmatpush.bf16.xpose.msra.mxu0 0
  %1200 = vmatpush.bf16.xpose.msra.mxu0 0
  %1201 = vmatpush.bf16.xpose.msra.mxu0 0
  %1202 = vmatpush.bf16.xpose.msra.mxu0 %v1193
  %1203 = vmatmul.bf16.gmra.mxu0 %v1190
  %v1204 = vpop.f32.mrf.mxu0
  %v1205 = vadd.f32 0.0, %v1204
  %v1206 = vpop.f32.mrf.mxu0
  %v1207 = vadd.f32 0.0, %v1206
  %1208 = vdwg.mxu0
  %v1209 = vunpack.c.l.b16 %v391
  %v1210 = vunpack.c.l.b16 %v393
  %v1211 = vpack.c.b16 %v1210, %v1209
  %v1212 = vunpack.c.l.b16 %v472
  %v1213 = vunpack.c.l.b16 %v473
  %v1214 = vpack.c.b16 %v1213, %v1212
  %v1216 = vsel %vm616, %v1211, 0
  %v1219 = vsel %vm616, %v1214, 0
  %1221 = vmatpush.bf16.xpose.msra.mxu0 0
  %1222 = vmatpush.bf16.xpose.msra.mxu0 0
  %1223 = vmatpush.bf16.xpose.msra.mxu0 0
  %1224 = vmatpush.bf16.xpose.msra.mxu0 0
  %1225 = vmatpush.bf16.xpose.msra.mxu0 0
  %1226 = vmatpush.bf16.xpose.msra.mxu0 0
  %1227 = vmatpush.bf16.xpose.msra.mxu0 0
  %1228 = vmatpush.bf16.xpose.msra.mxu0 %v1219
  %1229 = vmatmul.bf16.gmra.mxu0 %v1216
  %v1230 = vpop.f32.mrf.mxu0
  %v1231 = vadd.f32 0.0, %v1230
  %v1232 = vpop.f32.mrf.mxu0
  %v1233 = vadd.f32 0.0, %v1232
  %1234 = vdwg.mxu0
  %v1235 = vunpack.c.l.b16 %v395
  %v1236 = vunpack.c.l.b16 %v397
  %v1237 = vpack.c.b16 %v1236, %v1235
  %v1238 = vunpack.c.l.b16 %v474
  %v1239 = vunpack.c.l.b16 %v475
  %v1240 = vpack.c.b16 %v1239, %v1238
  %v1242 = vsel %vm616, %v1237, 0
  %v1245 = vsel %vm616, %v1240, 0
  %1247 = vmatpush.bf16.xpose.msra.mxu0 0
  %1248 = vmatpush.bf16.xpose.msra.mxu0 0
  %1249 = vmatpush.bf16.xpose.msra.mxu0 0
  %1250 = vmatpush.bf16.xpose.msra.mxu0 0
  %1251 = vmatpush.bf16.xpose.msra.mxu0 0
  %1252 = vmatpush.bf16.xpose.msra.mxu0 0
  %1253 = vmatpush.bf16.xpose.msra.mxu0 0
  %1254 = vmatpush.bf16.xpose.msra.mxu0 %v1245
  %1255 = vmatmul.bf16.gmra.mxu0 %v1242
  %v1256 = vpop.f32.mrf.mxu0
  %v1257 = vadd.f32 0.0, %v1256
  %v1258 = vpop.f32.mrf.mxu0
  %v1259 = vadd.f32 0.0, %v1258
  %1260 = vdwg.mxu0
  %v1261 = vunpack.c.l.b16 %v399
  %v1262 = vunpack.c.l.b16 %v401
  %v1263 = vpack.c.b16 %v1262, %v1261
  %v1264 = vunpack.c.l.b16 %v476
  %v1265 = vunpack.c.l.b16 %v477
  %v1266 = vpack.c.b16 %v1265, %v1264
  %v1268 = vsel %vm616, %v1263, 0
  %v1271 = vsel %vm616, %v1266, 0
  %1273 = vmatpush.bf16.xpose.msra.mxu0 0
  %1274 = vmatpush.bf16.xpose.msra.mxu0 0
  %1275 = vmatpush.bf16.xpose.msra.mxu0 0
  %1276 = vmatpush.bf16.xpose.msra.mxu0 0
  %1277 = vmatpush.bf16.xpose.msra.mxu0 0
  %1278 = vmatpush.bf16.xpose.msra.mxu0 0
  %1279 = vmatpush.bf16.xpose.msra.mxu0 0
  %1280 = vmatpush.bf16.xpose.msra.mxu0 %v1271
  %1281 = vmatmul.bf16.gmra.mxu0 %v1268
  %v1282 = vpop.f32.mrf.mxu0
  %v1283 = vadd.f32 0.0, %v1282
  %v1284 = vpop.f32.mrf.mxu0
  %v1285 = vadd.f32 0.0, %v1284
  %1286 = vdwg.mxu0
  %v1287 = vunpack.c.l.b16 %v403
  %v1288 = vunpack.c.l.b16 %v405
  %v1289 = vpack.c.b16 %v1288, %v1287
  %v1290 = vunpack.c.l.b16 %v478
  %v1291 = vunpack.c.l.b16 %v479
  %v1292 = vpack.c.b16 %v1291, %v1290
  %v1294 = vsel %vm616, %v1289, 0
  %v1297 = vsel %vm616, %v1292, 0
  %1299 = vmatpush.bf16.xpose.msra.mxu0 0
  %1300 = vmatpush.bf16.xpose.msra.mxu0 0
  %1301 = vmatpush.bf16.xpose.msra.mxu0 0
  %1302 = vmatpush.bf16.xpose.msra.mxu0 0
  %1303 = vmatpush.bf16.xpose.msra.mxu0 0
  %1304 = vmatpush.bf16.xpose.msra.mxu0 0
  %1305 = vmatpush.bf16.xpose.msra.mxu0 0
  %1306 = vmatpush.bf16.xpose.msra.mxu0 %v1297
  %1307 = vmatmul.bf16.gmra.mxu0 %v1294
  %v1308 = vpop.f32.mrf.mxu0
  %v1309 = vadd.f32 0.0, %v1308
  %v1310 = vpop.f32.mrf.mxu0
  %v1311 = vadd.f32 0.0, %v1310
  %1312 = vdwg.mxu0
  %v1313 = vunpack.c.l.b16 %v407
  %v1314 = vunpack.c.l.b16 %v409
  %v1315 = vpack.c.b16 %v1314, %v1313
  %v1316 = vunpack.c.l.b16 %v480
  %v1317 = vunpack.c.l.b16 %v481
  %v1318 = vpack.c.b16 %v1317, %v1316
  %v1320 = vsel %vm616, %v1315, 0
  %v1323 = vsel %vm616, %v1318, 0
  %1325 = vmatpush.bf16.xpose.msra.mxu0 0
  %1326 = vmatpush.bf16.xpose.msra.mxu0 0
  %1327 = vmatpush.bf16.xpose.msra.mxu0 0
  %1328 = vmatpush.bf16.xpose.msra.mxu0 0
  %1329 = vmatpush.bf16.xpose.msra.mxu0 0
  %1330 = vmatpush.bf16.xpose.msra.mxu0 0
  %1331 = vmatpush.bf16.xpose.msra.mxu0 0
  %1332 = vmatpush.bf16.xpose.msra.mxu0 %v1323
  %1333 = vmatmul.bf16.gmra.mxu0 %v1320
  %v1334 = vpop.f32.mrf.mxu0
  %v1335 = vadd.f32 0.0, %v1334
  %v1336 = vpop.f32.mrf.mxu0
  %v1337 = vadd.f32 0.0, %v1336
  %1338 = vdwg.mxu0
  %v1339 = vunpack.c.l.b16 %v411
  %v1340 = vunpack.c.l.b16 %v413
  %v1341 = vpack.c.b16 %v1340, %v1339
  %v1342 = vunpack.c.l.b16 %v482
  %v1343 = vunpack.c.l.b16 %v483
  %v1344 = vpack.c.b16 %v1343, %v1342
  %v1346 = vsel %vm616, %v1341, 0
  %v1349 = vsel %vm616, %v1344, 0
  %1351 = vmatpush.bf16.xpose.msra.mxu0 0
  %1352 = vmatpush.bf16.xpose.msra.mxu0 0
  %1353 = vmatpush.bf16.xpose.msra.mxu0 0
  %1354 = vmatpush.bf16.xpose.msra.mxu0 0
  %1355 = vmatpush.bf16.xpose.msra.mxu0 0
  %1356 = vmatpush.bf16.xpose.msra.mxu0 0
  %1357 = vmatpush.bf16.xpose.msra.mxu0 0
  %1358 = vmatpush.bf16.xpose.msra.mxu0 %v1349
  %1359 = vmatmul.bf16.gmra.mxu0 %v1346
  %v1360 = vpop.f32.mrf.mxu0
  %v1361 = vadd.f32 0.0, %v1360
  %v1362 = vpop.f32.mrf.mxu0
  %v1363 = vadd.f32 0.0, %v1362
  %1364 = vdwg.mxu0
  %v1365 = vunpack.c.l.b16 %v415
  %v1366 = vunpack.c.l.b16 %v417
  %v1367 = vpack.c.b16 %v1366, %v1365
  %v1368 = vunpack.c.l.b16 %v484
  %v1369 = vunpack.c.l.b16 %v485
  %v1370 = vpack.c.b16 %v1369, %v1368
  %v1372 = vsel %vm616, %v1367, 0
  %v1375 = vsel %vm616, %v1370, 0
  %1377 = vmatpush.bf16.xpose.msra.mxu0 0
  %1378 = vmatpush.bf16.xpose.msra.mxu0 0
  %1379 = vmatpush.bf16.xpose.msra.mxu0 0
  %1380 = vmatpush.bf16.xpose.msra.mxu0 0
  %1381 = vmatpush.bf16.xpose.msra.mxu0 0
  %1382 = vmatpush.bf16.xpose.msra.mxu0 0
  %1383 = vmatpush.bf16.xpose.msra.mxu0 0
  %1384 = vmatpush.bf16.xpose.msra.mxu0 %v1375
  %1385 = vmatmul.bf16.gmra.mxu0 %v1372
  %v1386 = vpop.f32.mrf.mxu0
  %v1387 = vadd.f32 0.0, %v1386
  %v1388 = vpop.f32.mrf.mxu0
  %v1389 = vadd.f32 0.0, %v1388
  %1390 = vdwg.mxu0
  %v1391 = vunpack.c.l.b16 %v419
  %v1392 = vunpack.c.l.b16 %v421
  %v1393 = vpack.c.b16 %v1392, %v1391
  %v1394 = vunpack.c.l.b16 %v486
  %v1395 = vunpack.c.l.b16 %v487
  %v1396 = vpack.c.b16 %v1395, %v1394
  %v1398 = vsel %vm616, %v1393, 0
  %v1401 = vsel %vm616, %v1396, 0
  %1403 = vmatpush.bf16.xpose.msra.mxu0 0
  %1404 = vmatpush.bf16.xpose.msra.mxu0 0
  %1405 = vmatpush.bf16.xpose.msra.mxu0 0
  %1406 = vmatpush.bf16.xpose.msra.mxu0 0
  %1407 = vmatpush.bf16.xpose.msra.mxu0 0
  %1408 = vmatpush.bf16.xpose.msra.mxu0 0
  %1409 = vmatpush.bf16.xpose.msra.mxu0 0
  %1410 = vmatpush.bf16.xpose.msra.mxu0 %v1401
  %1411 = vmatmul.bf16.gmra.mxu0 %v1398
  %v1412 = vpop.f32.mrf.mxu0
  %v1413 = vadd.f32 0.0, %v1412
  %v1414 = vpop.f32.mrf.mxu0
  %v1415 = vadd.f32 0.0, %v1414
  %1416 = vdwg.mxu0
  %v1417 = vunpack.c.l.b16 %v423
  %v1418 = vunpack.c.l.b16 %v425
  %v1419 = vpack.c.b16 %v1418, %v1417
  %v1420 = vunpack.c.l.b16 %v488
  %v1421 = vunpack.c.l.b16 %v489
  %v1422 = vpack.c.b16 %v1421, %v1420
  %v1424 = vsel %vm616, %v1419, 0
  %v1427 = vsel %vm616, %v1422, 0
  %1429 = vmatpush.bf16.xpose.msra.mxu0 0
  %1430 = vmatpush.bf16.xpose.msra.mxu0 0
  %1431 = vmatpush.bf16.xpose.msra.mxu0 0
  %1432 = vmatpush.bf16.xpose.msra.mxu0 0
  %1433 = vmatpush.bf16.xpose.msra.mxu0 0
  %1434 = vmatpush.bf16.xpose.msra.mxu0 0
  %1435 = vmatpush.bf16.xpose.msra.mxu0 0
  %1436 = vmatpush.bf16.xpose.msra.mxu0 %v1427
  %1437 = vmatmul.bf16.gmra.mxu0 %v1424
  %v1438 = vpop.f32.mrf.mxu0
  %v1439 = vadd.f32 0.0, %v1438
  %v1440 = vpop.f32.mrf.mxu0
  %v1441 = vadd.f32 0.0, %v1440
  %1442 = vdwg.mxu0
  %v1443 = vmul.f32 %v633, 0.25
  %v1444 = vmul.f32 %v635, 0.25
  %v1445 = vmul.f32 %v659, 0.25
  %v1446 = vmul.f32 %v661, 0.25
  %v1447 = vmul.f32 %v685, 0.25
  %v1448 = vmul.f32 %v687, 0.25
  %v1449 = vmul.f32 %v711, 0.25
  %v1450 = vmul.f32 %v713, 0.25
  %v1451 = vmul.f32 %v737, 0.25
  %v1452 = vmul.f32 %v739, 0.25
  %v1453 = vmul.f32 %v763, 0.25
  %v1454 = vmul.f32 %v765, 0.25
  %v1455 = vmul.f32 %v789, 0.25
  %v1456 = vmul.f32 %v791, 0.25
  %v1457 = vmul.f32 %v815, 0.25
  %v1458 = vmul.f32 %v817, 0.25
  %v1459 = vmul.f32 %v841, 0.25
  %v1460 = vmul.f32 %v843, 0.25
  %v1461 = vmul.f32 %v867, 0.25
  %v1462 = vmul.f32 %v869, 0.25
  %v1463 = vmul.f32 %v893, 0.25
  %v1464 = vmul.f32 %v895, 0.25
  %v1465 = vmul.f32 %v919, 0.25
  %v1466 = vmul.f32 %v921, 0.25
  %v1467 = vmul.f32 %v945, 0.25
  %v1468 = vmul.f32 %v947, 0.25
  %v1469 = vmul.f32 %v971, 0.25
  %v1470 = vmul.f32 %v973, 0.25
  %v1471 = vmul.f32 %v997, 0.25
  %v1472 = vmul.f32 %v999, 0.25
  %v1473 = vmul.f32 %v1023, 0.25
  %v1474 = vmul.f32 %v1025, 0.25
  %v1475 = vmul.f32 %v1049, 0.25
  %v1476 = vmul.f32 %v1051, 0.25
  %v1477 = vmul.f32 %v1075, 0.25
  %v1478 = vmul.f32 %v1077, 0.25
  %v1479 = vmul.f32 %v1101, 0.25
  %v1480 = vmul.f32 %v1103, 0.25
  %v1481 = vmul.f32 %v1127, 0.25
  %v1482 = vmul.f32 %v1129, 0.25
  %v1483 = vmul.f32 %v1153, 0.25
  %v1484 = vmul.f32 %v1155, 0.25
  %v1485 = vmul.f32 %v1179, 0.25
  %v1486 = vmul.f32 %v1181, 0.25
  %v1487 = vmul.f32 %v1205, 0.25
  %v1488 = vmul.f32 %v1207, 0.25
  %v1489 = vmul.f32 %v1231, 0.25
  %v1490 = vmul.f32 %v1233, 0.25
  %v1491 = vmul.f32 %v1257, 0.25
  %v1492 = vmul.f32 %v1259, 0.25
  %v1493 = vmul.f32 %v1283, 0.25
  %v1494 = vmul.f32 %v1285, 0.25
  %v1495 = vmul.f32 %v1309, 0.25
  %v1496 = vmul.f32 %v1311, 0.25
  %v1497 = vmul.f32 %v1335, 0.25
  %v1498 = vmul.f32 %v1337, 0.25
  %v1499 = vmul.f32 %v1361, 0.25
  %v1500 = vmul.f32 %v1363, 0.25
  %v1501 = vmul.f32 %v1387, 0.25
  %v1502 = vmul.f32 %v1389, 0.25
  %v1503 = vmul.f32 %v1413, 0.25
  %v1504 = vmul.f32 %v1415, 0.25
  %v1505 = vmul.f32 %v1439, 0.25
  %v1506 = vmul.f32 %v1441, 0.25
  %v1507 = vsel %vm616, %v1443, -inf
  %1508 = vmax.xlane.f32.xlu0 %v1507
  %v1509 = vpop.xlane.xlu0 %1508
  %v1510 = vsel %vm616, %v1444, -inf
  %1511 = vmax.xlane.f32.xlu0 %v1510
  %v1512 = vpop.xlane.xlu0 %1511
  %v1513 = vsel %vm616, %v1445, -inf
  %1514 = vmax.xlane.f32.xlu0 %v1513
  %v1515 = vpop.xlane.xlu0 %1514
  %v1516 = vsel %vm616, %v1446, -inf
  %1517 = vmax.xlane.f32.xlu0 %v1516
  %v1518 = vpop.xlane.xlu0 %1517
  %v1519 = vsel %vm616, %v1447, -inf
  %1520 = vmax.xlane.f32.xlu0 %v1519
  %v1521 = vpop.xlane.xlu0 %1520
  %v1522 = vsel %vm616, %v1448, -inf
  %1523 = vmax.xlane.f32.xlu0 %v1522
  %v1524 = vpop.xlane.xlu0 %1523
  %v1525 = vsel %vm616, %v1449, -inf
  %1526 = vmax.xlane.f32.xlu0 %v1525
  %v1527 = vpop.xlane.xlu0 %1526
  %v1528 = vsel %vm616, %v1450, -inf
  %1529 = vmax.xlane.f32.xlu0 %v1528
  %v1530 = vpop.xlane.xlu0 %1529
  %v1531 = vsel %vm616, %v1451, -inf
  %1532 = vmax.xlane.f32.xlu0 %v1531
  %v1533 = vpop.xlane.xlu0 %1532
  %v1534 = vsel %vm616, %v1452, -inf
  %1535 = vmax.xlane.f32.xlu0 %v1534
  %v1536 = vpop.xlane.xlu0 %1535
  %v1537 = vsel %vm616, %v1453, -inf
  %1538 = vmax.xlane.f32.xlu0 %v1537
  %v1539 = vpop.xlane.xlu0 %1538
  %v1540 = vsel %vm616, %v1454, -inf
  %1541 = vmax.xlane.f32.xlu0 %v1540
  %v1542 = vpop.xlane.xlu0 %1541
  %v1543 = vsel %vm616, %v1455, -inf
  %1544 = vmax.xlane.f32.xlu0 %v1543
  %v1545 = vpop.xlane.xlu0 %1544
  %v1546 = vsel %vm616, %v1456, -inf
  %1547 = vmax.xlane.f32.xlu0 %v1546
  %v1548 = vpop.xlane.xlu0 %1547
  %v1549 = vsel %vm616, %v1457, -inf
  %1550 = vmax.xlane.f32.xlu0 %v1549
  %v1551 = vpop.xlane.xlu0 %1550
  %v1552 = vsel %vm616, %v1458, -inf
  %1553 = vmax.xlane.f32.xlu0 %v1552
  %v1554 = vpop.xlane.xlu0 %1553
  %v1555 = vsel %vm616, %v1459, -inf
  %1556 = vmax.xlane.f32.xlu0 %v1555
  %v1557 = vpop.xlane.xlu0 %1556
  %v1558 = vsel %vm616, %v1460, -inf
  %1559 = vmax.xlane.f32.xlu0 %v1558
  %v1560 = vpop.xlane.xlu0 %1559
  %v1561 = vsel %vm616, %v1461, -inf
  %1562 = vmax.xlane.f32.xlu0 %v1561
  %v1563 = vpop.xlane.xlu0 %1562
  %v1564 = vsel %vm616, %v1462, -inf
  %1565 = vmax.xlane.f32.xlu0 %v1564
  %v1566 = vpop.xlane.xlu0 %1565
  %v1567 = vsel %vm616, %v1463, -inf
  %1568 = vmax.xlane.f32.xlu0 %v1567
  %v1569 = vpop.xlane.xlu0 %1568
  %v1570 = vsel %vm616, %v1464, -inf
  %1571 = vmax.xlane.f32.xlu0 %v1570
  %v1572 = vpop.xlane.xlu0 %1571
  %v1573 = vsel %vm616, %v1465, -inf
  %1574 = vmax.xlane.f32.xlu0 %v1573
  %v1575 = vpop.xlane.xlu0 %1574
  %v1576 = vsel %vm616, %v1466, -inf
  %1577 = vmax.xlane.f32.xlu0 %v1576
  %v1578 = vpop.xlane.xlu0 %1577
  %v1579 = vsel %vm616, %v1467, -inf
  %1580 = vmax.xlane.f32.xlu0 %v1579
  %v1581 = vpop.xlane.xlu0 %1580
  %v1582 = vsel %vm616, %v1468, -inf
  %1583 = vmax.xlane.f32.xlu0 %v1582
  %v1584 = vpop.xlane.xlu0 %1583
  %v1585 = vsel %vm616, %v1469, -inf
  %1586 = vmax.xlane.f32.xlu0 %v1585
  %v1587 = vpop.xlane.xlu0 %1586
  %v1588 = vsel %vm616, %v1470, -inf
  %1589 = vmax.xlane.f32.xlu0 %v1588
  %v1590 = vpop.xlane.xlu0 %1589
  %v1591 = vsel %vm616, %v1471, -inf
  %1592 = vmax.xlane.f32.xlu0 %v1591
  %v1593 = vpop.xlane.xlu0 %1592
  %v1594 = vsel %vm616, %v1472, -inf
  %1595 = vmax.xlane.f32.xlu0 %v1594
  %v1596 = vpop.xlane.xlu0 %1595
  %v1597 = vsel %vm616, %v1473, -inf
  %1598 = vmax.xlane.f32.xlu0 %v1597
  %v1599 = vpop.xlane.xlu0 %1598
  %v1600 = vsel %vm616, %v1474, -inf
  %1601 = vmax.xlane.f32.xlu0 %v1600
  %v1602 = vpop.xlane.xlu0 %1601
  %v1603 = vsel %vm616, %v1475, -inf
  %1604 = vmax.xlane.f32.xlu0 %v1603
  %v1605 = vpop.xlane.xlu0 %1604
  %v1606 = vsel %vm616, %v1476, -inf
  %1607 = vmax.xlane.f32.xlu0 %v1606
  %v1608 = vpop.xlane.xlu0 %1607
  %v1609 = vsel %vm616, %v1477, -inf
  %1610 = vmax.xlane.f32.xlu0 %v1609
  %v1611 = vpop.xlane.xlu0 %1610
  %v1612 = vsel %vm616, %v1478, -inf
  %1613 = vmax.xlane.f32.xlu0 %v1612
  %v1614 = vpop.xlane.xlu0 %1613
  %v1615 = vsel %vm616, %v1479, -inf
  %1616 = vmax.xlane.f32.xlu0 %v1615
  %v1617 = vpop.xlane.xlu0 %1616
  %v1618 = vsel %vm616, %v1480, -inf
  %1619 = vmax.xlane.f32.xlu0 %v1618
  %v1620 = vpop.xlane.xlu0 %1619
  %v1621 = vsel %vm616, %v1481, -inf
  %1622 = vmax.xlane.f32.xlu0 %v1621
  %v1623 = vpop.xlane.xlu0 %1622
  %v1624 = vsel %vm616, %v1482, -inf
  %1625 = vmax.xlane.f32.xlu0 %v1624
  %v1626 = vpop.xlane.xlu0 %1625
  %v1627 = vsel %vm616, %v1483, -inf
  %1628 = vmax.xlane.f32.xlu0 %v1627
  %v1629 = vpop.xlane.xlu0 %1628
  %v1630 = vsel %vm616, %v1484, -inf
  %1631 = vmax.xlane.f32.xlu0 %v1630
  %v1632 = vpop.xlane.xlu0 %1631
  %v1633 = vsel %vm616, %v1485, -inf
  %1634 = vmax.xlane.f32.xlu0 %v1633
  %v1635 = vpop.xlane.xlu0 %1634
  %v1636 = vsel %vm616, %v1486, -inf
  %1637 = vmax.xlane.f32.xlu0 %v1636
  %v1638 = vpop.xlane.xlu0 %1637
  %v1639 = vsel %vm616, %v1487, -inf
  %1640 = vmax.xlane.f32.xlu0 %v1639
  %v1641 = vpop.xlane.xlu0 %1640
  %v1642 = vsel %vm616, %v1488, -inf
  %1643 = vmax.xlane.f32.xlu0 %v1642
  %v1644 = vpop.xlane.xlu0 %1643
  %v1645 = vsel %vm616, %v1489, -inf
  %1646 = vmax.xlane.f32.xlu0 %v1645
  %v1647 = vpop.xlane.xlu0 %1646
  %v1648 = vsel %vm616, %v1490, -inf
  %1649 = vmax.xlane.f32.xlu0 %v1648
  %v1650 = vpop.xlane.xlu0 %1649
  %v1651 = vsel %vm616, %v1491, -inf
  %1652 = vmax.xlane.f32.xlu0 %v1651
  %v1653 = vpop.xlane.xlu0 %1652
  %v1654 = vsel %vm616, %v1492, -inf
  %1655 = vmax.xlane.f32.xlu0 %v1654
  %v1656 = vpop.xlane.xlu0 %1655
  %v1657 = vsel %vm616, %v1493, -inf
  %1658 = vmax.xlane.f32.xlu0 %v1657
  %v1659 = vpop.xlane.xlu0 %1658
  %v1660 = vsel %vm616, %v1494, -inf
  %1661 = vmax.xlane.f32.xlu0 %v1660
  %v1662 = vpop.xlane.xlu0 %1661
  %v1663 = vsel %vm616, %v1495, -inf
  %1664 = vmax.xlane.f32.xlu0 %v1663
  %v1665 = vpop.xlane.xlu0 %1664
  %v1666 = vsel %vm616, %v1496, -inf
  %1667 = vmax.xlane.f32.xlu0 %v1666
  %v1668 = vpop.xlane.xlu0 %1667
  %v1669 = vsel %vm616, %v1497, -inf
  %1670 = vmax.xlane.f32.xlu0 %v1669
  %v1671 = vpop.xlane.xlu0 %1670
  %v1672 = vsel %vm616, %v1498, -inf
  %1673 = vmax.xlane.f32.xlu0 %v1672
  %v1674 = vpop.xlane.xlu0 %1673
  %v1675 = vsel %vm616, %v1499, -inf
  %1676 = vmax.xlane.f32.xlu0 %v1675
  %v1677 = vpop.xlane.xlu0 %1676
  %v1678 = vsel %vm616, %v1500, -inf
  %1679 = vmax.xlane.f32.xlu0 %v1678
  %v1680 = vpop.xlane.xlu0 %1679
  %v1681 = vsel %vm616, %v1501, -inf
  %1682 = vmax.xlane.f32.xlu0 %v1681
  %v1683 = vpop.xlane.xlu0 %1682
  %v1684 = vsel %vm616, %v1502, -inf
  %1685 = vmax.xlane.f32.xlu0 %v1684
  %v1686 = vpop.xlane.xlu0 %1685
  %v1687 = vsel %vm616, %v1503, -inf
  %1688 = vmax.xlane.f32.xlu0 %v1687
  %v1689 = vpop.xlane.xlu0 %1688
  %v1690 = vsel %vm616, %v1504, -inf
  %1691 = vmax.xlane.f32.xlu0 %v1690
  %v1692 = vpop.xlane.xlu0 %1691
  %v1693 = vsel %vm616, %v1505, -inf
  %1694 = vmax.xlane.f32.xlu0 %v1693
  %v1695 = vpop.xlane.xlu0 %1694
  %v1696 = vsel %vm616, %v1506, -inf
  %1697 = vmax.xlane.f32.xlu0 %v1696
  %v1698 = vpop.xlane.xlu0 %1697
  %v1699 = vsub.f32 %v1443, %v1509
  %v1700 = vsub.f32 %v1444, %v1512
  %v1701 = vsub.f32 %v1445, %v1515
  %v1702 = vsub.f32 %v1446, %v1518
  %v1703 = vsub.f32 %v1447, %v1521
  %v1704 = vsub.f32 %v1448, %v1524
  %v1705 = vsub.f32 %v1449, %v1527
  %v1706 = vsub.f32 %v1450, %v1530
  %v1707 = vsub.f32 %v1451, %v1533
  %v1708 = vsub.f32 %v1452, %v1536
  %v1709 = vsub.f32 %v1453, %v1539
  %v1710 = vsub.f32 %v1454, %v1542
  %v1711 = vsub.f32 %v1455, %v1545
  %v1712 = vsub.f32 %v1456, %v1548
  %v1713 = vsub.f32 %v1457, %v1551
  %v1714 = vsub.f32 %v1458, %v1554
  %v1715 = vsub.f32 %v1459, %v1557
  %v1716 = vsub.f32 %v1460, %v1560
  %v1717 = vsub.f32 %v1461, %v1563
  %v1718 = vsub.f32 %v1462, %v1566
  %v1719 = vsub.f32 %v1463, %v1569
  %v1720 = vsub.f32 %v1464, %v1572
  %v1721 = vsub.f32 %v1465, %v1575
  %v1722 = vsub.f32 %v1466, %v1578
  %v1723 = vsub.f32 %v1467, %v1581
  %v1724 = vsub.f32 %v1468, %v1584
  %v1725 = vsub.f32 %v1469, %v1587
  %v1726 = vsub.f32 %v1470, %v1590
  %v1727 = vsub.f32 %v1471, %v1593
  %v1728 = vsub.f32 %v1472, %v1596
  %v1729 = vsub.f32 %v1473, %v1599
  %v1730 = vsub.f32 %v1474, %v1602
  %v1731 = vsub.f32 %v1475, %v1605
  %v1732 = vsub.f32 %v1476, %v1608
  %v1733 = vsub.f32 %v1477, %v1611
  %v1734 = vsub.f32 %v1478, %v1614
  %v1735 = vsub.f32 %v1479, %v1617
  %v1736 = vsub.f32 %v1480, %v1620
  %v1737 = vsub.f32 %v1481, %v1623
  %v1738 = vsub.f32 %v1482, %v1626
  %v1739 = vsub.f32 %v1483, %v1629
  %v1740 = vsub.f32 %v1484, %v1632
  %v1741 = vsub.f32 %v1485, %v1635
  %v1742 = vsub.f32 %v1486, %v1638
  %v1743 = vsub.f32 %v1487, %v1641
  %v1744 = vsub.f32 %v1488, %v1644
  %v1745 = vsub.f32 %v1489, %v1647
  %v1746 = vsub.f32 %v1490, %v1650
  %v1747 = vsub.f32 %v1491, %v1653
  %v1748 = vsub.f32 %v1492, %v1656
  %v1749 = vsub.f32 %v1493, %v1659
  %v1750 = vsub.f32 %v1494, %v1662
  %v1751 = vsub.f32 %v1495, %v1665
  %v1752 = vsub.f32 %v1496, %v1668
  %v1753 = vsub.f32 %v1497, %v1671
  %v1754 = vsub.f32 %v1498, %v1674
  %v1755 = vsub.f32 %v1499, %v1677
  %v1756 = vsub.f32 %v1500, %v1680
  %v1757 = vsub.f32 %v1501, %v1683
  %v1758 = vsub.f32 %v1502, %v1686
  %v1759 = vsub.f32 %v1503, %v1689
  %v1760 = vsub.f32 %v1504, %v1692
  %v1761 = vsub.f32 %v1505, %v1695
  %v1762 = vsub.f32 %v1506, %v1698
  %v1763 = vmul.f32 %v1699, 1.442695
  %v1764 = vpow.pop %v1763
  %v1765 = vmul.f32 %v1700, 1.442695
  %v1766 = vpow.pop %v1765
  %v1767 = vmul.f32 %v1701, 1.442695
  %v1768 = vpow.pop %v1767
  %v1769 = vmul.f32 %v1702, 1.442695
  %v1770 = vpow.pop %v1769
  %v1771 = vmul.f32 %v1703, 1.442695
  %v1772 = vpow.pop %v1771
  %v1773 = vmul.f32 %v1704, 1.442695
  %v1774 = vpow.pop %v1773
  %v1775 = vmul.f32 %v1705, 1.442695
  %v1776 = vpow.pop %v1775
  %v1777 = vmul.f32 %v1706, 1.442695
  %v1778 = vpow.pop %v1777
  %v1779 = vmul.f32 %v1707, 1.442695
  %v1780 = vpow.pop %v1779
  %v1781 = vmul.f32 %v1708, 1.442695
  %v1782 = vpow.pop %v1781
  %v1783 = vmul.f32 %v1709, 1.442695
  %v1784 = vpow.pop %v1783
  %v1785 = vmul.f32 %v1710, 1.442695
  %v1786 = vpow.pop %v1785
  %v1787 = vmul.f32 %v1711, 1.442695
  %v1788 = vpow.pop %v1787
  %v1789 = vmul.f32 %v1712, 1.442695
  %v1790 = vpow.pop %v1789
  %v1791 = vmul.f32 %v1713, 1.442695
  %v1792 = vpow.pop %v1791
  %v1793 = vmul.f32 %v1714, 1.442695
  %v1794 = vpow.pop %v1793
  %v1795 = vmul.f32 %v1715, 1.442695
  %v1796 = vpow.pop %v1795
  %v1797 = vmul.f32 %v1716, 1.442695
  %v1798 = vpow.pop %v1797
  %v1799 = vmul.f32 %v1717, 1.442695
  %v1800 = vpow.pop %v1799
  %v1801 = vmul.f32 %v1718, 1.442695
  %v1802 = vpow.pop %v1801
  %v1803 = vmul.f32 %v1719, 1.442695
  %v1804 = vpow.pop %v1803
  %v1805 = vmul.f32 %v1720, 1.442695
  %v1806 = vpow.pop %v1805
  %v1807 = vmul.f32 %v1721, 1.442695
  %v1808 = vpow.pop %v1807
  %v1809 = vmul.f32 %v1722, 1.442695
  %v1810 = vpow.pop %v1809
  %v1811 = vmul.f32 %v1723, 1.442695
  %v1812 = vpow.pop %v1811
  %v1813 = vmul.f32 %v1724, 1.442695
  %v1814 = vpow.pop %v1813
  %v1815 = vmul.f32 %v1725, 1.442695
  %v1816 = vpow.pop %v1815
  %v1817 = vmul.f32 %v1726, 1.442695
  %v1818 = vpow.pop %v1817
  %v1819 = vmul.f32 %v1727, 1.442695
  %v1820 = vpow.pop %v1819
  %v1821 = vmul.f32 %v1728, 1.442695
  %v1822 = vpow.pop %v1821
  %v1823 = vmul.f32 %v1729, 1.442695
  %v1824 = vpow.pop %v1823
  %v1825 = vmul.f32 %v1730, 1.442695
  %v1826 = vpow.pop %v1825
  %v1827 = vmul.f32 %v1731, 1.442695
  %v1828 = vpow.pop %v1827
  %v1829 = vmul.f32 %v1732, 1.442695
  %v1830 = vpow.pop %v1829
  %v1831 = vmul.f32 %v1733, 1.442695
  %v1832 = vpow.pop %v1831
  %v1833 = vmul.f32 %v1734, 1.442695
  %v1834 = vpow.pop %v1833
  %v1835 = vmul.f32 %v1735, 1.442695
  %v1836 = vpow.pop %v1835
  %v1837 = vmul.f32 %v1736, 1.442695
  %v1838 = vpow.pop %v1837
  %v1839 = vmul.f32 %v1737, 1.442695
  %v1840 = vpow.pop %v1839
  %v1841 = vmul.f32 %v1738, 1.442695
  %v1842 = vpow.pop %v1841
  %v1843 = vmul.f32 %v1739, 1.442695
  %v1844 = vpow.pop %v1843
  %v1845 = vmul.f32 %v1740, 1.442695
  %v1846 = vpow.pop %v1845
  %v1847 = vmul.f32 %v1741, 1.442695
  %v1848 = vpow.pop %v1847
  %v1849 = vmul.f32 %v1742, 1.442695
  %v1850 = vpow.pop %v1849
  %v1851 = vmul.f32 %v1743, 1.442695
  %v1852 = vpow.pop %v1851
  %v1853 = vmul.f32 %v1744, 1.442695
  %v1854 = vpow.pop %v1853
  %v1855 = vmul.f32 %v1745, 1.442695
  %v1856 = vpow.pop %v1855
  %v1857 = vmul.f32 %v1746, 1.442695
  %v1858 = vpow.pop %v1857
  %v1859 = vmul.f32 %v1747, 1.442695
  %v1860 = vpow.pop %v1859
  %v1861 = vmul.f32 %v1748, 1.442695
  %v1862 = vpow.pop %v1861
  %v1863 = vmul.f32 %v1749, 1.442695
  %v1864 = vpow.pop %v1863
  %v1865 = vmul.f32 %v1750, 1.442695
  %v1866 = vpow.pop %v1865
  %v1867 = vmul.f32 %v1751, 1.442695
  %v1868 = vpow.pop %v1867
  %v1869 = vmul.f32 %v1752, 1.442695
  %v1870 = vpow.pop %v1869
  %v1871 = vmul.f32 %v1753, 1.442695
  %v1872 = vpow.pop %v1871
  %v1873 = vmul.f32 %v1754, 1.442695
  %v1874 = vpow.pop %v1873
  %v1875 = vmul.f32 %v1755, 1.442695
  %v1876 = vpow.pop %v1875
  %v1877 = vmul.f32 %v1756, 1.442695
  %v1878 = vpow.pop %v1877
  %v1879 = vmul.f32 %v1757, 1.442695
  %v1880 = vpow.pop %v1879
  %v1881 = vmul.f32 %v1758, 1.442695
  %v1882 = vpow.pop %v1881
  %v1883 = vmul.f32 %v1759, 1.442695
  %v1884 = vpow.pop %v1883
  %v1885 = vmul.f32 %v1760, 1.442695
  %v1886 = vpow.pop %v1885
  %v1887 = vmul.f32 %v1761, 1.442695
  %v1888 = vpow.pop %v1887
  %v1889 = vmul.f32 %v1762, 1.442695
  %v1890 = vpow.pop %v1889
  %v1891 = vsel %vm616, %v1764, 0.0
  %1892 = vadd.xlane.f32.xlu0 %v1891
  %v1893 = vpop.xlane.xlu0 %1892
  %v1894 = vsel %vm616, %v1766, 0.0
  %1895 = vadd.xlane.f32.xlu0 %v1894
  %v1896 = vpop.xlane.xlu0 %1895
  %v1897 = vsel %vm616, %v1768, 0.0
  %1898 = vadd.xlane.f32.xlu0 %v1897
  %v1899 = vpop.xlane.xlu0 %1898
  %v1900 = vsel %vm616, %v1770, 0.0
  %1901 = vadd.xlane.f32.xlu0 %v1900
  %v1902 = vpop.xlane.xlu0 %1901
  %v1903 = vsel %vm616, %v1772, 0.0
  %1904 = vadd.xlane.f32.xlu0 %v1903
  %v1905 = vpop.xlane.xlu0 %1904
  %v1906 = vsel %vm616, %v1774, 0.0
  %1907 = vadd.xlane.f32.xlu0 %v1906
  %v1908 = vpop.xlane.xlu0 %1907
  %v1909 = vsel %vm616, %v1776, 0.0
  %1910 = vadd.xlane.f32.xlu0 %v1909
  %v1911 = vpop.xlane.xlu0 %1910
  %v1912 = vsel %vm616, %v1778, 0.0
  %1913 = vadd.xlane.f32.xlu0 %v1912
  %v1914 = vpop.xlane.xlu0 %1913
  %v1915 = vsel %vm616, %v1780, 0.0
  %1916 = vadd.xlane.f32.xlu0 %v1915
  %v1917 = vpop.xlane.xlu0 %1916
  %v1918 = vsel %vm616, %v1782, 0.0
  %1919 = vadd.xlane.f32.xlu0 %v1918
  %v1920 = vpop.xlane.xlu0 %1919
  %v1921 = vsel %vm616, %v1784, 0.0
  %1922 = vadd.xlane.f32.xlu0 %v1921
  %v1923 = vpop.xlane.xlu0 %1922
  %v1924 = vsel %vm616, %v1786, 0.0
  %1925 = vadd.xlane.f32.xlu0 %v1924
  %v1926 = vpop.xlane.xlu0 %1925
  %v1927 = vsel %vm616, %v1788, 0.0
  %1928 = vadd.xlane.f32.xlu0 %v1927
  %v1929 = vpop.xlane.xlu0 %1928
  %v1930 = vsel %vm616, %v1790, 0.0
  %1931 = vadd.xlane.f32.xlu0 %v1930
  %v1932 = vpop.xlane.xlu0 %1931
  %v1933 = vsel %vm616, %v1792, 0.0
  %1934 = vadd.xlane.f32.xlu0 %v1933
  %v1935 = vpop.xlane.xlu0 %1934
  %v1936 = vsel %vm616, %v1794, 0.0
  %1937 = vadd.xlane.f32.xlu0 %v1936
  %v1938 = vpop.xlane.xlu0 %1937
  %v1939 = vsel %vm616, %v1796, 0.0
  %1940 = vadd.xlane.f32.xlu0 %v1939
  %v1941 = vpop.xlane.xlu0 %1940
  %v1942 = vsel %vm616, %v1798, 0.0
  %1943 = vadd.xlane.f32.xlu0 %v1942
  %v1944 = vpop.xlane.xlu0 %1943
  %v1945 = vsel %vm616, %v1800, 0.0
  %1946 = vadd.xlane.f32.xlu0 %v1945
  %v1947 = vpop.xlane.xlu0 %1946
  %v1948 = vsel %vm616, %v1802, 0.0
  %1949 = vadd.xlane.f32.xlu0 %v1948
  %v1950 = vpop.xlane.xlu0 %1949
  %v1951 = vsel %vm616, %v1804, 0.0
  %1952 = vadd.xlane.f32.xlu0 %v1951
  %v1953 = vpop.xlane.xlu0 %1952
  %v1954 = vsel %vm616, %v1806, 0.0
  %1955 = vadd.xlane.f32.xlu0 %v1954
  %v1956 = vpop.xlane.xlu0 %1955
  %v1957 = vsel %vm616, %v1808, 0.0
  %1958 = vadd.xlane.f32.xlu0 %v1957
  %v1959 = vpop.xlane.xlu0 %1958
  %v1960 = vsel %vm616, %v1810, 0.0
  %1961 = vadd.xlane.f32.xlu0 %v1960
  %v1962 = vpop.xlane.xlu0 %1961
  %v1963 = vsel %vm616, %v1812, 0.0
  %1964 = vadd.xlane.f32.xlu0 %v1963
  %v1965 = vpop.xlane.xlu0 %1964
  %v1966 = vsel %vm616, %v1814, 0.0
  %1967 = vadd.xlane.f32.xlu0 %v1966
  %v1968 = vpop.xlane.xlu0 %1967
  %v1969 = vsel %vm616, %v1816, 0.0
  %1970 = vadd.xlane.f32.xlu0 %v1969
  %v1971 = vpop.xlane.xlu0 %1970
  %v1972 = vsel %vm616, %v1818, 0.0
  %1973 = vadd.xlane.f32.xlu0 %v1972
  %v1974 = vpop.xlane.xlu0 %1973
  %v1975 = vsel %vm616, %v1820, 0.0
  %1976 = vadd.xlane.f32.xlu0 %v1975
  %v1977 = vpop.xlane.xlu0 %1976
  %v1978 = vsel %vm616, %v1822, 0.0
  %1979 = vadd.xlane.f32.xlu0 %v1978
  %v1980 = vpop.xlane.xlu0 %1979
  %v1981 = vsel %vm616, %v1824, 0.0
  %1982 = vadd.xlane.f32.xlu0 %v1981
  %v1983 = vpop.xlane.xlu0 %1982
  %v1984 = vsel %vm616, %v1826, 0.0
  %1985 = vadd.xlane.f32.xlu0 %v1984
  %v1986 = vpop.xlane.xlu0 %1985
  %v1987 = vsel %vm616, %v1828, 0.0
  %1988 = vadd.xlane.f32.xlu0 %v1987
  %v1989 = vpop.xlane.xlu0 %1988
  %v1990 = vsel %vm616, %v1830, 0.0
  %1991 = vadd.xlane.f32.xlu0 %v1990
  %v1992 = vpop.xlane.xlu0 %1991
  %v1993 = vsel %vm616, %v1832, 0.0
  %1994 = vadd.xlane.f32.xlu0 %v1993
  %v1995 = vpop.xlane.xlu0 %1994
  %v1996 = vsel %vm616, %v1834, 0.0
  %1997 = vadd.xlane.f32.xlu0 %v1996
  %v1998 = vpop.xlane.xlu0 %1997
  %v1999 = vsel %vm616, %v1836, 0.0
  %2000 = vadd.xlane.f32.xlu0 %v1999
  %v2001 = vpop.xlane.xlu0 %2000
  %v2002 = vsel %vm616, %v1838, 0.0
  %2003 = vadd.xlane.f32.xlu0 %v2002
  %v2004 = vpop.xlane.xlu0 %2003
  %v2005 = vsel %vm616, %v1840, 0.0
  %2006 = vadd.xlane.f32.xlu0 %v2005
  %v2007 = vpop.xlane.xlu0 %2006
  %v2008 = vsel %vm616, %v1842, 0.0
  %2009 = vadd.xlane.f32.xlu0 %v2008
  %v2010 = vpop.xlane.xlu0 %2009
  %v2011 = vsel %vm616, %v1844, 0.0
  %2012 = vadd.xlane.f32.xlu0 %v2011
  %v2013 = vpop.xlane.xlu0 %2012
  %v2014 = vsel %vm616, %v1846, 0.0
  %2015 = vadd.xlane.f32.xlu0 %v2014
  %v2016 = vpop.xlane.xlu0 %2015
  %v2017 = vsel %vm616, %v1848, 0.0
  %2018 = vadd.xlane.f32.xlu0 %v2017
  %v2019 = vpop.xlane.xlu0 %2018
  %v2020 = vsel %vm616, %v1850, 0.0
  %2021 = vadd.xlane.f32.xlu0 %v2020
  %v2022 = vpop.xlane.xlu0 %2021
  %v2023 = vsel %vm616, %v1852, 0.0
  %2024 = vadd.xlane.f32.xlu0 %v2023
  %v2025 = vpop.xlane.xlu0 %2024
  %v2026 = vsel %vm616, %v1854, 0.0
  %2027 = vadd.xlane.f32.xlu0 %v2026
  %v2028 = vpop.xlane.xlu0 %2027
  %v2029 = vsel %vm616, %v1856, 0.0
  %2030 = vadd.xlane.f32.xlu0 %v2029
  %v2031 = vpop.xlane.xlu0 %2030
  %v2032 = vsel %vm616, %v1858, 0.0
  %2033 = vadd.xlane.f32.xlu0 %v2032
  %v2034 = vpop.xlane.xlu0 %2033
  %v2035 = vsel %vm616, %v1860, 0.0
  %2036 = vadd.xlane.f32.xlu0 %v2035
  %v2037 = vpop.xlane.xlu0 %2036
  %v2038 = vsel %vm616, %v1862, 0.0
  %2039 = vadd.xlane.f32.xlu0 %v2038
  %v2040 = vpop.xlane.xlu0 %2039
  %v2041 = vsel %vm616, %v1864, 0.0
  %2042 = vadd.xlane.f32.xlu0 %v2041
  %v2043 = vpop.xlane.xlu0 %2042
  %v2044 = vsel %vm616, %v1866, 0.0
  %2045 = vadd.xlane.f32.xlu0 %v2044
  %v2046 = vpop.xlane.xlu0 %2045
  %v2047 = vsel %vm616, %v1868, 0.0
  %2048 = vadd.xlane.f32.xlu0 %v2047
  %v2049 = vpop.xlane.xlu0 %2048
  %v2050 = vsel %vm616, %v1870, 0.0
  %2051 = vadd.xlane.f32.xlu0 %v2050
  %v2052 = vpop.xlane.xlu0 %2051
  %v2053 = vsel %vm616, %v1872, 0.0
  %2054 = vadd.xlane.f32.xlu0 %v2053
  %v2055 = vpop.xlane.xlu0 %2054
  %v2056 = vsel %vm616, %v1874, 0.0
  %2057 = vadd.xlane.f32.xlu0 %v2056
  %v2058 = vpop.xlane.xlu0 %2057
  %v2059 = vsel %vm616, %v1876, 0.0
  %2060 = vadd.xlane.f32.xlu0 %v2059
  %v2061 = vpop.xlane.xlu0 %2060
  %v2062 = vsel %vm616, %v1878, 0.0
  %2063 = vadd.xlane.f32.xlu0 %v2062
  %v2064 = vpop.xlane.xlu0 %2063
  %v2065 = vsel %vm616, %v1880, 0.0
  %2066 = vadd.xlane.f32.xlu0 %v2065
  %v2067 = vpop.xlane.xlu0 %2066
  %v2068 = vsel %vm616, %v1882, 0.0
  %2069 = vadd.xlane.f32.xlu0 %v2068
  %v2070 = vpop.xlane.xlu0 %2069
  %v2071 = vsel %vm616, %v1884, 0.0
  %2072 = vadd.xlane.f32.xlu0 %v2071
  %v2073 = vpop.xlane.xlu0 %2072
  %v2074 = vsel %vm616, %v1886, 0.0
  %2075 = vadd.xlane.f32.xlu0 %v2074
  %v2076 = vpop.xlane.xlu0 %2075
  %v2077 = vsel %vm616, %v1888, 0.0
  %2078 = vadd.xlane.f32.xlu0 %v2077
  %v2079 = vpop.xlane.xlu0 %2078
  %v2080 = vsel %vm616, %v1890, 0.0
  %2081 = vadd.xlane.f32.xlu0 %v2080
  %v2082 = vpop.xlane.xlu0 %2081
  %v2083 = vrcp.pop %v1893
  %v2084 = vrcp.pop %v1896
  %v2085 = vrcp.pop %v1899
  %v2086 = vrcp.pop %v1902
  %v2087 = vrcp.pop %v1905
  %v2088 = vrcp.pop %v1908
  %v2089 = vrcp.pop %v1911
  %v2090 = vrcp.pop %v1914
  %v2091 = vrcp.pop %v1917
  %v2092 = vrcp.pop %v1920
  %v2093 = vrcp.pop %v1923
  %v2094 = vrcp.pop %v1926
  %v2095 = vrcp.pop %v1929
  %v2096 = vrcp.pop %v1932
  %v2097 = vrcp.pop %v1935
  %v2098 = vrcp.pop %v1938
  %v2099 = vrcp.pop %v1941
  %v2100 = vrcp.pop %v1944
  %v2101 = vrcp.pop %v1947
  %v2102 = vrcp.pop %v1950
  %v2103 = vrcp.pop %v1953
  %v2104 = vrcp.pop %v1956
  %v2105 = vrcp.pop %v1959
  %v2106 = vrcp.pop %v1962
  %v2107 = vrcp.pop %v1965
  %v2108 = vrcp.pop %v1968
  %v2109 = vrcp.pop %v1971
  %v2110 = vrcp.pop %v1974
  %v2111 = vrcp.pop %v1977
  %v2112 = vrcp.pop %v1980
  %v2113 = vrcp.pop %v1983
  %v2114 = vrcp.pop %v1986
  %v2115 = vrcp.pop %v1989
  %v2116 = vrcp.pop %v1992
  %v2117 = vrcp.pop %v1995
  %v2118 = vrcp.pop %v1998
  %v2119 = vrcp.pop %v2001
  %v2120 = vrcp.pop %v2004
  %v2121 = vrcp.pop %v2007
  %v2122 = vrcp.pop %v2010
  %v2123 = vrcp.pop %v2013
  %v2124 = vrcp.pop %v2016
  %v2125 = vrcp.pop %v2019
  %v2126 = vrcp.pop %v2022
  %v2127 = vrcp.pop %v2025
  %v2128 = vrcp.pop %v2028
  %v2129 = vrcp.pop %v2031
  %v2130 = vrcp.pop %v2034
  %v2131 = vrcp.pop %v2037
  %v2132 = vrcp.pop %v2040
  %v2133 = vrcp.pop %v2043
  %v2134 = vrcp.pop %v2046
  %v2135 = vrcp.pop %v2049
  %v2136 = vrcp.pop %v2052
  %v2137 = vrcp.pop %v2055
  %v2138 = vrcp.pop %v2058
  %v2139 = vrcp.pop %v2061
  %v2140 = vrcp.pop %v2064
  %v2141 = vrcp.pop %v2067
  %v2142 = vrcp.pop %v2070
  %v2143 = vrcp.pop %v2073
  %v2144 = vrcp.pop %v2076
  %v2145 = vrcp.pop %v2079
  %v2146 = vrcp.pop %v2082
  %v2147 = vmul.f32 %v1764, %v2083
  %v2148 = vmul.f32 %v1766, %v2084
  %v2149 = vmul.f32 %v1768, %v2085
  %v2150 = vmul.f32 %v1770, %v2086
  %v2151 = vmul.f32 %v1772, %v2087
  %v2152 = vmul.f32 %v1774, %v2088
  %v2153 = vmul.f32 %v1776, %v2089
  %v2154 = vmul.f32 %v1778, %v2090
  %v2155 = vmul.f32 %v1780, %v2091
  %v2156 = vmul.f32 %v1782, %v2092
  %v2157 = vmul.f32 %v1784, %v2093
  %v2158 = vmul.f32 %v1786, %v2094
  %v2159 = vmul.f32 %v1788, %v2095
  %v2160 = vmul.f32 %v1790, %v2096
  %v2161 = vmul.f32 %v1792, %v2097
  %v2162 = vmul.f32 %v1794, %v2098
  %v2163 = vmul.f32 %v1796, %v2099
  %v2164 = vmul.f32 %v1798, %v2100
  %v2165 = vmul.f32 %v1800, %v2101
  %v2166 = vmul.f32 %v1802, %v2102
  %v2167 = vmul.f32 %v1804, %v2103
  %v2168 = vmul.f32 %v1806, %v2104
  %v2169 = vmul.f32 %v1808, %v2105
  %v2170 = vmul.f32 %v1810, %v2106
  %v2171 = vmul.f32 %v1812, %v2107
  %v2172 = vmul.f32 %v1814, %v2108
  %v2173 = vmul.f32 %v1816, %v2109
  %v2174 = vmul.f32 %v1818, %v2110
  %v2175 = vmul.f32 %v1820, %v2111
  %v2176 = vmul.f32 %v1822, %v2112
  %v2177 = vmul.f32 %v1824, %v2113
  %v2178 = vmul.f32 %v1826, %v2114
  %v2179 = vmul.f32 %v1828, %v2115
  %v2180 = vmul.f32 %v1830, %v2116
  %v2181 = vmul.f32 %v1832, %v2117
  %v2182 = vmul.f32 %v1834, %v2118
  %v2183 = vmul.f32 %v1836, %v2119
  %v2184 = vmul.f32 %v1838, %v2120
  %v2185 = vmul.f32 %v1840, %v2121
  %v2186 = vmul.f32 %v1842, %v2122
  %v2187 = vmul.f32 %v1844, %v2123
  %v2188 = vmul.f32 %v1846, %v2124
  %v2189 = vmul.f32 %v1848, %v2125
  %v2190 = vmul.f32 %v1850, %v2126
  %v2191 = vmul.f32 %v1852, %v2127
  %v2192 = vmul.f32 %v1854, %v2128
  %v2193 = vmul.f32 %v1856, %v2129
  %v2194 = vmul.f32 %v1858, %v2130
  %v2195 = vmul.f32 %v1860, %v2131
  %v2196 = vmul.f32 %v1862, %v2132
  %v2197 = vmul.f32 %v1864, %v2133
  %v2198 = vmul.f32 %v1866, %v2134
  %v2199 = vmul.f32 %v1868, %v2135
  %v2200 = vmul.f32 %v1870, %v2136
  %v2201 = vmul.f32 %v1872, %v2137
  %v2202 = vmul.f32 %v1874, %v2138
  %v2203 = vmul.f32 %v1876, %v2139
  %v2204 = vmul.f32 %v1878, %v2140
  %v2205 = vmul.f32 %v1880, %v2141
  %v2206 = vmul.f32 %v1882, %v2142
  %v2207 = vmul.f32 %v1884, %v2143
  %v2208 = vmul.f32 %v1886, %v2144
  %v2209 = vmul.f32 %v1888, %v2145
  %v2210 = vmul.f32 %v1890, %v2146
  %v2211 = vpack.c.bf16 %v2147, %v2147
  %v2212 = vpack.c.bf16 %v2148, %v2148
  %v2213 = vpack.c.bf16 %v2149, %v2149
  %v2214 = vpack.c.bf16 %v2150, %v2150
  %v2215 = vpack.c.bf16 %v2151, %v2151
  %v2216 = vpack.c.bf16 %v2152, %v2152
  %v2217 = vpack.c.bf16 %v2153, %v2153
  %v2218 = vpack.c.bf16 %v2154, %v2154
  %v2219 = vpack.c.bf16 %v2155, %v2155
  %v2220 = vpack.c.bf16 %v2156, %v2156
  %v2221 = vpack.c.bf16 %v2157, %v2157
  %v2222 = vpack.c.bf16 %v2158, %v2158
  %v2223 = vpack.c.bf16 %v2159, %v2159
  %v2224 = vpack.c.bf16 %v2160, %v2160
  %v2225 = vpack.c.bf16 %v2161, %v2161
  %v2226 = vpack.c.bf16 %v2162, %v2162
  %v2227 = vpack.c.bf16 %v2163, %v2163
  %v2228 = vpack.c.bf16 %v2164, %v2164
  %v2229 = vpack.c.bf16 %v2165, %v2165
  %v2230 = vpack.c.bf16 %v2166, %v2166
  %v2231 = vpack.c.bf16 %v2167, %v2167
  %v2232 = vpack.c.bf16 %v2168, %v2168
  %v2233 = vpack.c.bf16 %v2169, %v2169
  %v2234 = vpack.c.bf16 %v2170, %v2170
  %v2235 = vpack.c.bf16 %v2171, %v2171
  %v2236 = vpack.c.bf16 %v2172, %v2172
  %v2237 = vpack.c.bf16 %v2173, %v2173
  %v2238 = vpack.c.bf16 %v2174, %v2174
  %v2239 = vpack.c.bf16 %v2175, %v2175
  %v2240 = vpack.c.bf16 %v2176, %v2176
  %v2241 = vpack.c.bf16 %v2177, %v2177
  %v2242 = vpack.c.bf16 %v2178, %v2178
  %v2243 = vpack.c.bf16 %v2179, %v2179
  %v2244 = vpack.c.bf16 %v2180, %v2180
  %v2245 = vpack.c.bf16 %v2181, %v2181
  %v2246 = vpack.c.bf16 %v2182, %v2182
  %v2247 = vpack.c.bf16 %v2183, %v2183
  %v2248 = vpack.c.bf16 %v2184, %v2184
  %v2249 = vpack.c.bf16 %v2185, %v2185
  %v2250 = vpack.c.bf16 %v2186, %v2186
  %v2251 = vpack.c.bf16 %v2187, %v2187
  %v2252 = vpack.c.bf16 %v2188, %v2188
  %v2253 = vpack.c.bf16 %v2189, %v2189
  %v2254 = vpack.c.bf16 %v2190, %v2190
  %v2255 = vpack.c.bf16 %v2191, %v2191
  %v2256 = vpack.c.bf16 %v2192, %v2192
  %v2257 = vpack.c.bf16 %v2193, %v2193
  %v2258 = vpack.c.bf16 %v2194, %v2194
  %v2259 = vpack.c.bf16 %v2195, %v2195
  %v2260 = vpack.c.bf16 %v2196, %v2196
  %v2261 = vpack.c.bf16 %v2197, %v2197
  %v2262 = vpack.c.bf16 %v2198, %v2198
  %v2263 = vpack.c.bf16 %v2199, %v2199
  %v2264 = vpack.c.bf16 %v2200, %v2200
  %v2265 = vpack.c.bf16 %v2201, %v2201
  %v2266 = vpack.c.bf16 %v2202, %v2202
  %v2267 = vpack.c.bf16 %v2203, %v2203
  %v2268 = vpack.c.bf16 %v2204, %v2204
  %v2269 = vpack.c.bf16 %v2205, %v2205
  %v2270 = vpack.c.bf16 %v2206, %v2206
  %v2271 = vpack.c.bf16 %v2207, %v2207
  %v2272 = vpack.c.bf16 %v2208, %v2208
  %v2273 = vpack.c.bf16 %v2209, %v2209
  %v2274 = vpack.c.bf16 %v2210, %v2210
  %v2277 = vunpack.c.l.b16 %v2211
  %v2278 = vunpack.c.l.b16 %v2212
  %v2279 = vpack.c.b16 %v2278, %v2277
  %v2280 = vunpack.c.l.b16 %v291
  %v2281 = vunpack.c.l.b16 %v293
  %v2282 = vpack.c.b16 %v2281, %v2280
  %v2285 = vsel %vm616, %v2279, 0
  %2287 = vmatpush.bf16.msra.mxu0 0
  %2288 = vmatpush.bf16.msra.mxu0 0
  %2289 = vmatpush.bf16.msra.mxu0 0
  %2290 = vmatpush.bf16.msra.mxu0 0
  %2291 = vmatpush.bf16.msra.mxu0 0
  %2292 = vmatpush.bf16.msra.mxu0 0
  %2293 = vmatpush.bf16.msra.mxu0 0
  %2294 = vmatpush.bf16.msra.mxu0 %v2282
  %2295 = vmatmul.bf16.gmra.mxu0 %v2285
  %v2296 = vpop.f32.mrf.mxu0
  %v2297 = vadd.f32 0.0, %v2296
  %v2298 = vpop.f32.mrf.mxu0
  %v2299 = vadd.f32 0.0, %v2298
  %2300 = vdwg.mxu0
  %v2303 = vunpack.c.l.b16 %v2213
  %v2304 = vunpack.c.l.b16 %v2214
  %v2305 = vpack.c.b16 %v2304, %v2303
  %v2306 = vunpack.c.l.b16 %v295
  %v2307 = vunpack.c.l.b16 %v297
  %v2308 = vpack.c.b16 %v2307, %v2306
  %v2311 = vsel %vm616, %v2305, 0
  %2313 = vmatpush.bf16.msra.mxu0 0
  %2314 = vmatpush.bf16.msra.mxu0 0
  %2315 = vmatpush.bf16.msra.mxu0 0
  %2316 = vmatpush.bf16.msra.mxu0 0
  %2317 = vmatpush.bf16.msra.mxu0 0
  %2318 = vmatpush.bf16.msra.mxu0 0
  %2319 = vmatpush.bf16.msra.mxu0 0
  %2320 = vmatpush.bf16.msra.mxu0 %v2308
  %2321 = vmatmul.bf16.gmra.mxu0 %v2311
  %v2322 = vpop.f32.mrf.mxu0
  %v2323 = vadd.f32 0.0, %v2322
  %v2324 = vpop.f32.mrf.mxu0
  %v2325 = vadd.f32 0.0, %v2324
  %2326 = vdwg.mxu0
  %v2329 = vunpack.c.l.b16 %v2215
  %v2330 = vunpack.c.l.b16 %v2216
  %v2331 = vpack.c.b16 %v2330, %v2329
  %v2332 = vunpack.c.l.b16 %v299
  %v2333 = vunpack.c.l.b16 %v301
  %v2334 = vpack.c.b16 %v2333, %v2332
  %v2337 = vsel %vm616, %v2331, 0
  %2339 = vmatpush.bf16.msra.mxu0 0
  %2340 = vmatpush.bf16.msra.mxu0 0
  %2341 = vmatpush.bf16.msra.mxu0 0
  %2342 = vmatpush.bf16.msra.mxu0 0
  %2343 = vmatpush.bf16.msra.mxu0 0
  %2344 = vmatpush.bf16.msra.mxu0 0
  %2345 = vmatpush.bf16.msra.mxu0 0
  %2346 = vmatpush.bf16.msra.mxu0 %v2334
  %2347 = vmatmul.bf16.gmra.mxu0 %v2337
  %v2348 = vpop.f32.mrf.mxu0
  %v2349 = vadd.f32 0.0, %v2348
  %v2350 = vpop.f32.mrf.mxu0
  %v2351 = vadd.f32 0.0, %v2350
  %2352 = vdwg.mxu0
  %v2355 = vunpack.c.l.b16 %v2217
  %v2356 = vunpack.c.l.b16 %v2218
  %v2357 = vpack.c.b16 %v2356, %v2355
  %v2358 = vunpack.c.l.b16 %v303
  %v2359 = vunpack.c.l.b16 %v305
  %v2360 = vpack.c.b16 %v2359, %v2358
  %v2363 = vsel %vm616, %v2357, 0
  %2365 = vmatpush.bf16.msra.mxu0 0
  %2366 = vmatpush.bf16.msra.mxu0 0
  %2367 = vmatpush.bf16.msra.mxu0 0
  %2368 = vmatpush.bf16.msra.mxu0 0
  %2369 = vmatpush.bf16.msra.mxu0 0
  %2370 = vmatpush.bf16.msra.mxu0 0
  %2371 = vmatpush.bf16.msra.mxu0 0
  %2372 = vmatpush.bf16.msra.mxu0 %v2360
  %2373 = vmatmul.bf16.gmra.mxu0 %v2363
  %v2374 = vpop.f32.mrf.mxu0
  %v2375 = vadd.f32 0.0, %v2374
  %v2376 = vpop.f32.mrf.mxu0
  %v2377 = vadd.f32 0.0, %v2376
  %2378 = vdwg.mxu0
  %v2381 = vunpack.c.l.b16 %v2219
  %v2382 = vunpack.c.l.b16 %v2220
  %v2383 = vpack.c.b16 %v2382, %v2381
  %v2384 = vunpack.c.l.b16 %v499
  %v2385 = vunpack.c.l.b16 %v501
  %v2386 = vpack.c.b16 %v2385, %v2384
  %v2389 = vsel %vm616, %v2383, 0
  %2391 = vmatpush.bf16.msra.mxu0 0
  %2392 = vmatpush.bf16.msra.mxu0 0
  %2393 = vmatpush.bf16.msra.mxu0 0
  %2394 = vmatpush.bf16.msra.mxu0 0
  %2395 = vmatpush.bf16.msra.mxu0 0
  %2396 = vmatpush.bf16.msra.mxu0 0
  %2397 = vmatpush.bf16.msra.mxu0 0
  %2398 = vmatpush.bf16.msra.mxu0 %v2386
  %2399 = vmatmul.bf16.gmra.mxu0 %v2389
  %v2400 = vpop.f32.mrf.mxu0
  %v2401 = vadd.f32 0.0, %v2400
  %v2402 = vpop.f32.mrf.mxu0
  %v2403 = vadd.f32 0.0, %v2402
  %2404 = vdwg.mxu0
  %v2407 = vunpack.c.l.b16 %v2221
  %v2408 = vunpack.c.l.b16 %v2222
  %v2409 = vpack.c.b16 %v2408, %v2407
  %v2410 = vunpack.c.l.b16 %v503
  %v2411 = vunpack.c.l.b16 %v505
  %v2412 = vpack.c.b16 %v2411, %v2410
  %v2415 = vsel %vm616, %v2409, 0
  %2417 = vmatpush.bf16.msra.mxu0 0
  %2418 = vmatpush.bf16.msra.mxu0 0
  %2419 = vmatpush.bf16.msra.mxu0 0
  %2420 = vmatpush.bf16.msra.mxu0 0
  %2421 = vmatpush.bf16.msra.mxu0 0
  %2422 = vmatpush.bf16.msra.mxu0 0
  %2423 = vmatpush.bf16.msra.mxu0 0
  %2424 = vmatpush.bf16.msra.mxu0 %v2412
  %2425 = vmatmul.bf16.gmra.mxu0 %v2415
  %v2426 = vpop.f32.mrf.mxu0
  %v2427 = vadd.f32 0.0, %v2426
  %v2428 = vpop.f32.mrf.mxu0
  %v2429 = vadd.f32 0.0, %v2428
  %2430 = vdwg.mxu0
  %v2433 = vunpack.c.l.b16 %v2223
  %v2434 = vunpack.c.l.b16 %v2224
  %v2435 = vpack.c.b16 %v2434, %v2433
  %v2436 = vunpack.c.l.b16 %v507
  %v2437 = vunpack.c.l.b16 %v509
  %v2438 = vpack.c.b16 %v2437, %v2436
  %v2441 = vsel %vm616, %v2435, 0
  %2443 = vmatpush.bf16.msra.mxu0 0
  %2444 = vmatpush.bf16.msra.mxu0 0
  %2445 = vmatpush.bf16.msra.mxu0 0
  %2446 = vmatpush.bf16.msra.mxu0 0
  %2447 = vmatpush.bf16.msra.mxu0 0
  %2448 = vmatpush.bf16.msra.mxu0 0
  %2449 = vmatpush.bf16.msra.mxu0 0
  %2450 = vmatpush.bf16.msra.mxu0 %v2438
  %2451 = vmatmul.bf16.gmra.mxu0 %v2441
  %v2452 = vpop.f32.mrf.mxu0
  %v2453 = vadd.f32 0.0, %v2452
  %v2454 = vpop.f32.mrf.mxu0
  %v2455 = vadd.f32 0.0, %v2454
  %2456 = vdwg.mxu0
  %v2459 = vunpack.c.l.b16 %v2225
  %v2460 = vunpack.c.l.b16 %v2226
  %v2461 = vpack.c.b16 %v2460, %v2459
  %v2462 = vunpack.c.l.b16 %v511
  %v2463 = vunpack.c.l.b16 %v513
  %v2464 = vpack.c.b16 %v2463, %v2462
  %v2467 = vsel %vm616, %v2461, 0
  %2469 = vmatpush.bf16.msra.mxu0 0
  %2470 = vmatpush.bf16.msra.mxu0 0
  %2471 = vmatpush.bf16.msra.mxu0 0
  %2472 = vmatpush.bf16.msra.mxu0 0
  %2473 = vmatpush.bf16.msra.mxu0 0
  %2474 = vmatpush.bf16.msra.mxu0 0
  %2475 = vmatpush.bf16.msra.mxu0 0
  %2476 = vmatpush.bf16.msra.mxu0 %v2464
  %2477 = vmatmul.bf16.gmra.mxu0 %v2467
  %v2478 = vpop.f32.mrf.mxu0
  %v2479 = vadd.f32 0.0, %v2478
  %v2480 = vpop.f32.mrf.mxu0
  %v2481 = vadd.f32 0.0, %v2480
  %2482 = vdwg.mxu0
  %v2485 = vunpack.c.l.b16 %v2227
  %v2486 = vunpack.c.l.b16 %v2228
  %v2487 = vpack.c.b16 %v2486, %v2485
  %v2488 = vunpack.c.l.b16 %v515
  %v2489 = vunpack.c.l.b16 %v517
  %v2490 = vpack.c.b16 %v2489, %v2488
  %v2493 = vsel %vm616, %v2487, 0
  %2495 = vmatpush.bf16.msra.mxu0 0
  %2496 = vmatpush.bf16.msra.mxu0 0
  %2497 = vmatpush.bf16.msra.mxu0 0
  %2498 = vmatpush.bf16.msra.mxu0 0
  %2499 = vmatpush.bf16.msra.mxu0 0
  %2500 = vmatpush.bf16.msra.mxu0 0
  %2501 = vmatpush.bf16.msra.mxu0 0
  %2502 = vmatpush.bf16.msra.mxu0 %v2490
  %2503 = vmatmul.bf16.gmra.mxu0 %v2493
  %v2504 = vpop.f32.mrf.mxu0
  %v2505 = vadd.f32 0.0, %v2504
  %v2506 = vpop.f32.mrf.mxu0
  %v2507 = vadd.f32 0.0, %v2506
  %2508 = vdwg.mxu0
  %v2511 = vunpack.c.l.b16 %v2229
  %v2512 = vunpack.c.l.b16 %v2230
  %v2513 = vpack.c.b16 %v2512, %v2511
  %v2514 = vunpack.c.l.b16 %v519
  %v2515 = vunpack.c.l.b16 %v521
  %v2516 = vpack.c.b16 %v2515, %v2514
  %v2519 = vsel %vm616, %v2513, 0
  %2521 = vmatpush.bf16.msra.mxu0 0
  %2522 = vmatpush.bf16.msra.mxu0 0
  %2523 = vmatpush.bf16.msra.mxu0 0
  %2524 = vmatpush.bf16.msra.mxu0 0
  %2525 = vmatpush.bf16.msra.mxu0 0
  %2526 = vmatpush.bf16.msra.mxu0 0
  %2527 = vmatpush.bf16.msra.mxu0 0
  %2528 = vmatpush.bf16.msra.mxu0 %v2516
  %2529 = vmatmul.bf16.gmra.mxu0 %v2519
  %v2530 = vpop.f32.mrf.mxu0
  %v2531 = vadd.f32 0.0, %v2530
  %v2532 = vpop.f32.mrf.mxu0
  %v2533 = vadd.f32 0.0, %v2532
  %2534 = vdwg.mxu0
  %v2537 = vunpack.c.l.b16 %v2231
  %v2538 = vunpack.c.l.b16 %v2232
  %v2539 = vpack.c.b16 %v2538, %v2537
  %v2540 = vunpack.c.l.b16 %v523
  %v2541 = vunpack.c.l.b16 %v525
  %v2542 = vpack.c.b16 %v2541, %v2540
  %v2545 = vsel %vm616, %v2539, 0
  %2547 = vmatpush.bf16.msra.mxu0 0
  %2548 = vmatpush.bf16.msra.mxu0 0
  %2549 = vmatpush.bf16.msra.mxu0 0
  %2550 = vmatpush.bf16.msra.mxu0 0
  %2551 = vmatpush.bf16.msra.mxu0 0
  %2552 = vmatpush.bf16.msra.mxu0 0
  %2553 = vmatpush.bf16.msra.mxu0 0
  %2554 = vmatpush.bf16.msra.mxu0 %v2542
  %2555 = vmatmul.bf16.gmra.mxu0 %v2545
  %v2556 = vpop.f32.mrf.mxu0
  %v2557 = vadd.f32 0.0, %v2556
  %v2558 = vpop.f32.mrf.mxu0
  %v2559 = vadd.f32 0.0, %v2558
  %2560 = vdwg.mxu0
  %v2563 = vunpack.c.l.b16 %v2233
  %v2564 = vunpack.c.l.b16 %v2234
  %v2565 = vpack.c.b16 %v2564, %v2563
  %v2566 = vunpack.c.l.b16 %v527
  %v2567 = vunpack.c.l.b16 %v529
  %v2568 = vpack.c.b16 %v2567, %v2566
  %v2571 = vsel %vm616, %v2565, 0
  %2573 = vmatpush.bf16.msra.mxu0 0
  %2574 = vmatpush.bf16.msra.mxu0 0
  %2575 = vmatpush.bf16.msra.mxu0 0
  %2576 = vmatpush.bf16.msra.mxu0 0
  %2577 = vmatpush.bf16.msra.mxu0 0
  %2578 = vmatpush.bf16.msra.mxu0 0
  %2579 = vmatpush.bf16.msra.mxu0 0
  %2580 = vmatpush.bf16.msra.mxu0 %v2568
  %2581 = vmatmul.bf16.gmra.mxu0 %v2571
  %v2582 = vpop.f32.mrf.mxu0
  %v2583 = vadd.f32 0.0, %v2582
  %v2584 = vpop.f32.mrf.mxu0
  %v2585 = vadd.f32 0.0, %v2584
  %2586 = vdwg.mxu0
  %v2589 = vunpack.c.l.b16 %v2235
  %v2590 = vunpack.c.l.b16 %v2236
  %v2591 = vpack.c.b16 %v2590, %v2589
  %v2592 = vunpack.c.l.b16 %v531
  %v2593 = vunpack.c.l.b16 %v533
  %v2594 = vpack.c.b16 %v2593, %v2592
  %v2597 = vsel %vm616, %v2591, 0
  %2599 = vmatpush.bf16.msra.mxu0 0
  %2600 = vmatpush.bf16.msra.mxu0 0
  %2601 = vmatpush.bf16.msra.mxu0 0
  %2602 = vmatpush.bf16.msra.mxu0 0
  %2603 = vmatpush.bf16.msra.mxu0 0
  %2604 = vmatpush.bf16.msra.mxu0 0
  %2605 = vmatpush.bf16.msra.mxu0 0
  %2606 = vmatpush.bf16.msra.mxu0 %v2594
  %2607 = vmatmul.bf16.gmra.mxu0 %v2597
  %v2608 = vpop.f32.mrf.mxu0
  %v2609 = vadd.f32 0.0, %v2608
  %v2610 = vpop.f32.mrf.mxu0
  %v2611 = vadd.f32 0.0, %v2610
  %2612 = vdwg.mxu0
  %v2615 = vunpack.c.l.b16 %v2237
  %v2616 = vunpack.c.l.b16 %v2238
  %v2617 = vpack.c.b16 %v2616, %v2615
  %v2618 = vunpack.c.l.b16 %v535
  %v2619 = vunpack.c.l.b16 %v537
  %v2620 = vpack.c.b16 %v2619, %v2618
  %v2623 = vsel %vm616, %v2617, 0
  %2625 = vmatpush.bf16.msra.mxu0 0
  %2626 = vmatpush.bf16.msra.mxu0 0
  %2627 = vmatpush.bf16.msra.mxu0 0
  %2628 = vmatpush.bf16.msra.mxu0 0
  %2629 = vmatpush.bf16.msra.mxu0 0
  %2630 = vmatpush.bf16.msra.mxu0 0
  %2631 = vmatpush.bf16.msra.mxu0 0
  %2632 = vmatpush.bf16.msra.mxu0 %v2620
  %2633 = vmatmul.bf16.gmra.mxu0 %v2623
  %v2634 = vpop.f32.mrf.mxu0
  %v2635 = vadd.f32 0.0, %v2634
  %v2636 = vpop.f32.mrf.mxu0
  %v2637 = vadd.f32 0.0, %v2636
  %2638 = vdwg.mxu0
  %v2641 = vunpack.c.l.b16 %v2239
  %v2642 = vunpack.c.l.b16 %v2240
  %v2643 = vpack.c.b16 %v2642, %v2641
  %v2644 = vunpack.c.l.b16 %v539
  %v2645 = vunpack.c.l.b16 %v541
  %v2646 = vpack.c.b16 %v2645, %v2644
  %v2649 = vsel %vm616, %v2643, 0
  %2651 = vmatpush.bf16.msra.mxu0 0
  %2652 = vmatpush.bf16.msra.mxu0 0
  %2653 = vmatpush.bf16.msra.mxu0 0
  %2654 = vmatpush.bf16.msra.mxu0 0
  %2655 = vmatpush.bf16.msra.mxu0 0
  %2656 = vmatpush.bf16.msra.mxu0 0
  %2657 = vmatpush.bf16.msra.mxu0 0
  %2658 = vmatpush.bf16.msra.mxu0 %v2646
  %2659 = vmatmul.bf16.gmra.mxu0 %v2649
  %v2660 = vpop.f32.mrf.mxu0
  %v2661 = vadd.f32 0.0, %v2660
  %v2662 = vpop.f32.mrf.mxu0
  %v2663 = vadd.f32 0.0, %v2662
  %2664 = vdwg.mxu0
  %v2667 = vunpack.c.l.b16 %v2241
  %v2668 = vunpack.c.l.b16 %v2242
  %v2669 = vpack.c.b16 %v2668, %v2667
  %v2670 = vunpack.c.l.b16 %v543
  %v2671 = vunpack.c.l.b16 %v545
  %v2672 = vpack.c.b16 %v2671, %v2670
  %v2675 = vsel %vm616, %v2669, 0
  %2677 = vmatpush.bf16.msra.mxu0 0
  %2678 = vmatpush.bf16.msra.mxu0 0
  %2679 = vmatpush.bf16.msra.mxu0 0
  %2680 = vmatpush.bf16.msra.mxu0 0
  %2681 = vmatpush.bf16.msra.mxu0 0
  %2682 = vmatpush.bf16.msra.mxu0 0
  %2683 = vmatpush.bf16.msra.mxu0 0
  %2684 = vmatpush.bf16.msra.mxu0 %v2672
  %2685 = vmatmul.bf16.gmra.mxu0 %v2675
  %v2686 = vpop.f32.mrf.mxu0
  %v2687 = vadd.f32 0.0, %v2686
  %v2688 = vpop.f32.mrf.mxu0
  %v2689 = vadd.f32 0.0, %v2688
  %2690 = vdwg.mxu0
  %v2693 = vunpack.c.l.b16 %v2243
  %v2694 = vunpack.c.l.b16 %v2244
  %v2695 = vpack.c.b16 %v2694, %v2693
  %v2696 = vunpack.c.l.b16 %v547
  %v2697 = vunpack.c.l.b16 %v549
  %v2698 = vpack.c.b16 %v2697, %v2696
  %v2701 = vsel %vm616, %v2695, 0
  %2703 = vmatpush.bf16.msra.mxu0 0
  %2704 = vmatpush.bf16.msra.mxu0 0
  %2705 = vmatpush.bf16.msra.mxu0 0
  %2706 = vmatpush.bf16.msra.mxu0 0
  %2707 = vmatpush.bf16.msra.mxu0 0
  %2708 = vmatpush.bf16.msra.mxu0 0
  %2709 = vmatpush.bf16.msra.mxu0 0
  %2710 = vmatpush.bf16.msra.mxu0 %v2698
  %2711 = vmatmul.bf16.gmra.mxu0 %v2701
  %v2712 = vpop.f32.mrf.mxu0
  %v2713 = vadd.f32 0.0, %v2712
  %v2714 = vpop.f32.mrf.mxu0
  %v2715 = vadd.f32 0.0, %v2714
  %2716 = vdwg.mxu0
  %v2719 = vunpack.c.l.b16 %v2245
  %v2720 = vunpack.c.l.b16 %v2246
  %v2721 = vpack.c.b16 %v2720, %v2719
  %v2722 = vunpack.c.l.b16 %v551
  %v2723 = vunpack.c.l.b16 %v553
  %v2724 = vpack.c.b16 %v2723, %v2722
  %v2727 = vsel %vm616, %v2721, 0
  %2729 = vmatpush.bf16.msra.mxu0 0
  %2730 = vmatpush.bf16.msra.mxu0 0
  %2731 = vmatpush.bf16.msra.mxu0 0
  %2732 = vmatpush.bf16.msra.mxu0 0
  %2733 = vmatpush.bf16.msra.mxu0 0
  %2734 = vmatpush.bf16.msra.mxu0 0
  %2735 = vmatpush.bf16.msra.mxu0 0
  %2736 = vmatpush.bf16.msra.mxu0 %v2724
  %2737 = vmatmul.bf16.gmra.mxu0 %v2727
  %v2738 = vpop.f32.mrf.mxu0
  %v2739 = vadd.f32 0.0, %v2738
  %v2740 = vpop.f32.mrf.mxu0
  %v2741 = vadd.f32 0.0, %v2740
  %2742 = vdwg.mxu0
  %v2745 = vunpack.c.l.b16 %v2247
  %v2746 = vunpack.c.l.b16 %v2248
  %v2747 = vpack.c.b16 %v2746, %v2745
  %v2748 = vunpack.c.l.b16 %v555
  %v2749 = vunpack.c.l.b16 %v557
  %v2750 = vpack.c.b16 %v2749, %v2748
  %v2753 = vsel %vm616, %v2747, 0
  %2755 = vmatpush.bf16.msra.mxu0 0
  %2756 = vmatpush.bf16.msra.mxu0 0
  %2757 = vmatpush.bf16.msra.mxu0 0
  %2758 = vmatpush.bf16.msra.mxu0 0
  %2759 = vmatpush.bf16.msra.mxu0 0
  %2760 = vmatpush.bf16.msra.mxu0 0
  %2761 = vmatpush.bf16.msra.mxu0 0
  %2762 = vmatpush.bf16.msra.mxu0 %v2750
  %2763 = vmatmul.bf16.gmra.mxu0 %v2753
  %v2764 = vpop.f32.mrf.mxu0
  %v2765 = vadd.f32 0.0, %v2764
  %v2766 = vpop.f32.mrf.mxu0
  %v2767 = vadd.f32 0.0, %v2766
  %2768 = vdwg.mxu0
  %v2771 = vunpack.c.l.b16 %v2249
  %v2772 = vunpack.c.l.b16 %v2250
  %v2773 = vpack.c.b16 %v2772, %v2771
  %v2774 = vunpack.c.l.b16 %v559
  %v2775 = vunpack.c.l.b16 %v561
  %v2776 = vpack.c.b16 %v2775, %v2774
  %v2779 = vsel %vm616, %v2773, 0
  %2781 = vmatpush.bf16.msra.mxu0 0
  %2782 = vmatpush.bf16.msra.mxu0 0
  %2783 = vmatpush.bf16.msra.mxu0 0
  %2784 = vmatpush.bf16.msra.mxu0 0
  %2785 = vmatpush.bf16.msra.mxu0 0
  %2786 = vmatpush.bf16.msra.mxu0 0
  %2787 = vmatpush.bf16.msra.mxu0 0
  %2788 = vmatpush.bf16.msra.mxu0 %v2776
  %2789 = vmatmul.bf16.gmra.mxu0 %v2779
  %v2790 = vpop.f32.mrf.mxu0
  %v2791 = vadd.f32 0.0, %v2790
  %v2792 = vpop.f32.mrf.mxu0
  %v2793 = vadd.f32 0.0, %v2792
  %2794 = vdwg.mxu0
  %v2797 = vunpack.c.l.b16 %v2251
  %v2798 = vunpack.c.l.b16 %v2252
  %v2799 = vpack.c.b16 %v2798, %v2797
  %v2800 = vunpack.c.l.b16 %v563
  %v2801 = vunpack.c.l.b16 %v565
  %v2802 = vpack.c.b16 %v2801, %v2800
  %v2805 = vsel %vm616, %v2799, 0
  %2807 = vmatpush.bf16.msra.mxu0 0
  %2808 = vmatpush.bf16.msra.mxu0 0
  %2809 = vmatpush.bf16.msra.mxu0 0
  %2810 = vmatpush.bf16.msra.mxu0 0
  %2811 = vmatpush.bf16.msra.mxu0 0
  %2812 = vmatpush.bf16.msra.mxu0 0
  %2813 = vmatpush.bf16.msra.mxu0 0
  %2814 = vmatpush.bf16.msra.mxu0 %v2802
  %2815 = vmatmul.bf16.gmra.mxu0 %v2805
  %v2816 = vpop.f32.mrf.mxu0
  %v2817 = vadd.f32 0.0, %v2816
  %v2818 = vpop.f32.mrf.mxu0
  %v2819 = vadd.f32 0.0, %v2818
  %2820 = vdwg.mxu0
  %v2823 = vunpack.c.l.b16 %v2253
  %v2824 = vunpack.c.l.b16 %v2254
  %v2825 = vpack.c.b16 %v2824, %v2823
  %v2826 = vunpack.c.l.b16 %v567
  %v2827 = vunpack.c.l.b16 %v569
  %v2828 = vpack.c.b16 %v2827, %v2826
  %v2831 = vsel %vm616, %v2825, 0
  %2833 = vmatpush.bf16.msra.mxu0 0
  %2834 = vmatpush.bf16.msra.mxu0 0
  %2835 = vmatpush.bf16.msra.mxu0 0
  %2836 = vmatpush.bf16.msra.mxu0 0
  %2837 = vmatpush.bf16.msra.mxu0 0
  %2838 = vmatpush.bf16.msra.mxu0 0
  %2839 = vmatpush.bf16.msra.mxu0 0
  %2840 = vmatpush.bf16.msra.mxu0 %v2828
  %2841 = vmatmul.bf16.gmra.mxu0 %v2831
  %v2842 = vpop.f32.mrf.mxu0
  %v2843 = vadd.f32 0.0, %v2842
  %v2844 = vpop.f32.mrf.mxu0
  %v2845 = vadd.f32 0.0, %v2844
  %2846 = vdwg.mxu0
  %v2849 = vunpack.c.l.b16 %v2255
  %v2850 = vunpack.c.l.b16 %v2256
  %v2851 = vpack.c.b16 %v2850, %v2849
  %v2852 = vunpack.c.l.b16 %v571
  %v2853 = vunpack.c.l.b16 %v573
  %v2854 = vpack.c.b16 %v2853, %v2852
  %v2857 = vsel %vm616, %v2851, 0
  %2859 = vmatpush.bf16.msra.mxu0 0
  %2860 = vmatpush.bf16.msra.mxu0 0
  %2861 = vmatpush.bf16.msra.mxu0 0
  %2862 = vmatpush.bf16.msra.mxu0 0
  %2863 = vmatpush.bf16.msra.mxu0 0
  %2864 = vmatpush.bf16.msra.mxu0 0
  %2865 = vmatpush.bf16.msra.mxu0 0
  %2866 = vmatpush.bf16.msra.mxu0 %v2854
  %2867 = vmatmul.bf16.gmra.mxu0 %v2857
  %v2868 = vpop.f32.mrf.mxu0
  %v2869 = vadd.f32 0.0, %v2868
  %v2870 = vpop.f32.mrf.mxu0
  %v2871 = vadd.f32 0.0, %v2870
  %2872 = vdwg.mxu0
  %v2875 = vunpack.c.l.b16 %v2257
  %v2876 = vunpack.c.l.b16 %v2258
  %v2877 = vpack.c.b16 %v2876, %v2875
  %v2878 = vunpack.c.l.b16 %v575
  %v2879 = vunpack.c.l.b16 %v577
  %v2880 = vpack.c.b16 %v2879, %v2878
  %v2883 = vsel %vm616, %v2877, 0
  %2885 = vmatpush.bf16.msra.mxu0 0
  %2886 = vmatpush.bf16.msra.mxu0 0
  %2887 = vmatpush.bf16.msra.mxu0 0
  %2888 = vmatpush.bf16.msra.mxu0 0
  %2889 = vmatpush.bf16.msra.mxu0 0
  %2890 = vmatpush.bf16.msra.mxu0 0
  %2891 = vmatpush.bf16.msra.mxu0 0
  %2892 = vmatpush.bf16.msra.mxu0 %v2880
  %2893 = vmatmul.bf16.gmra.mxu0 %v2883
  %v2894 = vpop.f32.mrf.mxu0
  %v2895 = vadd.f32 0.0, %v2894
  %v2896 = vpop.f32.mrf.mxu0
  %v2897 = vadd.f32 0.0, %v2896
  %2898 = vdwg.mxu0
  %v2901 = vunpack.c.l.b16 %v2259
  %v2902 = vunpack.c.l.b16 %v2260
  %v2903 = vpack.c.b16 %v2902, %v2901
  %v2904 = vunpack.c.l.b16 %v579
  %v2905 = vunpack.c.l.b16 %v581
  %v2906 = vpack.c.b16 %v2905, %v2904
  %v2909 = vsel %vm616, %v2903, 0
  %2911 = vmatpush.bf16.msra.mxu0 0
  %2912 = vmatpush.bf16.msra.mxu0 0
  %2913 = vmatpush.bf16.msra.mxu0 0
  %2914 = vmatpush.bf16.msra.mxu0 0
  %2915 = vmatpush.bf16.msra.mxu0 0
  %2916 = vmatpush.bf16.msra.mxu0 0
  %2917 = vmatpush.bf16.msra.mxu0 0
  %2918 = vmatpush.bf16.msra.mxu0 %v2906
  %2919 = vmatmul.bf16.gmra.mxu0 %v2909
  %v2920 = vpop.f32.mrf.mxu0
  %v2921 = vadd.f32 0.0, %v2920
  %v2922 = vpop.f32.mrf.mxu0
  %v2923 = vadd.f32 0.0, %v2922
  %2924 = vdwg.mxu0
  %v2927 = vunpack.c.l.b16 %v2261
  %v2928 = vunpack.c.l.b16 %v2262
  %v2929 = vpack.c.b16 %v2928, %v2927
  %v2930 = vunpack.c.l.b16 %v583
  %v2931 = vunpack.c.l.b16 %v585
  %v2932 = vpack.c.b16 %v2931, %v2930
  %v2935 = vsel %vm616, %v2929, 0
  %2937 = vmatpush.bf16.msra.mxu0 0
  %2938 = vmatpush.bf16.msra.mxu0 0
  %2939 = vmatpush.bf16.msra.mxu0 0
  %2940 = vmatpush.bf16.msra.mxu0 0
  %2941 = vmatpush.bf16.msra.mxu0 0
  %2942 = vmatpush.bf16.msra.mxu0 0
  %2943 = vmatpush.bf16.msra.mxu0 0
  %2944 = vmatpush.bf16.msra.mxu0 %v2932
  %2945 = vmatmul.bf16.gmra.mxu0 %v2935
  %v2946 = vpop.f32.mrf.mxu0
  %v2947 = vadd.f32 0.0, %v2946
  %v2948 = vpop.f32.mrf.mxu0
  %v2949 = vadd.f32 0.0, %v2948
  %2950 = vdwg.mxu0
  %v2953 = vunpack.c.l.b16 %v2263
  %v2954 = vunpack.c.l.b16 %v2264
  %v2955 = vpack.c.b16 %v2954, %v2953
  %v2956 = vunpack.c.l.b16 %v587
  %v2957 = vunpack.c.l.b16 %v589
  %v2958 = vpack.c.b16 %v2957, %v2956
  %v2961 = vsel %vm616, %v2955, 0
  %2963 = vmatpush.bf16.msra.mxu0 0
  %2964 = vmatpush.bf16.msra.mxu0 0
  %2965 = vmatpush.bf16.msra.mxu0 0
  %2966 = vmatpush.bf16.msra.mxu0 0
  %2967 = vmatpush.bf16.msra.mxu0 0
  %2968 = vmatpush.bf16.msra.mxu0 0
  %2969 = vmatpush.bf16.msra.mxu0 0
  %2970 = vmatpush.bf16.msra.mxu0 %v2958
  %2971 = vmatmul.bf16.gmra.mxu0 %v2961
  %v2972 = vpop.f32.mrf.mxu0
  %v2973 = vadd.f32 0.0, %v2972
  %v2974 = vpop.f32.mrf.mxu0
  %v2975 = vadd.f32 0.0, %v2974
  %2976 = vdwg.mxu0
  %v2979 = vunpack.c.l.b16 %v2265
  %v2980 = vunpack.c.l.b16 %v2266
  %v2981 = vpack.c.b16 %v2980, %v2979
  %v2982 = vunpack.c.l.b16 %v591
  %v2983 = vunpack.c.l.b16 %v593
  %v2984 = vpack.c.b16 %v2983, %v2982
  %v2987 = vsel %vm616, %v2981, 0
  %2989 = vmatpush.bf16.msra.mxu0 0
  %2990 = vmatpush.bf16.msra.mxu0 0
  %2991 = vmatpush.bf16.msra.mxu0 0
  %2992 = vmatpush.bf16.msra.mxu0 0
  %2993 = vmatpush.bf16.msra.mxu0 0
  %2994 = vmatpush.bf16.msra.mxu0 0
  %2995 = vmatpush.bf16.msra.mxu0 0
  %2996 = vmatpush.bf16.msra.mxu0 %v2984
  %2997 = vmatmul.bf16.gmra.mxu0 %v2987
  %v2998 = vpop.f32.mrf.mxu0
  %v2999 = vadd.f32 0.0, %v2998
  %v3000 = vpop.f32.mrf.mxu0
  %v3001 = vadd.f32 0.0, %v3000
  %3002 = vdwg.mxu0
  %v3005 = vunpack.c.l.b16 %v2267
  %v3006 = vunpack.c.l.b16 %v2268
  %v3007 = vpack.c.b16 %v3006, %v3005
  %v3008 = vunpack.c.l.b16 %v595
  %v3009 = vunpack.c.l.b16 %v597
  %v3010 = vpack.c.b16 %v3009, %v3008
  %v3013 = vsel %vm616, %v3007, 0
  %3015 = vmatpush.bf16.msra.mxu0 0
  %3016 = vmatpush.bf16.msra.mxu0 0
  %3017 = vmatpush.bf16.msra.mxu0 0
  %3018 = vmatpush.bf16.msra.mxu0 0
  %3019 = vmatpush.bf16.msra.mxu0 0
  %3020 = vmatpush.bf16.msra.mxu0 0
  %3021 = vmatpush.bf16.msra.mxu0 0
  %3022 = vmatpush.bf16.msra.mxu0 %v3010
  %3023 = vmatmul.bf16.gmra.mxu0 %v3013
  %v3024 = vpop.f32.mrf.mxu0
  %v3025 = vadd.f32 0.0, %v3024
  %v3026 = vpop.f32.mrf.mxu0
  %v3027 = vadd.f32 0.0, %v3026
  %3028 = vdwg.mxu0
  %v3031 = vunpack.c.l.b16 %v2269
  %v3032 = vunpack.c.l.b16 %v2270
  %v3033 = vpack.c.b16 %v3032, %v3031
  %v3034 = vunpack.c.l.b16 %v599
  %v3035 = vunpack.c.l.b16 %v601
  %v3036 = vpack.c.b16 %v3035, %v3034
  %v3039 = vsel %vm616, %v3033, 0
  %3041 = vmatpush.bf16.msra.mxu0 0
  %3042 = vmatpush.bf16.msra.mxu0 0
  %3043 = vmatpush.bf16.msra.mxu0 0
  %3044 = vmatpush.bf16.msra.mxu0 0
  %3045 = vmatpush.bf16.msra.mxu0 0
  %3046 = vmatpush.bf16.msra.mxu0 0
  %3047 = vmatpush.bf16.msra.mxu0 0
  %3048 = vmatpush.bf16.msra.mxu0 %v3036
  %3049 = vmatmul.bf16.gmra.mxu0 %v3039
  %v3050 = vpop.f32.mrf.mxu0
  %v3051 = vadd.f32 0.0, %v3050
  %v3052 = vpop.f32.mrf.mxu0
  %v3053 = vadd.f32 0.0, %v3052
  %3054 = vdwg.mxu0
  %v3057 = vunpack.c.l.b16 %v2271
  %v3058 = vunpack.c.l.b16 %v2272
  %v3059 = vpack.c.b16 %v3058, %v3057
  %v3060 = vunpack.c.l.b16 %v603
  %v3061 = vunpack.c.l.b16 %v605
  %v3062 = vpack.c.b16 %v3061, %v3060
  %v3065 = vsel %vm616, %v3059, 0
  %3067 = vmatpush.bf16.msra.mxu0 0
  %3068 = vmatpush.bf16.msra.mxu0 0
  %3069 = vmatpush.bf16.msra.mxu0 0
  %3070 = vmatpush.bf16.msra.mxu0 0
  %3071 = vmatpush.bf16.msra.mxu0 0
  %3072 = vmatpush.bf16.msra.mxu0 0
  %3073 = vmatpush.bf16.msra.mxu0 0
  %3074 = vmatpush.bf16.msra.mxu0 %v3062
  %3075 = vmatmul.bf16.gmra.mxu0 %v3065
  %v3076 = vpop.f32.mrf.mxu0
  %v3077 = vadd.f32 0.0, %v3076
  %v3078 = vpop.f32.mrf.mxu0
  %v3079 = vadd.f32 0.0, %v3078
  %3080 = vdwg.mxu0
  %v3083 = vunpack.c.l.b16 %v2273
  %v3084 = vunpack.c.l.b16 %v2274
  %v3085 = vpack.c.b16 %v3084, %v3083
  %v3086 = vunpack.c.l.b16 %v607
  %v3087 = vunpack.c.l.b16 %v609
  %v3088 = vpack.c.b16 %v3087, %v3086
  %v3091 = vsel %vm616, %v3085, 0
  %3093 = vmatpush.bf16.msra.mxu0 0
  %3094 = vmatpush.bf16.msra.mxu0 0
  %3095 = vmatpush.bf16.msra.mxu0 0
  %3096 = vmatpush.bf16.msra.mxu0 0
  %3097 = vmatpush.bf16.msra.mxu0 0
  %3098 = vmatpush.bf16.msra.mxu0 0
  %3099 = vmatpush.bf16.msra.mxu0 0
  %3100 = vmatpush.bf16.msra.mxu0 %v3088
  %3101 = vmatmul.bf16.gmra.mxu0 %v3091
  %v3102 = vpop.f32.mrf.mxu0
  %v3103 = vadd.f32 0.0, %v3102
  %v3104 = vpop.f32.mrf.mxu0
  %v3105 = vadd.f32 0.0, %v3104
  %3106 = vdwg.mxu0
  %v3107 = vpack.c.bf16 %v2297, %v2297
  %v3108 = vpack.c.bf16 %v2299, %v2299
  %v3109 = vpack.c.bf16 %v2323, %v2323
  %v3110 = vpack.c.bf16 %v2325, %v2325
  %v3111 = vpack.c.bf16 %v2349, %v2349
  %v3112 = vpack.c.bf16 %v2351, %v2351
  %v3113 = vpack.c.bf16 %v2375, %v2375
  %v3114 = vpack.c.bf16 %v2377, %v2377
  %v3115 = vpack.c.bf16 %v2401, %v2401
  %v3116 = vpack.c.bf16 %v2403, %v2403
  %v3117 = vpack.c.bf16 %v2427, %v2427
  %v3118 = vpack.c.bf16 %v2429, %v2429
  %v3119 = vpack.c.bf16 %v2453, %v2453
  %v3120 = vpack.c.bf16 %v2455, %v2455
  %v3121 = vpack.c.bf16 %v2479, %v2479
  %v3122 = vpack.c.bf16 %v2481, %v2481
  %v3123 = vpack.c.bf16 %v2505, %v2505
  %v3124 = vpack.c.bf16 %v2507, %v2507
  %v3125 = vpack.c.bf16 %v2531, %v2531
  %v3126 = vpack.c.bf16 %v2533, %v2533
  %v3127 = vpack.c.bf16 %v2557, %v2557
  %v3128 = vpack.c.bf16 %v2559, %v2559
  %v3129 = vpack.c.bf16 %v2583, %v2583
  %v3130 = vpack.c.bf16 %v2585, %v2585
  %v3131 = vpack.c.bf16 %v2609, %v2609
  %v3132 = vpack.c.bf16 %v2611, %v2611
  %v3133 = vpack.c.bf16 %v2635, %v2635
  %v3134 = vpack.c.bf16 %v2637, %v2637
  %v3135 = vpack.c.bf16 %v2661, %v2661
  %v3136 = vpack.c.bf16 %v2663, %v2663
  %v3137 = vpack.c.bf16 %v2687, %v2687
  %v3138 = vpack.c.bf16 %v2689, %v2689
  %v3139 = vpack.c.bf16 %v2713, %v2713
  %v3140 = vpack.c.bf16 %v2715, %v2715
  %v3141 = vpack.c.bf16 %v2739, %v2739
  %v3142 = vpack.c.bf16 %v2741, %v2741
  %v3143 = vpack.c.bf16 %v2765, %v2765
  %v3144 = vpack.c.bf16 %v2767, %v2767
  %v3145 = vpack.c.bf16 %v2791, %v2791
  %v3146 = vpack.c.bf16 %v2793, %v2793
  %v3147 = vpack.c.bf16 %v2817, %v2817
  %v3148 = vpack.c.bf16 %v2819, %v2819
  %v3149 = vpack.c.bf16 %v2843, %v2843
  %v3150 = vpack.c.bf16 %v2845, %v2845
  %v3151 = vpack.c.bf16 %v2869, %v2869
  %v3152 = vpack.c.bf16 %v2871, %v2871
  %v3153 = vpack.c.bf16 %v2895, %v2895
  %v3154 = vpack.c.bf16 %v2897, %v2897
  %v3155 = vpack.c.bf16 %v2921, %v2921
  %v3156 = vpack.c.bf16 %v2923, %v2923
  %v3157 = vpack.c.bf16 %v2947, %v2947
  %v3158 = vpack.c.bf16 %v2949, %v2949
  %v3159 = vpack.c.bf16 %v2973, %v2973
  %v3160 = vpack.c.bf16 %v2975, %v2975
  %v3161 = vpack.c.bf16 %v2999, %v2999
  %v3162 = vpack.c.bf16 %v3001, %v3001
  %v3163 = vpack.c.bf16 %v3025, %v3025
  %v3164 = vpack.c.bf16 %v3027, %v3027
  %v3165 = vpack.c.bf16 %v3051, %v3051
  %v3166 = vpack.c.bf16 %v3053, %v3053
  %v3167 = vpack.c.bf16 %v3077, %v3077
  %v3168 = vpack.c.bf16 %v3079, %v3079
  %v3169 = vpack.c.bf16 %v3103, %v3103
  %v3170 = vpack.c.bf16 %v3105, %v3105
  %vm3171 = vcmask 125952
  %3172 = vst.msk [vmem:[#allocation2] sm:$0xf] %vm3171, %v3107
  %3173 = vst.msk [vmem:[#allocation2 + $0x4] sm:$0xf] %vm3171, %v3108
  %3174 = vst.msk [vmem:[#allocation2 + $0x8] sm:$0xf] %vm3171, %v3109
  %3175 = vst.msk [vmem:[#allocation2 + $0xc] sm:$0xf] %vm3171, %v3110
  %3176 = vst.msk [vmem:[#allocation2 + $0x10] sm:$0xf] %vm3171, %v3111
  %3177 = vst.msk [vmem:[#allocation2 + $0x14] sm:$0xf] %vm3171, %v3112
  %3178 = vst.msk [vmem:[#allocation2 + $0x18] sm:$0xf] %vm3171, %v3113
  %3179 = vst.msk [vmem:[#allocation2 + $0x1c] sm:$0xf] %vm3171, %v3114
  %3188 = vrot.lane.b32.xlu0 %v3115, 16
  %v3189 = vpop.permute.xlu0 %3188
  %3190 = vrot.lane.b32.xlu0 %v3116, 16
  %v3191 = vpop.permute.xlu0 %3190
  %3192 = vrot.lane.b32.xlu0 %v3117, 16
  %v3193 = vpop.permute.xlu0 %3192
  %3194 = vrot.lane.b32.xlu0 %v3118, 16
  %v3195 = vpop.permute.xlu0 %3194
  %3196 = vrot.lane.b32.xlu0 %v3119, 16
  %v3197 = vpop.permute.xlu0 %3196
  %3198 = vrot.lane.b32.xlu0 %v3120, 16
  %v3199 = vpop.permute.xlu0 %3198
  %3200 = vrot.lane.b32.xlu0 %v3121, 16
  %v3201 = vpop.permute.xlu0 %3200
  %3202 = vrot.lane.b32.xlu0 %v3122, 16
  %v3203 = vpop.permute.xlu0 %3202
  %vm3212 = vcmask 257152
  %3213 = vst.msk [vmem:[#allocation2] sm:$0xf] %vm3212, %v3189
  %3214 = vst.msk [vmem:[#allocation2 + $0x4] sm:$0xf] %vm3212, %v3191
  %3215 = vst.msk [vmem:[#allocation2 + $0x8] sm:$0xf] %vm3212, %v3193
  %3216 = vst.msk [vmem:[#allocation2 + $0xc] sm:$0xf] %vm3212, %v3195
  %3217 = vst.msk [vmem:[#allocation2 + $0x10] sm:$0xf] %vm3212, %v3197
  %3218 = vst.msk [vmem:[#allocation2 + $0x14] sm:$0xf] %vm3212, %v3199
  %3219 = vst.msk [vmem:[#allocation2 + $0x18] sm:$0xf] %vm3212, %v3201
  %3220 = vst.msk [vmem:[#allocation2 + $0x1c] sm:$0xf] %vm3212, %v3203
  %3229 = vrot.lane.b32.xlu0 %v3123, 32
  %v3230 = vpop.permute.xlu0 %3229
  %3231 = vrot.lane.b32.xlu0 %v3124, 32
  %v3232 = vpop.permute.xlu0 %3231
  %3233 = vrot.lane.b32.xlu0 %v3125, 32
  %v3234 = vpop.permute.xlu0 %3233
  %3235 = vrot.lane.b32.xlu0 %v3126, 32
  %v3236 = vpop.permute.xlu0 %3235
  %3237 = vrot.lane.b32.xlu0 %v3127, 32
  %v3238 = vpop.permute.xlu0 %3237
  %3239 = vrot.lane.b32.xlu0 %v3128, 32
  %v3240 = vpop.permute.xlu0 %3239
  %3241 = vrot.lane.b32.xlu0 %v3129, 32
  %v3242 = vpop.permute.xlu0 %3241
  %3243 = vrot.lane.b32.xlu0 %v3130, 32
  %v3244 = vpop.permute.xlu0 %3243
  %vm3253 = vcmask 388352
  %3254 = vst.msk [vmem:[#allocation2] sm:$0xf] %vm3253, %v3230
  %3255 = vst.msk [vmem:[#allocation2 + $0x4] sm:$0xf] %vm3253, %v3232
  %3256 = vst.msk [vmem:[#allocation2 + $0x8] sm:$0xf] %vm3253, %v3234
  %3257 = vst.msk [vmem:[#allocation2 + $0xc] sm:$0xf] %vm3253, %v3236
  %3258 = vst.msk [vmem:[#allocation2 + $0x10] sm:$0xf] %vm3253, %v3238
  %3259 = vst.msk [vmem:[#allocation2 + $0x14] sm:$0xf] %vm3253, %v3240
  %3260 = vst.msk [vmem:[#allocation2 + $0x18] sm:$0xf] %vm3253, %v3242
  %3261 = vst.msk [vmem:[#allocation2 + $0x1c] sm:$0xf] %vm3253, %v3244
  %3270 = vrot.lane.b32.xlu0 %v3131, 48
  %v3271 = vpop.permute.xlu0 %3270
  %3272 = vrot.lane.b32.xlu0 %v3132, 48
  %v3273 = vpop.permute.xlu0 %3272
  %3274 = vrot.lane.b32.xlu0 %v3133, 48
  %v3275 = vpop.permute.xlu0 %3274
  %3276 = vrot.lane.b32.xlu0 %v3134, 48
  %v3277 = vpop.permute.xlu0 %3276
  %3278 = vrot.lane.b32.xlu0 %v3135, 48
  %v3279 = vpop.permute.xlu0 %3278
  %3280 = vrot.lane.b32.xlu0 %v3136, 48
  %v3281 = vpop.permute.xlu0 %3280
  %3282 = vrot.lane.b32.xlu0 %v3137, 48
  %v3283 = vpop.permute.xlu0 %3282
  %3284 = vrot.lane.b32.xlu0 %v3138, 48
  %v3285 = vpop.permute.xlu0 %3284
  %vm3294 = vcmask 519552
  %3295 = vst.msk [vmem:[#allocation2] sm:$0xf] %vm3294, %v3271
  %3296 = vst.msk [vmem:[#allocation2 + $0x4] sm:$0xf] %vm3294, %v3273
  %3297 = vst.msk [vmem:[#allocation2 + $0x8] sm:$0xf] %vm3294, %v3275
  %3298 = vst.msk [vmem:[#allocation2 + $0xc] sm:$0xf] %vm3294, %v3277
  %3299 = vst.msk [vmem:[#allocation2 + $0x10] sm:$0xf] %vm3294, %v3279
  %3300 = vst.msk [vmem:[#allocation2 + $0x14] sm:$0xf] %vm3294, %v3281
  %3301 = vst.msk [vmem:[#allocation2 + $0x18] sm:$0xf] %vm3294, %v3283
  %3302 = vst.msk [vmem:[#allocation2 + $0x1c] sm:$0xf] %vm3294, %v3285
  %3311 = vrot.lane.b32.xlu0 %v3139, 64
  %v3312 = vpop.permute.xlu0 %3311
  %3313 = vrot.lane.b32.xlu0 %v3140, 64
  %v3314 = vpop.permute.xlu0 %3313
  %3315 = vrot.lane.b32.xlu0 %v3141, 64
  %v3316 = vpop.permute.xlu0 %3315
  %3317 = vrot.lane.b32.xlu0 %v3142, 64
  %v3318 = vpop.permute.xlu0 %3317
  %3319 = vrot.lane.b32.xlu0 %v3143, 64
  %v3320 = vpop.permute.xlu0 %3319
  %3321 = vrot.lane.b32.xlu0 %v3144, 64
  %v3322 = vpop.permute.xlu0 %3321
  %3323 = vrot.lane.b32.xlu0 %v3145, 64
  %v3324 = vpop.permute.xlu0 %3323
  %3325 = vrot.lane.b32.xlu0 %v3146, 64
  %v3326 = vpop.permute.xlu0 %3325
  %vm3335 = vcmask 650752
  %3336 = vst.msk [vmem:[#allocation2] sm:$0xf] %vm3335, %v3312
  %3337 = vst.msk [vmem:[#allocation2 + $0x4] sm:$0xf] %vm3335, %v3314
  %3338 = vst.msk [vmem:[#allocation2 + $0x8] sm:$0xf] %vm3335, %v3316
  %3339 = vst.msk [vmem:[#allocation2 + $0xc] sm:$0xf] %vm3335, %v3318
  %3340 = vst.msk [vmem:[#allocation2 + $0x10] sm:$0xf] %vm3335, %v3320
  %3341 = vst.msk [vmem:[#allocation2 + $0x14] sm:$0xf] %vm3335, %v3322
  %3342 = vst.msk [vmem:[#allocation2 + $0x18] sm:$0xf] %vm3335, %v3324
  %3343 = vst.msk [vmem:[#allocation2 + $0x1c] sm:$0xf] %vm3335, %v3326
  %3352 = vrot.lane.b32.xlu0 %v3147, 80
  %v3353 = vpop.permute.xlu0 %3352
  %3354 = vrot.lane.b32.xlu0 %v3148, 80
  %v3355 = vpop.permute.xlu0 %3354
  %3356 = vrot.lane.b32.xlu0 %v3149, 80
  %v3357 = vpop.permute.xlu0 %3356
  %3358 = vrot.lane.b32.xlu0 %v3150, 80
  %v3359 = vpop.permute.xlu0 %3358
  %3360 = vrot.lane.b32.xlu0 %v3151, 80
  %v3361 = vpop.permute.xlu0 %3360
  %3362 = vrot.lane.b32.xlu0 %v3152, 80
  %v3363 = vpop.permute.xlu0 %3362
  %3364 = vrot.lane.b32.xlu0 %v3153, 80
  %v3365 = vpop.permute.xlu0 %3364
  %3366 = vrot.lane.b32.xlu0 %v3154, 80
  %v3367 = vpop.permute.xlu0 %3366
  %vm3376 = vcmask 781952
  %3377 = vst.msk [vmem:[#allocation2] sm:$0xf] %vm3376, %v3353
  %3378 = vst.msk [vmem:[#allocation2 + $0x4] sm:$0xf] %vm3376, %v3355
  %3379 = vst.msk [vmem:[#allocation2 + $0x8] sm:$0xf] %vm3376, %v3357
  %3380 = vst.msk [vmem:[#allocation2 + $0xc] sm:$0xf] %vm3376, %v3359
  %3381 = vst.msk [vmem:[#allocation2 + $0x10] sm:$0xf] %vm3376, %v3361
  %3382 = vst.msk [vmem:[#allocation2 + $0x14] sm:$0xf] %vm3376, %v3363
  %3383 = vst.msk [vmem:[#allocation2 + $0x18] sm:$0xf] %vm3376, %v3365
  %3384 = vst.msk [vmem:[#allocation2 + $0x1c] sm:$0xf] %vm3376, %v3367
  %3393 = vrot.lane.b32.xlu0 %v3155, 96
  %v3394 = vpop.permute.xlu0 %3393
  %3395 = vrot.lane.b32.xlu0 %v3156, 96
  %v3396 = vpop.permute.xlu0 %3395
  %3397 = vrot.lane.b32.xlu0 %v3157, 96
  %v3398 = vpop.permute.xlu0 %3397
  %3399 = vrot.lane.b32.xlu0 %v3158, 96
  %v3400 = vpop.permute.xlu0 %3399
  %3401 = vrot.lane.b32.xlu0 %v3159, 96
  %v3402 = vpop.permute.xlu0 %3401
  %3403 = vrot.lane.b32.xlu0 %v3160, 96
  %v3404 = vpop.permute.xlu0 %3403
  %3405 = vrot.lane.b32.xlu0 %v3161, 96
  %v3406 = vpop.permute.xlu0 %3405
  %3407 = vrot.lane.b32.xlu0 %v3162, 96
  %v3408 = vpop.permute.xlu0 %3407
  %vm3417 = vcmask 913152
  %3418 = vst.msk [vmem:[#allocation2] sm:$0xf] %vm3417, %v3394
  %3419 = vst.msk [vmem:[#allocation2 + $0x4] sm:$0xf] %vm3417, %v3396
  %3420 = vst.msk [vmem:[#allocation2 + $0x8] sm:$0xf] %vm3417, %v3398
  %3421 = vst.msk [vmem:[#allocation2 + $0xc] sm:$0xf] %vm3417, %v3400
  %3422 = vst.msk [vmem:[#allocation2 + $0x10] sm:$0xf] %vm3417, %v3402
  %3423 = vst.msk [vmem:[#allocation2 + $0x14] sm:$0xf] %vm3417, %v3404
  %3424 = vst.msk [vmem:[#allocation2 + $0x18] sm:$0xf] %vm3417, %v3406
  %3425 = vst.msk [vmem:[#allocation2 + $0x1c] sm:$0xf] %vm3417, %v3408
  %3434 = vrot.lane.b32.xlu0 %v3163, 112
  %v3435 = vpop.permute.xlu0 %3434
  %3436 = vrot.lane.b32.xlu0 %v3164, 112
  %v3437 = vpop.permute.xlu0 %3436
  %3438 = vrot.lane.b32.xlu0 %v3165, 112
  %v3439 = vpop.permute.xlu0 %3438
  %3440 = vrot.lane.b32.xlu0 %v3166, 112
  %v3441 = vpop.permute.xlu0 %3440
  %3442 = vrot.lane.b32.xlu0 %v3167, 112
  %v3443 = vpop.permute.xlu0 %3442
  %3444 = vrot.lane.b32.xlu0 %v3168, 112
  %v3445 = vpop.permute.xlu0 %3444
  %3446 = vrot.lane.b32.xlu0 %v3169, 112
  %v3447 = vpop.permute.xlu0 %3446
  %3448 = vrot.lane.b32.xlu0 %v3170, 112
  %v3449 = vpop.permute.xlu0 %3448
  %vm3458 = vcmask 1044352
  %3459 = vst.msk [vmem:[#allocation2] sm:$0xf] %vm3458, %v3435
  %3460 = vst.msk [vmem:[#allocation2 + $0x4] sm:$0xf] %vm3458, %v3437
  %3461 = vst.msk [vmem:[#allocation2 + $0x8] sm:$0xf] %vm3458, %v3439
  %3462 = vst.msk [vmem:[#allocation2 + $0xc] sm:$0xf] %vm3458, %v3441
  %3463 = vst.msk [vmem:[#allocation2 + $0x10] sm:$0xf] %vm3458, %v3443
  %3464 = vst.msk [vmem:[#allocation2 + $0x14] sm:$0xf] %vm3458, %v3445
  %3465 = vst.msk [vmem:[#allocation2 + $0x18] sm:$0xf] %vm3458, %v3447
  %3466 = vst.msk [vmem:[#allocation2 + $0x1c] sm:$0xf] %vm3458, %v3449
  %v3467 = vld [vmem:[#allocation2] sm:$0xf]
  %v3468 = vld [vmem:[#allocation2 + $0x4] sm:$0xf]
  %v3469 = vld [vmem:[#allocation2 + $0x8] sm:$0xf]
  %v3470 = vld [vmem:[#allocation2 + $0xc] sm:$0xf]
  %v3471 = vld [vmem:[#allocation2 + $0x10] sm:$0xf]
  %v3472 = vld [vmem:[#allocation2 + $0x14] sm:$0xf]
  %v3473 = vld [vmem:[#allocation2 + $0x18] sm:$0xf]
  %v3474 = vld [vmem:[#allocation2 + $0x1c] sm:$0xf]
  %v3475 = vld [vmem:[%s3] sm:$0xf]
  %v3476 = vld [vmem:[%s3 + $0x4] sm:$0xf]
  %v3477 = vld [vmem:[%s3 + $0x8] sm:$0xf]
  %v3478 = vld [vmem:[%s3 + $0xc] sm:$0xf]
  %v3479 = vld [vmem:[%s3 + $0x10] sm:$0xf]
  %v3480 = vld [vmem:[%s3 + $0x14] sm:$0xf]
  %v3481 = vld [vmem:[%s3 + $0x18] sm:$0xf]
  %v3482 = vld [vmem:[%s3 + $0x1c] sm:$0xf]
  %v3483 = vld [vmem:[%s3 + $0x20] sm:$0xf]
  %v3484 = vld [vmem:[%s3 + $0x24] sm:$0xf]
  %v3485 = vld [vmem:[%s3 + $0x28] sm:$0xf]
  %v3486 = vld [vmem:[%s3 + $0x2c] sm:$0xf]
  %v3487 = vld [vmem:[%s3 + $0x30] sm:$0xf]
  %v3488 = vld [vmem:[%s3 + $0x34] sm:$0xf]
  %v3489 = vld [vmem:[%s3 + $0x38] sm:$0xf]
  %v3490 = vld [vmem:[%s3 + $0x3c] sm:$0xf]
  %v3491 = vld [vmem:[%s4] sm:$0x1]
  %v3493 = vperm.slane %v3491, 0
  %v3503 = vunpack.c.l.b16 %v3467
  %v3504 = vunpack.c.l.b16 %v3468
  %v3505 = vunpack.c.l.b16 %v3469
  %v3506 = vunpack.c.l.b16 %v3470
  %v3507 = vunpack.c.l.b16 %v3471
  %v3508 = vunpack.c.l.b16 %v3472
  %v3509 = vunpack.c.l.b16 %v3473
  %v3510 = vunpack.c.l.b16 %v3474
  %v3511 = vpack.c.b16 %v3504, %v3503
  %v3512 = vpack.c.b16 %v3506, %v3505
  %v3513 = vpack.c.b16 %v3508, %v3507
  %v3514 = vpack.c.b16 %v3510, %v3509
  %v3535 = vunpack.c.l.b16 %v3475
  %v3536 = vunpack.c.l.b16 %v3476
  %v3537 = vunpack.c.l.b16 %v3477
  %v3538 = vunpack.c.l.b16 %v3478
  %v3539 = vunpack.c.l.b16 %v3479
  %v3540 = vunpack.c.l.b16 %v3480
  %v3541 = vunpack.c.l.b16 %v3481
  %v3542 = vunpack.c.l.b16 %v3482
  %v3543 = vunpack.c.l.b16 %v3483
  %v3544 = vunpack.c.l.b16 %v3484
  %v3545 = vunpack.c.l.b16 %v3485
  %v3546 = vunpack.c.l.b16 %v3486
  %v3547 = vunpack.c.l.b16 %v3487
  %v3548 = vunpack.c.l.b16 %v3488
  %v3549 = vunpack.c.l.b16 %v3489
  %v3550 = vunpack.c.l.b16 %v3490
  %v3551 = vpack.c.b16 %v3536, %v3535
  %v3552 = vpack.c.b16 %v3538, %v3537
  %v3553 = vpack.c.b16 %v3540, %v3539
  %v3554 = vpack.c.b16 %v3542, %v3541
  %v3555 = vpack.c.b16 %v3544, %v3543
  %v3556 = vpack.c.b16 %v3546, %v3545
  %v3557 = vpack.c.b16 %v3548, %v3547
  %v3558 = vpack.c.b16 %v3550, %v3549
  %3567 = vmatpush.bf16.msra.mxu0 %v3558
  %3568 = vmatpush.bf16.msra.mxu0 %v3557
  %3569 = vmatpush.bf16.msra.mxu0 %v3556
  %3570 = vmatpush.bf16.msra.mxu0 %v3555
  %3571 = vmatpush.bf16.msra.mxu0 %v3554
  %3572 = vmatpush.bf16.msra.mxu0 %v3553
  %3573 = vmatpush.bf16.msra.mxu0 %v3552
  %3574 = vmatpush.bf16.msra.mxu0 %v3551
  %3575 = vmatmul.bf16.gmra.mxu0 %v3511
  %v3576 = vpop.f32.mrf.mxu0
  %v3577 = vadd.f32 %v3493, %v3576
  %v3578 = vpop.f32.mrf.mxu0
  %v3579 = vadd.f32 %v3493, %v3578
  %3580 = vmatmul.bf16.gmra.mxu0 %v3512
  %v3581 = vpop.f32.mrf.mxu0
  %v3582 = vadd.f32 %v3493, %v3581
  %v3583 = vpop.f32.mrf.mxu0
  %v3584 = vadd.f32 %v3493, %v3583
  %3585 = vmatmul.bf16.gmra.mxu0 %v3513
  %v3586 = vpop.f32.mrf.mxu0
  %v3587 = vadd.f32 %v3493, %v3586
  %v3588 = vpop.f32.mrf.mxu0
  %v3589 = vadd.f32 %v3493, %v3588
  %3590 = vmatmul.bf16.gmra.mxu0 %v3514
  %v3591 = vpop.f32.mrf.mxu0
  %v3592 = vadd.f32 %v3493, %v3591
  %v3593 = vpop.f32.mrf.mxu0
  %v3594 = vadd.f32 %v3493, %v3593
  %3595 = vdwg.mxu0
  %3596 = vst [vmem:[%s5] sm:$0xff] %v3577
  %3597 = vst [vmem:[%s5 + $0x8] sm:$0xff] %v3579
  %3598 = vst [vmem:[%s5 + $0x10] sm:$0xff] %v3582
  %3599 = vst [vmem:[%s5 + $0x18] sm:$0xff] %v3584
  %3600 = vst [vmem:[%s5 + $0x20] sm:$0xff] %v3587
  %3601 = vst [vmem:[%s5 + $0x28] sm:$0xff] %v3589
  %3602 = vst [vmem:[%s5 + $0x30] sm:$0xff] %v3592
  %3603 = vst [vmem:[%s5 + $0x38] sm:$0xff] %v3594
  %v3604 = vadd.f32 %v3577, %v23
  %v3605 = vadd.f32 %v3579, %v24
  %v3606 = vadd.f32 %v3582, %v25
  %v3607 = vadd.f32 %v3584, %v26
  %v3608 = vadd.f32 %v3587, %v27
  %v3609 = vadd.f32 %v3589, %v28
  %v3610 = vadd.f32 %v3592, %v29
  %v3611 = vadd.f32 %v3594, %v30
  %v3612 = vadd.f32 %v3604, %v3605
  %v3613 = vadd.f32 %v3612, %v3606
  %v3614 = vadd.f32 %v3613, %v3607
  %v3615 = vadd.f32 %v3614, %v3608
  %v3616 = vadd.f32 %v3615, %v3609
  %v3617 = vadd.f32 %v3616, %v3610
  %v3618 = vadd.f32 %v3617, %v3611
  %v3619 = vrot.slane %v3618, 4
  %v3620 = vadd.f32 %v3618, %v3619
  %v3621 = vrot.slane %v3620, 2
  %v3622 = vadd.f32 %v3620, %v3621
  %v3623 = vrot.slane %v3622, 1
  %v3624 = vadd.f32 %v3622, %v3623
  %3625 = vst [vmem:[%s6] sm:$0x1] %v3624
  %v3626 = vmul.f32 %v3604, %v3604
  %v3627 = vmul.f32 %v3605, %v3605
  %v3628 = vmul.f32 %v3606, %v3606
  %v3629 = vmul.f32 %v3607, %v3607
  %v3630 = vmul.f32 %v3608, %v3608
  %v3631 = vmul.f32 %v3609, %v3609
  %v3632 = vmul.f32 %v3610, %v3610
  %v3633 = vmul.f32 %v3611, %v3611
  %v3634 = vadd.f32 %v3626, %v3627
  %v3635 = vadd.f32 %v3634, %v3628
  %v3636 = vadd.f32 %v3635, %v3629
  %v3637 = vadd.f32 %v3636, %v3630
  %v3638 = vadd.f32 %v3637, %v3631
  %v3639 = vadd.f32 %v3638, %v3632
  %v3640 = vadd.f32 %v3639, %v3633
  %v3641 = vrot.slane %v3640, 4
  %v3642 = vadd.f32 %v3640, %v3641
  %v3643 = vrot.slane %v3642, 2
  %v3644 = vadd.f32 %v3642, %v3643
  %v3645 = vrot.slane %v3644, 1
  %v3646 = vadd.f32 %v3644, %v3645
  %3647 = vst [vmem:[%s6 + $0x1] sm:$0x1] %v3646
  // Predicated region
  $region22: #{encoder_block.2} parent=0 // pred_check
    _
  $region23: #{encoder_block.2} parent=0 // pred_check_branch
    %3649 = sbr.rel (0) target = $region25
  $region24: #{encoder_block.2} parent=0 // pred_region
    _
  $region25: #{encoder_block.2} parent=0 // pred_fallthru
    _
  // Predicated region
  $region26: #{encoder_block.2} parent=0 // pred_check
    _
  $region27: #{encoder_block.2} parent=0 // pred_check_branch
    %3651 = sbr.rel (0) target = $region29
  $region28: #{encoder_block.2} parent=0 // pred_region
    _
  $region29: #{encoder_block.2} parent=0 // pred_fallthru
    _
  // Predicated region
  $region30: #{encoder_block.2} parent=0 // pred_check
    _
  $region31: #{encoder_block.2} parent=0 // pred_check_branch
    %3653 = sbr.rel (0) target = $region33
  $region32: #{encoder_block.2} parent=0 // pred_region
    _
  $region33: #{encoder_block.2} parent=0 // pred_fallthru
    _
  // Predicated region
  $region34: #{encoder_block.2} parent=0 // pred_check
    _
  $region35: #{encoder_block.2} parent=0 // pred_check_branch
    %3655 = sbr.rel (0) target = $region37
  $region36: #{encoder_block.2} parent=0 // pred_region
    _
  $region37: #{encoder_block.2} parent=0 // pred_fallthru
    _

</llo_original>
